<compile_context>
chip_gen: v6e
topology: v6e:2x2x1
jax: 0.10.0
libtpu: 0.0.40
codegen_flags: <defaults>
</compile_context>

<pallas_src>
import functools

import jax
import jax.numpy as jnp
import numpy as np
from jax import lax
from jax.experimental import pallas as pl
from jax.experimental.pallas import tpu as pltpu


def _round_up(x, m):
    return ((x + m - 1) // m) * m


def _vmem_limit_bytes():
    cap = 64 * 1024 * 1024                       # conservative fallback (v7x physical)
    try:
        info = pltpu.get_tpu_info()
        cap = int(getattr(info, "vmem_capacity_bytes", cap))
    except Exception:
        pass
    # leave headroom: ~48 MiB on v7x (64 MiB physical), ~96 MiB on v5e/v6e (128 MiB)
    return int(max(32 * 1024 * 1024, min(cap * 3 // 4, 100 * 1024 * 1024)))


def _divisor_tile(total, cap):
    """Largest multiple of 8 that divides `total` (itself a multiple of 8), <= cap."""
    cap = max(8, min(cap, total))
    best = 8
    for m in range(8, cap + 1, 8):
        if total % m == 0:
            best = m
    return best


# ---------------------------------------------------------------------------
# Kernel 1: bidirectional vanilla RNN recurrence (tanh cell), zero init state.
# Grid = (batch blocks [parallel], time chunks [arbitrary / sequential]).
# ---------------------------------------------------------------------------
def birnn_kernel(xf_ref, xb_ref, u_ref, of_ref, ob_ref, h_ref, *, fuse, unroll):
    """xf_ref : (tc, tb, Hp) fwd input projection (+bias) for time chunk c      (io dtype)
       xb_ref : (tc, tb, Hp) bwd input projection (+bias) for time chunk nc-1-c (io dtype)
       u_ref  : (2Hp, 2Hp)   block-diag recurrent weight [[Whh_f^T,0],[0,Whh_b^T]] (f32)
       of_ref : (tc, tb, Hp) fwd hidden states for chunk c                      (io dtype)
       ob_ref : (tc, tb, Hp) bwd hidden states for chunk nc-1-c                 (io dtype)
       h_ref  : (tb, 2Hp)    f32 VMEM scratch carrying [h_f | h_b] across chunks"""
    tc, tb, Hp = xf_ref.shape

    @pl.when(pl.program_id(1) == 0)
    def _():
        h_ref[...] = jnp.zeros_like(h_ref)

    def step(i, h_cat):
        ri = tc - 1 - i
        # fwd consumes local row i (global time increasing); bwd consumes local row
        # tc-1-i (global time decreasing, chunk already mirrored by the index_map).
        x_cat = jnp.concatenate([xf_ref[i], xb_ref[ri]], axis=-1).astype(jnp.float32)
        if fuse:
            # One full-width MXU matmul covering both directions (block-diagonal
            # weight fills all 256 lanes when Hp == 128).
            rec = jnp.dot(h_cat, u_ref[...], preferred_element_type=jnp.float32)
        else:
            rec_f = jnp.dot(h_cat[:, 0:Hp], u_ref[0:Hp, 0:Hp],
                            preferred_element_type=jnp.float32)
            rec_b = jnp.dot(h_cat[:, Hp:2 * Hp], u_ref[Hp:2 * Hp, Hp:2 * Hp],
                            preferred_element_type=jnp.float32)
            rec = jnp.concatenate([rec_f, rec_b], axis=-1)
        h_cat = jnp.tanh(x_cat + rec)
        of_ref[i] = h_cat[:, 0:Hp].astype(of_ref.dtype)
        ob_ref[ri] = h_cat[:, Hp:2 * Hp].astype(ob_ref.dtype)
        return h_cat

    # Partial unroll keeps LLO scheduling visibility without full-T code blowup.
    h_ref[...] = lax.fori_loop(0, tc, step, h_ref[...], unroll=unroll)


# ---------------------------------------------------------------------------
# Kernel 2: dot-product attention + output linear + log_softmax.
# Consumes the time-major RNN outputs directly (no HBM transpose); static
# per-batch loop with plain 2D MXU matmuls; writes a lane-dense (B, tT, Cp) block.
# ---------------------------------------------------------------------------
def attention_out_kernel(hf_ref, hb_ref, q_ref, w_ref, b_ref, o_ref):
    """hf_ref : (tT, B, Hp) fwd RNN states, time-major (io dtype)
       hb_ref : (tT, B, Hp) bwd RNN states, time-major (io dtype)
       q_ref  : (B, Tq, F)  question hidden in the padded feature layout (io dtype)
       w_ref  : (F, Cp)     output weight, transposed / zero-padded (io dtype)
       b_ref  : (1, Cp)     output bias, padded classes = -1e30 (f32)
       o_ref  : (B, tT, Cp) log_softmax(logits), f32"""
    tT, B, Hp = hf_ref.shape
    w = w_ref[...]
    bias = b_ref[...]

    for b in range(B):                          # static loop; B known at trace time
        q_b = q_ref[b]                          # (Tq, F)
        qf = q_b[:, 0:Hp]
        qb = q_b[:, Hp:2 * Hp]
        h_f = hf_ref[:, b, :]                   # (tT, Hp) static slice of the block
        h_b = hb_ref[:, b, :]
        dn = (((1,), (1,)), ((), ()))           # contract last dims (rhs transposed)
        s = lax.dot_general(h_f, qf, dn, preferred_element_type=jnp.float32)
        s = s + lax.dot_general(h_b, qb, dn, preferred_element_type=jnp.float32)
        # softmax over question positions
        s = s - jnp.max(s, axis=-1, keepdims=True)
        e = jnp.exp(s)
        denom = jnp.sum(e, axis=-1, keepdims=True)
        inv = pl.reciprocal(denom, approx=True)
        inv = inv * (2.0 - denom * inv)         # one Newton step: ~f32-exact, off MXU path
        p = (e * inv).astype(q_b.dtype)         # (tT, Tq)
        attn = jnp.dot(p, q_b, preferred_element_type=jnp.float32)        # (tT, F)
        logits = jnp.dot(attn.astype(w.dtype), w,
                         preferred_element_type=jnp.float32) + bias       # (tT, Cp)
        # log_softmax; padded classes carry a -1e30 bias -> exp underflows to 0 (exact).
        z = logits - jnp.max(logits, axis=-1, keepdims=True)
        lse = jnp.log(jnp.sum(jnp.exp(z), axis=-1, keepdims=True))
        o_ref[b] = z - lse


# ---------------------------------------------------------------------------
# Wrapper
# ---------------------------------------------------------------------------
def document_model_forward(x, question_hidden, params, *,
                           io_dtype=jnp.bfloat16,
                           rnn_batch_block=None,   # set to B//2 (mult. of 8) on v7x only
                           rnn_t_block=None,
                           attn_t_block=None):
    f32 = jnp.float32
    B, T, D = x.shape
    H = params['whh_f'].shape[0]
    Tq = question_hidden.shape[1]
    C = params['w_out'].shape[0]

    Hp = _round_up(H, 128)            # lane-dense hidden
    Cp = _round_up(C, 128)            # lane-dense classes
    F = 2 * Hp
    itemsize = jnp.dtype(io_dtype).itemsize
    vmem_limit = _vmem_limit_bytes()

    # ---- batch block (only worth splitting on v7x's 2 TensorCores) ----------
    tb = B if rnn_batch_block is None else rnn_batch_block
    if B % tb != 0 or not (tb == B or tb % 8 == 0):
        raise ValueError("rnn_batch_block must divide B and be a multiple of 8 "
                         "(or equal B)")
    nb = B // tb

    # ---- time chunk: keeps RNN VMEM O(chunk), not O(T) ----------------------
    if rnn_t_block is None:
        budget = vmem_limit // 2
        tc_cap = max(8, (budget // (8 * tb * Hp * itemsize)) // 8 * 8)
        tc = min(_round_up(T, 8), 128, tc_cap)
    else:
        if rnn_t_block % 8 != 0:
            raise ValueError("rnn_t_block must be a multiple of 8")
        tc = rnn_t_block
    Tp = _round_up(T, tc)             # zero padding of the *projected* inputs is exact:
    nc = Tp // tc                     # tanh(0 + 0 @ U) == 0 keeps the padded carry at 0.

    # ---- parameters: pre-transposed, zero-padded, block-diagonal ------------
    wih_f_t = jnp.zeros((D, Hp), f32).at[:, :H].set(params['wih_f'].T.astype(f32))
    wih_b_t = jnp.zeros((D, Hp), f32).at[:, :H].set(params['wih_b'].T.astype(f32))
    b_f_p = jnp.zeros((Hp,), f32).at[:H].set(params['b_f'].reshape(-1).astype(f32))
    b_b_p = jnp.zeros((Hp,), f32).at[:H].set(params['b_b'].reshape(-1).astype(f32))
    u_bd = jnp.zeros((F, F), f32)
    u_bd = u_bd.at[:H, :H].set(params['whh_f'].T.astype(f32))
    u_bd = u_bd.at[Hp:Hp + H, Hp:Hp + H].set(params['whh_b'].T.astype(f32))

    # ---- hoisted input projection: one big XLA GEMM per direction -----------
    xproj_f = jnp.einsum('btd,dh->tbh', x.astype(f32), wih_f_t) + b_f_p   # (T, B, Hp)
    xproj_b = jnp.einsum('btd,dh->tbh', x.astype(f32), wih_b_t) + b_b_p
    if Tp != T:
        pad = ((0, Tp - T), (0, 0), (0, 0))
        xproj_f = jnp.pad(xproj_f, pad)
        xproj_b = jnp.pad(xproj_b, pad)
    xproj_f = xproj_f.astype(io_dtype)
    xproj_b = xproj_b.astype(io_dtype)

    # ---- bidirectional recurrence (Pallas) -----------------------------------
    fuse = (Hp == 128)                # block-diag fwd/bwd fusion fills the 256-wide MXU
    unroll = min(tc, 8)

    rnn_cost = pl.CostEstimate(
        flops=int((8 if fuse else 4) * Tp * B * Hp * Hp),
        transcendentals=int(Tp * B * F),
        bytes_accessed=int(4 * Tp * B * Hp * itemsize + F * F * 4),
    )

    out_f, out_b = pl.pallas_call(
        functools.partial(birnn_kernel, fuse=fuse, unroll=unroll),
        out_shape=(jax.ShapeDtypeStruct((Tp, B, Hp), io_dtype),
                   jax.ShapeDtypeStruct((Tp, B, Hp), io_dtype)),
        grid=(nb, nc),
        in_specs=[
            pl.BlockSpec((tc, tb, Hp), lambda b, c: (c, b, 0)),
            pl.BlockSpec((tc, tb, Hp), lambda b, c: (nc - 1 - c, b, 0)),   # mirrored
            pl.BlockSpec((F, F), lambda b, c: (0, 0)),
        ],
        out_specs=(
            pl.BlockSpec((tc, tb, Hp), lambda b, c: (c, b, 0)),
            pl.BlockSpec((tc, tb, Hp), lambda b, c: (nc - 1 - c, b, 0)),   # mirrored
        ),
        scratch_shapes=[pltpu.VMEM((tb, F), jnp.float32)],
        compiler_params=pltpu.CompilerParams(
            dimension_semantics=("parallel", "arbitrary"),
            vmem_limit_bytes=vmem_limit),
        cost_estimate=rnn_cost,
    )(xproj_f, xproj_b, u_bd)

    # ---- question hidden / output weights in the padded feature layout ------
    qh = question_hidden.astype(f32)
    q_p = jnp.zeros((B, Tq, F), f32)
    q_p = q_p.at[:, :, :H].set(qh[:, :, :H])
    q_p = q_p.at[:, :, Hp:Hp + H].set(qh[:, :, H:])
    q_p = q_p.astype(io_dtype)

    w_t = params['w_out'].T.astype(f32)                       # (2H, C)
    w_p = jnp.zeros((F, Cp), f32)
    w_p = w_p.at[:H, :C].set(w_t[:H])
    w_p = w_p.at[Hp:Hp + H, :C].set(w_t[H:])
    w_p = w_p.astype(io_dtype)
    b_p = jnp.full((1, Cp), -1e30, f32).at[0, :C].set(params['b_out'].astype(f32))

    # ---- attention T tile: as large as the per-chip VMEM budget allows ------
    if attn_t_block is None:
        per_row = (2 * (2 * B * Hp * itemsize)            # hf + hb blocks, double-buffered
                   + 2 * (B * Cp * 4)                      # output block, double-buffered
                   + B * (2 * Tq + F + 2 * Cp) * 4)        # in-kernel temporaries
        fixed = 2 * (B * Tq * F * itemsize) + 2 * (F * Cp * itemsize) + 2 * Cp * 4
        cap = max(8, (vmem_limit // 2 - fixed) // max(per_row, 1))
        tT = _divisor_tile(Tp, min(int(cap), 2048))
    else:
        if Tp % attn_t_block != 0 or attn_t_block % 8 != 0:
            raise ValueError("attn_t_block must be a multiple of 8 dividing the "
                             "padded sequence length %d" % Tp)
        tT = attn_t_block
    nT = Tp // tT

    attn_cost = pl.CostEstimate(
        flops=int(2 * B * Tp * (2 * Tq * F + F * Cp)),
        transcendentals=int(B * Tp * (Tq + Cp + 2)),
        bytes_accessed=int(2 * Tp * B * Hp * itemsize + B * Tq * F * itemsize
                           + F * Cp * itemsize + Cp * 4 + B * Tp * Cp * 4),
    )

    out_p = pl.pallas_call(
        attention_out_kernel,
        out_shape=jax.ShapeDtypeStruct((B, Tp, Cp), jnp.float32),
        grid=(nT,),
        in_specs=[
            pl.BlockSpec((tT, B, Hp), lambda t: (t, 0, 0)),
            pl.BlockSpec((tT, B, Hp), lambda t: (t, 0, 0)),
            pl.BlockSpec((B, Tq, F), lambda t: (0, 0, 0)),
            pl.BlockSpec((F, Cp), lambda t: (0, 0)),
            pl.BlockSpec((1, Cp), lambda t: (0, 0)),
        ],
        out_specs=pl.BlockSpec((B, tT, Cp), lambda t: (0, t, 0)),
        compiler_params=pltpu.CompilerParams(
            dimension_semantics=("parallel",),
            vmem_limit_bytes=vmem_limit),
        cost_estimate=attn_cost,
    )(out_f, out_b, q_p, w_p, b_p)

    return out_p[:, :T, :C]


# ---------------------------------------------------------------------------
# Pure-JAX reference (mirrors the PyTorch forward) for correctness checking
# ---------------------------------------------------------------------------
def reference_forward(x, q, params):
    B, T, D = x.shape
    H = params['whh_f'].shape[0]

    def make_cell(wih, whh, b):
        def f(h, x_t):
            h_new = jnp.tanh(x_t @ wih.T + h @ whh.T + b[0])
            return h_new, h_new
        return f

    h0 = jnp.zeros((B, H), jnp.float32)
    _, hs_f = lax.scan(make_cell(params['wih_f'], params['whh_f'], params['b_f']),
                       h0, jnp.transpose(x, (1, 0, 2)))
    _, hs_b = lax.scan(make_cell(params['wih_b'], params['whh_b'], params['b_b']),
                       h0, jnp.transpose(x[:, ::-1, :], (1, 0, 2)))
    hs_f = jnp.transpose(hs_f, (1, 0, 2))
    hs_b = jnp.transpose(hs_b, (1, 0, 2))[:, ::-1, :]
    rnn_out = jnp.concatenate([hs_f, hs_b], axis=-1)

    s = jnp.einsum('btd,bqd->btq', rnn_out, q)
    w = jax.nn.softmax(s, axis=-1)
    attn = jnp.einsum('btq,bqd->btd', w, q)
    logits = attn @ params['w_out'].T + params['b_out']
    return jax.nn.log_softmax(logits, axis=-1)


if __name__ == "__main__":
    # Small shapes consistent with the default DocumentModel
    # (vanilla RNN, 1 layer, bidirectional=True, dot-product attention).
    B, T, Tq = 2, 8, 6
    n_input, n_hidden, n_class = 16, 32, 4
    H2 = 2 * n_hidden

    key = jax.random.PRNGKey(0)
    ks = jax.random.split(key, 10)
    scale = 1.0 / np.sqrt(n_hidden)

    def u(k, shape):
        return jax.random.uniform(k, shape, jnp.float32, -scale, scale)

    params = {
        'wih_f': u(ks[0], (n_hidden, n_input)),
        'whh_f': u(ks[1], (n_hidden, n_hidden)),
        'b_f':   u(ks[2], (1, n_hidden)),        # b_ih + b_hh combined
        'wih_b': u(ks[3], (n_hidden, n_input)),
        'whh_b': u(ks[4], (n_hidden, n_hidden)),
        'b_b':   u(ks[5], (1, n_hidden)),
        'w_out': u(ks[6], (n_class, H2)),        # PyTorch Linear stores (out, in)
        'b_out': u(ks[7], (n_class,)),
    }

    x = jax.random.normal(ks[8], (B, T, n_input), jnp.float32)
    question_hidden = jax.random.normal(ks[9], (B, Tq, H2), jnp.float32)

    fwd = jax.jit(document_model_forward,
                  static_argnames=("io_dtype", "rnn_batch_block",
                                   "rnn_t_block", "attn_t_block"))

    ref = reference_forward(x, question_hidden, params)

    # Exact path: f32 storage end to end -> tight check of kernel logic/indexing.
    out_f32 = jax.block_until_ready(fwd(x, question_hidden, params,
                                        io_dtype=jnp.float32))
    assert out_f32.shape == (B, T, n_class)
    assert np.allclose(np.asarray(out_f32), np.asarray(ref), rtol=2e-4, atol=2e-4), \
        "f32 Pallas output does not match JAX reference"

    # Default path: bf16 storage / bf16 MXU operands (looser tolerance by design).
    out_bf16 = jax.block_until_ready(fwd(x, question_hidden, params))
    assert out_bf16.shape == (B, T, n_class)
    assert np.allclose(np.asarray(out_bf16), np.asarray(ref), rtol=2e-2, atol=6e-2), \
        "bf16 Pallas output does not match JAX reference"

    print("KERNEL_OK")
</pallas_src>

<mosaic_0001>
module attributes {stable_mosaic.version = 11 : i64} {
  func.func @birnn_kernel(%arg0: i32, %arg1: i32, %arg2: memref<8x2x128xf32, #tpu.memory_space<vmem>>, %arg3: memref<8x2x128xf32, #tpu.memory_space<vmem>>, %arg4: memref<256x256xf32, #tpu.memory_space<vmem>>, %arg5: memref<8x2x128xf32, #tpu.memory_space<vmem>>, %arg6: memref<8x2x128xf32, #tpu.memory_space<vmem>>, %arg7: memref<2x256xf32, #tpu.memory_space<vmem>>) attributes {dimension_semantics = [#tpu.dimension_semantics<parallel>, #tpu.dimension_semantics<arbitrary>], iteration_bounds = array<i64: 1, 1>, scalar_prefetch = 0 : i64, scratch_operands = 1 : i64, tpu.core_type = #tpu.core_type<tc>, window_params = [{transform_indices = @transform_0, window_bounds = array<i64: 8, 2, 128>}, {transform_indices = @transform_1, window_bounds = array<i64: 8, 2, 128>}, {pipeline_mode = #tpu.pipeline_mode<synchronous>, transform_indices = @transform_2, window_bounds = array<i64: 256, 256>}, {transform_indices = @transform_3, window_bounds = array<i64: 8, 2, 128>}, {transform_indices = @transform_4, window_bounds = array<i64: 8, 2, 128>}]} {
    %c0_i32 = arith.constant 0 : i32
    %0 = arith.cmpi eq, %arg1, %c0_i32 : i32
    %1 = arith.extui %0 : i1 to i32
    %c0_i32_0 = arith.constant 0 : i32
    %2 = arith.cmpi ne, %1, %c0_i32_0 : i32
    scf.if %2 {
      %cst_100 = arith.constant 0.000000e+00 : f32
      %181 = vector.broadcast %cst_100 : f32 to vector<2x256xf32>
      %c0_101 = arith.constant 0 : index
      %c0_102 = arith.constant 0 : index
      %182 = vector.load %arg7[%c0_101, %c0_102] : memref<2x256xf32, #tpu.memory_space<vmem>>, vector<2x256xf32>
      tpu.vector_store %arg7[%c0_101, %c0_102], %181 {strides = array<i32>} : memref<2x256xf32, #tpu.memory_space<vmem>>, vector<2x256xf32>,
    } else {
    }
    %c0 = arith.constant 0 : index
    %c0_1 = arith.constant 0 : index
    %3 = vector.load %arg7[%c0, %c0_1] : memref<2x256xf32, #tpu.memory_space<vmem>>, vector<2x256xf32>
    %c0_i32_2 = arith.constant 0 : i32
    %c7_i32 = arith.constant 7 : i32
    %4 = arith.subi %c7_i32, %c0_i32_2 : i32
    %5 = arith.index_cast %c0_i32_2 : i32 to index
    %c0_3 = arith.constant 0 : index
    %c0_4 = arith.constant 0 : index
    %6 = vector.load %arg2[%5, %c0_3, %c0_4] : memref<8x2x128xf32, #tpu.memory_space<vmem>>, vector<1x2x128xf32>
    %7 = vector.shape_cast %6 : vector<1x2x128xf32> to vector<2x128xf32>
    %8 = arith.index_cast %4 : i32 to index
    %c0_5 = arith.constant 0 : index
    %c0_6 = arith.constant 0 : index
    %9 = vector.load %arg3[%8, %c0_5, %c0_6] : memref<8x2x128xf32, #tpu.memory_space<vmem>>, vector<1x2x128xf32>
    %10 = vector.shape_cast %9 : vector<1x2x128xf32> to vector<2x128xf32>
    %11 = tpu.concatenate %7, %10 in 1 : vector<2x128xf32>, vector<2x128xf32> -> vector<2x256xf32>
    %c0_7 = arith.constant 0 : index
    %c0_8 = arith.constant 0 : index
    %12 = vector.load %arg4[%c0_7, %c0_8] : memref<256x256xf32, #tpu.memory_space<vmem>>, vector<256x256xf32>
    %cst = arith.constant dense<0.000000e+00> : vector<2x256xf32>
    %13 = tpu.matmul %3, %12, %cst {dimension_numbers = #tpu.dot_dimension_numbers<[1], [0], [0], [1], [0, 0, 1, 1], [], []>} : vector<2x256xf32>, vector<256x256xf32>, vector<2x256xf32> -> vector<2x256xf32>
    %14 = arith.addf %11, %13 : vector<2x256xf32>
    %15 = math.tanh %14 : vector<2x256xf32>
    %16 = vector.extract_strided_slice %15 {offsets = [0, 0], sizes = [2, 128], strides = [1, 1]} : vector<2x256xf32> to vector<2x128xf32>
    %17 = arith.index_cast %c0_i32_2 : i32 to index
    %c0_9 = arith.constant 0 : index
    %c0_10 = arith.constant 0 : index
    %18 = vector.load %arg5[%17, %c0_9, %c0_10] : memref<8x2x128xf32, #tpu.memory_space<vmem>>, vector<1x2x128xf32>
    %19 = vector.shape_cast %18 : vector<1x2x128xf32> to vector<2x128xf32>
    %20 = vector.shape_cast %16 : vector<2x128xf32> to vector<1x2x128xf32>
    tpu.vector_store %arg5[%17, %c0_9, %c0_10], %20 {strides = array<i32>} : memref<8x2x128xf32, #tpu.memory_space<vmem>>, vector<1x2x128xf32>,
    %21 = vector.extract_strided_slice %15 {offsets = [0, 128], sizes = [2, 128], strides = [1, 1]} : vector<2x256xf32> to vector<2x128xf32>
    %22 = arith.index_cast %4 : i32 to index
    %c0_11 = arith.constant 0 : index
    %c0_12 = arith.constant 0 : index
    %23 = vector.load %arg6[%22, %c0_11, %c0_12] : memref<8x2x128xf32, #tpu.memory_space<vmem>>, vector<1x2x128xf32>
    %24 = vector.shape_cast %23 : vector<1x2x128xf32> to vector<2x128xf32>
    %25 = vector.shape_cast %21 : vector<2x128xf32> to vector<1x2x128xf32>
    tpu.vector_store %arg6[%22, %c0_11, %c0_12], %25 {strides = array<i32>} : memref<8x2x128xf32, #tpu.memory_space<vmem>>, vector<1x2x128xf32>,
    %c1_i32 = arith.constant 1 : i32
    %c7_i32_13 = arith.constant 7 : i32
    %26 = arith.subi %c7_i32_13, %c1_i32 : i32
    %27 = arith.index_cast %c1_i32 : i32 to index
    %c0_14 = arith.constant 0 : index
    %c0_15 = arith.constant 0 : index
    %28 = vector.load %arg2[%27, %c0_14, %c0_15] : memref<8x2x128xf32, #tpu.memory_space<vmem>>, vector<1x2x128xf32>
    %29 = vector.shape_cast %28 : vector<1x2x128xf32> to vector<2x128xf32>
    %30 = arith.index_cast %26 : i32 to index
    %c0_16 = arith.constant 0 : index
    %c0_17 = arith.constant 0 : index
    %31 = vector.load %arg3[%30, %c0_16, %c0_17] : memref<8x2x128xf32, #tpu.memory_space<vmem>>, vector<1x2x128xf32>
    %32 = vector.shape_cast %31 : vector<1x2x128xf32> to vector<2x128xf32>
    %33 = tpu.concatenate %29, %32 in 1 : vector<2x128xf32>, vector<2x128xf32> -> vector<2x256xf32>
    %c0_18 = arith.constant 0 : index
    %c0_19 = arith.constant 0 : index
    %34 = vector.load %arg4[%c0_18, %c0_19] : memref<256x256xf32, #tpu.memory_space<vmem>>, vector<256x256xf32>
    %cst_20 = arith.constant dense<0.000000e+00> : vector<2x256xf32>
    %35 = tpu.matmul %15, %34, %cst_20 {dimension_numbers = #tpu.dot_dimension_numbers<[1], [0], [0], [1], [0, 0, 1, 1], [], []>} : vector<2x256xf32>, vector<256x256xf32>, vector<2x256xf32> -> vector<2x256xf32>
    %36 = arith.addf %33, %35 : vector<2x256xf32>
    %37 = math.tanh %36 : vector<2x256xf32>
    %38 = vector.extract_strided_slice %37 {offsets = [0, 0], sizes = [2, 128], strides = [1, 1]} : vector<2x256xf32> to vector<2x128xf32>
    %39 = arith.index_cast %c1_i32 : i32 to index
    %c0_21 = arith.constant 0 : index
    %c0_22 = arith.constant 0 : index
    %40 = vector.load %arg5[%39, %c0_21, %c0_22] : memref<8x2x128xf32, #tpu.memory_space<vmem>>, vector<1x2x128xf32>
    %41 = vector.shape_cast %40 : vector<1x2x128xf32> to vector<2x128xf32>
    %42 = vector.shape_cast %38 : vector<2x128xf32> to vector<1x2x128xf32>
    tpu.vector_store %arg5[%39, %c0_21, %c0_22], %42 {strides = array<i32>} : memref<8x2x128xf32, #tpu.memory_space<vmem>>, vector<1x2x128xf32>,
    %43 = vector.extract_strided_slice %37 {offsets = [0, 128], sizes = [2, 128], strides = [1, 1]} : vector<2x256xf32> to vector<2x128xf32>
    %44 = arith.index_cast %26 : i32 to index
    %c0_23 = arith.constant 0 : index
    %c0_24 = arith.constant 0 : index
    %45 = vector.load %arg6[%44, %c0_23, %c0_24] : memref<8x2x128xf32, #tpu.memory_space<vmem>>, vector<1x2x128xf32>
    %46 = vector.shape_cast %45 : vector<1x2x128xf32> to vector<2x128xf32>
    %47 = vector.shape_cast %43 : vector<2x128xf32> to vector<1x2x128xf32>
    tpu.vector_store %arg6[%44, %c0_23, %c0_24], %47 {strides = array<i32>} : memref<8x2x128xf32, #tpu.memory_space<vmem>>, vector<1x2x128xf32>,
    %c2_i32 = arith.constant 2 : i32
    %c7_i32_25 = arith.constant 7 : i32
    %48 = arith.subi %c7_i32_25, %c2_i32 : i32
    %49 = arith.index_cast %c2_i32 : i32 to index
    %c0_26 = arith.constant 0 : index
    %c0_27 = arith.constant 0 : index
    %50 = vector.load %arg2[%49, %c0_26, %c0_27] : memref<8x2x128xf32, #tpu.memory_space<vmem>>, vector<1x2x128xf32>
    %51 = vector.shape_cast %50 : vector<1x2x128xf32> to vector<2x128xf32>
    %52 = arith.index_cast %48 : i32 to index
    %c0_28 = arith.constant 0 : index
    %c0_29 = arith.constant 0 : index
    %53 = vector.load %arg3[%52, %c0_28, %c0_29] : memref<8x2x128xf32, #tpu.memory_space<vmem>>, vector<1x2x128xf32>
    %54 = vector.shape_cast %53 : vector<1x2x128xf32> to vector<2x128xf32>
    %55 = tpu.concatenate %51, %54 in 1 : vector<2x128xf32>, vector<2x128xf32> -> vector<2x256xf32>
    %c0_30 = arith.constant 0 : index
    %c0_31 = arith.constant 0 : index
    %56 = vector.load %arg4[%c0_30, %c0_31] : memref<256x256xf32, #tpu.memory_space<vmem>>, vector<256x256xf32>
    %cst_32 = arith.constant dense<0.000000e+00> : vector<2x256xf32>
    %57 = tpu.matmul %37, %56, %cst_32 {dimension_numbers = #tpu.dot_dimension_numbers<[1], [0], [0], [1], [0, 0, 1, 1], [], []>} : vector<2x256xf32>, vector<256x256xf32>, vector<2x256xf32> -> vector<2x256xf32>
    %58 = arith.addf %55, %57 : vector<2x256xf32>
    %59 = math.tanh %58 : vector<2x256xf32>
    %60 = vector.extract_strided_slice %59 {offsets = [0, 0], sizes = [2, 128], strides = [1, 1]} : vector<2x256xf32> to vector<2x128xf32>
    %61 = arith.index_cast %c2_i32 : i32 to index
    %c0_33 = arith.constant 0 : index
    %c0_34 = arith.constant 0 : index
    %62 = vector.load %arg5[%61, %c0_33, %c0_34] : memref<8x2x128xf32, #tpu.memory_space<vmem>>, vector<1x2x128xf32>
    %63 = vector.shape_cast %62 : vector<1x2x128xf32> to vector<2x128xf32>
    %64 = vector.shape_cast %60 : vector<2x128xf32> to vector<1x2x128xf32>
    tpu.vector_store %arg5[%61, %c0_33, %c0_34], %64 {strides = array<i32>} : memref<8x2x128xf32, #tpu.memory_space<vmem>>, vector<1x2x128xf32>,
    %65 = vector.extract_strided_slice %59 {offsets = [0, 128], sizes = [2, 128], strides = [1, 1]} : vector<2x256xf32> to vector<2x128xf32>
    %66 = arith.index_cast %48 : i32 to index
    %c0_35 = arith.constant 0 : index
    %c0_36 = arith.constant 0 : index
    %67 = vector.load %arg6[%66, %c0_35, %c0_36] : memref<8x2x128xf32, #tpu.memory_space<vmem>>, vector<1x2x128xf32>
    %68 = vector.shape_cast %67 : vector<1x2x128xf32> to vector<2x128xf32>
    %69 = vector.shape_cast %65 : vector<2x128xf32> to vector<1x2x128xf32>
    tpu.vector_store %arg6[%66, %c0_35, %c0_36], %69 {strides = array<i32>} : memref<8x2x128xf32, #tpu.memory_space<vmem>>, vector<1x2x128xf32>,
    %c3_i32 = arith.constant 3 : i32
    %c7_i32_37 = arith.constant 7 : i32
    %70 = arith.subi %c7_i32_37, %c3_i32 : i32
    %71 = arith.index_cast %c3_i32 : i32 to index
    %c0_38 = arith.constant 0 : index
    %c0_39 = arith.constant 0 : index
    %72 = vector.load %arg2[%71, %c0_38, %c0_39] : memref<8x2x128xf32, #tpu.memory_space<vmem>>, vector<1x2x128xf32>
    %73 = vector.shape_cast %72 : vector<1x2x128xf32> to vector<2x128xf32>
    %74 = arith.index_cast %70 : i32 to index
    %c0_40 = arith.constant 0 : index
    %c0_41 = arith.constant 0 : index
    %75 = vector.load %arg3[%74, %c0_40, %c0_41] : memref<8x2x128xf32, #tpu.memory_space<vmem>>, vector<1x2x128xf32>
    %76 = vector.shape_cast %75 : vector<1x2x128xf32> to vector<2x128xf32>
    %77 = tpu.concatenate %73, %76 in 1 : vector<2x128xf32>, vector<2x128xf32> -> vector<2x256xf32>
    %c0_42 = arith.constant 0 : index
    %c0_43 = arith.constant 0 : index
    %78 = vector.load %arg4[%c0_42, %c0_43] : memref<256x256xf32, #tpu.memory_space<vmem>>, vector<256x256xf32>
    %cst_44 = arith.constant dense<0.000000e+00> : vector<2x256xf32>
    %79 = tpu.matmul %59, %78, %cst_44 {dimension_numbers = #tpu.dot_dimension_numbers<[1], [0], [0], [1], [0, 0, 1, 1], [], []>} : vector<2x256xf32>, vector<256x256xf32>, vector<2x256xf32> -> vector<2x256xf32>
    %80 = arith.addf %77, %79 : vector<2x256xf32>
    %81 = math.tanh %80 : vector<2x256xf32>
    %82 = vector.extract_strided_slice %81 {offsets = [0, 0], sizes = [2, 128], strides = [1, 1]} : vector<2x256xf32> to vector<2x128xf32>
    %83 = arith.index_cast %c3_i32 : i32 to index
    %c0_45 = arith.constant 0 : index
    %c0_46 = arith.constant 0 : index
    %84 = vector.load %arg5[%83, %c0_45, %c0_46] : memref<8x2x128xf32, #tpu.memory_space<vmem>>, vector<1x2x128xf32>
    %85 = vector.shape_cast %84 : vector<1x2x128xf32> to vector<2x128xf32>
    %86 = vector.shape_cast %82 : vector<2x128xf32> to vector<1x2x128xf32>
    tpu.vector_store %arg5[%83, %c0_45, %c0_46], %86 {strides = array<i32>} : memref<8x2x128xf32, #tpu.memory_space<vmem>>, vector<1x2x128xf32>,
    %87 = vector.extract_strided_slice %81 {offsets = [0, 128], sizes = [2, 128], strides = [1, 1]} : vector<2x256xf32> to vector<2x128xf32>
    %88 = arith.index_cast %70 : i32 to index
    %c0_47 = arith.constant 0 : index
    %c0_48 = arith.constant 0 : index
    %89 = vector.load %arg6[%88, %c0_47, %c0_48] : memref<8x2x128xf32, #tpu.memory_space<vmem>>, vector<1x2x128xf32>
    %90 = vector.shape_cast %89 : vector<1x2x128xf32> to vector<2x128xf32>
    %91 = vector.shape_cast %87 : vector<2x128xf32> to vector<1x2x128xf32>
    tpu.vector_store %arg6[%88, %c0_47, %c0_48], %91 {strides = array<i32>} : memref<8x2x128xf32, #tpu.memory_space<vmem>>, vector<1x2x128xf32>,
    %c4_i32 = arith.constant 4 : i32
    %c7_i32_49 = arith.constant 7 : i32
    %92 = arith.subi %c7_i32_49, %c4_i32 : i32
    %93 = arith.index_cast %c4_i32 : i32 to index
    %c0_50 = arith.constant 0 : index
    %c0_51 = arith.constant 0 : index
    %94 = vector.load %arg2[%93, %c0_50, %c0_51] : memref<8x2x128xf32, #tpu.memory_space<vmem>>, vector<1x2x128xf32>
    %95 = vector.shape_cast %94 : vector<1x2x128xf32> to vector<2x128xf32>
    %96 = arith.index_cast %92 : i32 to index
    %c0_52 = arith.constant 0 : index
    %c0_53 = arith.constant 0 : index
    %97 = vector.load %arg3[%96, %c0_52, %c0_53] : memref<8x2x128xf32, #tpu.memory_space<vmem>>, vector<1x2x128xf32>
    %98 = vector.shape_cast %97 : vector<1x2x128xf32> to vector<2x128xf32>
    %99 = tpu.concatenate %95, %98 in 1 : vector<2x128xf32>, vector<2x128xf32> -> vector<2x256xf32>
    %c0_54 = arith.constant 0 : index
    %c0_55 = arith.constant 0 : index
    %100 = vector.load %arg4[%c0_54, %c0_55] : memref<256x256xf32, #tpu.memory_space<vmem>>, vector<256x256xf32>
    %cst_56 = arith.constant dense<0.000000e+00> : vector<2x256xf32>
    %101 = tpu.matmul %81, %100, %cst_56 {dimension_numbers = #tpu.dot_dimension_numbers<[1], [0], [0], [1], [0, 0, 1, 1], [], []>} : vector<2x256xf32>, vector<256x256xf32>, vector<2x256xf32> -> vector<2x256xf32>
    %102 = arith.addf %99, %101 : vector<2x256xf32>
    %103 = math.tanh %102 : vector<2x256xf32>
    %104 = vector.extract_strided_slice %103 {offsets = [0, 0], sizes = [2, 128], strides = [1, 1]} : vector<2x256xf32> to vector<2x128xf32>
    %105 = arith.index_cast %c4_i32 : i32 to index
    %c0_57 = arith.constant 0 : index
    %c0_58 = arith.constant 0 : index
    %106 = vector.load %arg5[%105, %c0_57, %c0_58] : memref<8x2x128xf32, #tpu.memory_space<vmem>>, vector<1x2x128xf32>
    %107 = vector.shape_cast %106 : vector<1x2x128xf32> to vector<2x128xf32>
    %108 = vector.shape_cast %104 : vector<2x128xf32> to vector<1x2x128xf32>
    tpu.vector_store %arg5[%105, %c0_57, %c0_58], %108 {strides = array<i32>} : memref<8x2x128xf32, #tpu.memory_space<vmem>>, vector<1x2x128xf32>,
    %109 = vector.extract_strided_slice %103 {offsets = [0, 128], sizes = [2, 128], strides = [1, 1]} : vector<2x256xf32> to vector<2x128xf32>
    %110 = arith.index_cast %92 : i32 to index
    %c0_59 = arith.constant 0 : index
    %c0_60 = arith.constant 0 : index
    %111 = vector.load %arg6[%110, %c0_59, %c0_60] : memref<8x2x128xf32, #tpu.memory_space<vmem>>, vector<1x2x128xf32>
    %112 = vector.shape_cast %111 : vector<1x2x128xf32> to vector<2x128xf32>
    %113 = vector.shape_cast %109 : vector<2x128xf32> to vector<1x2x128xf32>
    tpu.vector_store %arg6[%110, %c0_59, %c0_60], %113 {strides = array<i32>} : memref<8x2x128xf32, #tpu.memory_space<vmem>>, vector<1x2x128xf32>,
    %c5_i32 = arith.constant 5 : i32
    %c7_i32_61 = arith.constant 7 : i32
    %114 = arith.subi %c7_i32_61, %c5_i32 : i32
    %115 = arith.index_cast %c5_i32 : i32 to index
    %c0_62 = arith.constant 0 : index
    %c0_63 = arith.constant 0 : index
    %116 = vector.load %arg2[%115, %c0_62, %c0_63] : memref<8x2x128xf32, #tpu.memory_space<vmem>>, vector<1x2x128xf32>
    %117 = vector.shape_cast %116 : vector<1x2x128xf32> to vector<2x128xf32>
    %118 = arith.index_cast %114 : i32 to index
    %c0_64 = arith.constant 0 : index
    %c0_65 = arith.constant 0 : index
    %119 = vector.load %arg3[%118, %c0_64, %c0_65] : memref<8x2x128xf32, #tpu.memory_space<vmem>>, vector<1x2x128xf32>
    %120 = vector.shape_cast %119 : vector<1x2x128xf32> to vector<2x128xf32>
    %121 = tpu.concatenate %117, %120 in 1 : vector<2x128xf32>, vector<2x128xf32> -> vector<2x256xf32>
    %c0_66 = arith.constant 0 : index
    %c0_67 = arith.constant 0 : index
    %122 = vector.load %arg4[%c0_66, %c0_67] : memref<256x256xf32, #tpu.memory_space<vmem>>, vector<256x256xf32>
    %cst_68 = arith.constant dense<0.000000e+00> : vector<2x256xf32>
    %123 = tpu.matmul %103, %122, %cst_68 {dimension_numbers = #tpu.dot_dimension_numbers<[1], [0], [0], [1], [0, 0, 1, 1], [], []>} : vector<2x256xf32>, vector<256x256xf32>, vector<2x256xf32> -> vector<2x256xf32>
    %124 = arith.addf %121, %123 : vector<2x256xf32>
    %125 = math.tanh %124 : vector<2x256xf32>
    %126 = vector.extract_strided_slice %125 {offsets = [0, 0], sizes = [2, 128], strides = [1, 1]} : vector<2x256xf32> to vector<2x128xf32>
    %127 = arith.index_cast %c5_i32 : i32 to index
    %c0_69 = arith.constant 0 : index
    %c0_70 = arith.constant 0 : index
    %128 = vector.load %arg5[%127, %c0_69, %c0_70] : memref<8x2x128xf32, #tpu.memory_space<vmem>>, vector<1x2x128xf32>
    %129 = vector.shape_cast %128 : vector<1x2x128xf32> to vector<2x128xf32>
    %130 = vector.shape_cast %126 : vector<2x128xf32> to vector<1x2x128xf32>
    tpu.vector_store %arg5[%127, %c0_69, %c0_70], %130 {strides = array<i32>} : memref<8x2x128xf32, #tpu.memory_space<vmem>>, vector<1x2x128xf32>,
    %131 = vector.extract_strided_slice %125 {offsets = [0, 128], sizes = [2, 128], strides = [1, 1]} : vector<2x256xf32> to vector<2x128xf32>
    %132 = arith.index_cast %114 : i32 to index
    %c0_71 = arith.constant 0 : index
    %c0_72 = arith.constant 0 : index
    %133 = vector.load %arg6[%132, %c0_71, %c0_72] : memref<8x2x128xf32, #tpu.memory_space<vmem>>, vector<1x2x128xf32>
    %134 = vector.shape_cast %133 : vector<1x2x128xf32> to vector<2x128xf32>
    %135 = vector.shape_cast %131 : vector<2x128xf32> to vector<1x2x128xf32>
    tpu.vector_store %arg6[%132, %c0_71, %c0_72], %135 {strides = array<i32>} : memref<8x2x128xf32, #tpu.memory_space<vmem>>, vector<1x2x128xf32>,
    %c6_i32 = arith.constant 6 : i32
    %c7_i32_73 = arith.constant 7 : i32
    %136 = arith.subi %c7_i32_73, %c6_i32 : i32
    %137 = arith.index_cast %c6_i32 : i32 to index
    %c0_74 = arith.constant 0 : index
    %c0_75 = arith.constant 0 : index
    %138 = vector.load %arg2[%137, %c0_74, %c0_75] : memref<8x2x128xf32, #tpu.memory_space<vmem>>, vector<1x2x128xf32>
    %139 = vector.shape_cast %138 : vector<1x2x128xf32> to vector<2x128xf32>
    %140 = arith.index_cast %136 : i32 to index
    %c0_76 = arith.constant 0 : index
    %c0_77 = arith.constant 0 : index
    %141 = vector.load %arg3[%140, %c0_76, %c0_77] : memref<8x2x128xf32, #tpu.memory_space<vmem>>, vector<1x2x128xf32>
    %142 = vector.shape_cast %141 : vector<1x2x128xf32> to vector<2x128xf32>
    %143 = tpu.concatenate %139, %142 in 1 : vector<2x128xf32>, vector<2x128xf32> -> vector<2x256xf32>
    %c0_78 = arith.constant 0 : index
    %c0_79 = arith.constant 0 : index
    %144 = vector.load %arg4[%c0_78, %c0_79] : memref<256x256xf32, #tpu.memory_space<vmem>>, vector<256x256xf32>
    %cst_80 = arith.constant dense<0.000000e+00> : vector<2x256xf32>
    %145 = tpu.matmul %125, %144, %cst_80 {dimension_numbers = #tpu.dot_dimension_numbers<[1], [0], [0], [1], [0, 0, 1, 1], [], []>} : vector<2x256xf32>, vector<256x256xf32>, vector<2x256xf32> -> vector<2x256xf32>
    %146 = arith.addf %143, %145 : vector<2x256xf32>
    %147 = math.tanh %146 : vector<2x256xf32>
    %148 = vector.extract_strided_slice %147 {offsets = [0, 0], sizes = [2, 128], strides = [1, 1]} : vector<2x256xf32> to vector<2x128xf32>
    %149 = arith.index_cast %c6_i32 : i32 to index
    %c0_81 = arith.constant 0 : index
    %c0_82 = arith.constant 0 : index
    %150 = vector.load %arg5[%149, %c0_81, %c0_82] : memref<8x2x128xf32, #tpu.memory_space<vmem>>, vector<1x2x128xf32>
    %151 = vector.shape_cast %150 : vector<1x2x128xf32> to vector<2x128xf32>
    %152 = vector.shape_cast %148 : vector<2x128xf32> to vector<1x2x128xf32>
    tpu.vector_store %arg5[%149, %c0_81, %c0_82], %152 {strides = array<i32>} : memref<8x2x128xf32, #tpu.memory_space<vmem>>, vector<1x2x128xf32>,
    %153 = vector.extract_strided_slice %147 {offsets = [0, 128], sizes = [2, 128], strides = [1, 1]} : vector<2x256xf32> to vector<2x128xf32>
    %154 = arith.index_cast %136 : i32 to index
    %c0_83 = arith.constant 0 : index
    %c0_84 = arith.constant 0 : index
    %155 = vector.load %arg6[%154, %c0_83, %c0_84] : memref<8x2x128xf32, #tpu.memory_space<vmem>>, vector<1x2x128xf32>
    %156 = vector.shape_cast %155 : vector<1x2x128xf32> to vector<2x128xf32>
    %157 = vector.shape_cast %153 : vector<2x128xf32> to vector<1x2x128xf32>
    tpu.vector_store %arg6[%154, %c0_83, %c0_84], %157 {strides = array<i32>} : memref<8x2x128xf32, #tpu.memory_space<vmem>>, vector<1x2x128xf32>,
    %c7_i32_85 = arith.constant 7 : i32
    %c7_i32_86 = arith.constant 7 : i32
    %158 = arith.subi %c7_i32_86, %c7_i32_85 : i32
    %159 = arith.index_cast %c7_i32_85 : i32 to index
    %c0_87 = arith.constant 0 : index
    %c0_88 = arith.constant 0 : index
    %160 = vector.load %arg2[%159, %c0_87, %c0_88] : memref<8x2x128xf32, #tpu.memory_space<vmem>>, vector<1x2x128xf32>
    %161 = vector.shape_cast %160 : vector<1x2x128xf32> to vector<2x128xf32>
    %162 = arith.index_cast %158 : i32 to index
    %c0_89 = arith.constant 0 : index
    %c0_90 = arith.constant 0 : index
    %163 = vector.load %arg3[%162, %c0_89, %c0_90] : memref<8x2x128xf32, #tpu.memory_space<vmem>>, vector<1x2x128xf32>
    %164 = vector.shape_cast %163 : vector<1x2x128xf32> to vector<2x128xf32>
    %165 = tpu.concatenate %161, %164 in 1 : vector<2x128xf32>, vector<2x128xf32> -> vector<2x256xf32>
    %c0_91 = arith.constant 0 : index
    %c0_92 = arith.constant 0 : index
    %166 = vector.load %arg4[%c0_91, %c0_92] : memref<256x256xf32, #tpu.memory_space<vmem>>, vector<256x256xf32>
    %cst_93 = arith.constant dense<0.000000e+00> : vector<2x256xf32>
    %167 = tpu.matmul %147, %166, %cst_93 {dimension_numbers = #tpu.dot_dimension_numbers<[1], [0], [0], [1], [0, 0, 1, 1], [], []>} : vector<2x256xf32>, vector<256x256xf32>, vector<2x256xf32> -> vector<2x256xf32>
    %168 = arith.addf %165, %167 : vector<2x256xf32>
    %169 = math.tanh %168 : vector<2x256xf32>
    %170 = vector.extract_strided_slice %169 {offsets = [0, 0], sizes = [2, 128], strides = [1, 1]} : vector<2x256xf32> to vector<2x128xf32>
    %171 = arith.index_cast %c7_i32_85 : i32 to index
    %c0_94 = arith.constant 0 : index
    %c0_95 = arith.constant 0 : index
    %172 = vector.load %arg5[%171, %c0_94, %c0_95] : memref<8x2x128xf32, #tpu.memory_space<vmem>>, vector<1x2x128xf32>
    %173 = vector.shape_cast %172 : vector<1x2x128xf32> to vector<2x128xf32>
    %174 = vector.shape_cast %170 : vector<2x128xf32> to vector<1x2x128xf32>
    tpu.vector_store %arg5[%171, %c0_94, %c0_95], %174 {strides = array<i32>} : memref<8x2x128xf32, #tpu.memory_space<vmem>>, vector<1x2x128xf32>,
    %175 = vector.extract_strided_slice %169 {offsets = [0, 128], sizes = [2, 128], strides = [1, 1]} : vector<2x256xf32> to vector<2x128xf32>
    %176 = arith.index_cast %158 : i32 to index
    %c0_96 = arith.constant 0 : index
    %c0_97 = arith.constant 0 : index
    %177 = vector.load %arg6[%176, %c0_96, %c0_97] : memref<8x2x128xf32, #tpu.memory_space<vmem>>, vector<1x2x128xf32>
    %178 = vector.shape_cast %177 : vector<1x2x128xf32> to vector<2x128xf32>
    %179 = vector.shape_cast %175 : vector<2x128xf32> to vector<1x2x128xf32>
    tpu.vector_store %arg6[%176, %c0_96, %c0_97], %179 {strides = array<i32>} : memref<8x2x128xf32, #tpu.memory_space<vmem>>, vector<1x2x128xf32>,
    %c8_i32 = arith.constant 8 : i32
    %c0_98 = arith.constant 0 : index
    %c0_99 = arith.constant 0 : index
    %180 = vector.load %arg7[%c0_98, %c0_99] : memref<2x256xf32, #tpu.memory_space<vmem>>, vector<2x256xf32>
    tpu.vector_store %arg7[%c0_98, %c0_99], %169 {strides = array<i32>} : memref<2x256xf32, #tpu.memory_space<vmem>>, vector<2x256xf32>,
    return
  }
  func.func @transform_0(%arg0: i32, %arg1: i32) -> (i32, i32, i32) {
    %c0_i32 = arith.constant 0 : i32
    %c0_i32_0 = arith.constant 0 : i32
    return %arg1, %arg0, %c0_i32 : i32, i32, i32
  }
  func.func @transform_1(%arg0: i32, %arg1: i32) -> (i32, i32, i32) {
    %c0_i32 = arith.constant 0 : i32
    %0 = arith.subi %c0_i32, %arg1 : i32
    %c0_i32_0 = arith.constant 0 : i32
    %c0_i32_1 = arith.constant 0 : i32
    return %0, %arg0, %c0_i32_0 : i32, i32, i32
  }
  func.func @transform_2(%arg0: i32, %arg1: i32) -> (i32, i32) {
    %c0_i32 = arith.constant 0 : i32
    %c0_i32_0 = arith.constant 0 : i32
    %c0_i32_1 = arith.constant 0 : i32
    return %c0_i32, %c0_i32_0 : i32, i32
  }
  func.func @transform_3(%arg0: i32, %arg1: i32) -> (i32, i32, i32) {
    %c0_i32 = arith.constant 0 : i32
    %c0_i32_0 = arith.constant 0 : i32
    return %arg1, %arg0, %c0_i32 : i32, i32, i32
  }
  func.func @transform_4(%arg0: i32, %arg1: i32) -> (i32, i32, i32) {
    %c0_i32 = arith.constant 0 : i32
    %0 = arith.subi %c0_i32, %arg1 : i32
    %c0_i32_0 = arith.constant 0 : i32
    %c0_i32_1 = arith.constant 0 : i32
    return %0, %arg0, %c0_i32_0 : i32, i32, i32
  }
}

module attributes {stable_mosaic.version = 11 : i64} {
  func.func @attention_out_kernel(%arg0: i32, %arg1: memref<8x2x128xf32, #tpu.memory_space<vmem>>, %arg2: memref<8x2x128xf32, #tpu.memory_space<vmem>>, %arg3: memref<2x6x256xf32, #tpu.memory_space<vmem>>, %arg4: memref<256x128xf32, #tpu.memory_space<vmem>>, %arg5: memref<1x128xf32, #tpu.memory_space<vmem>>, %arg6: memref<2x8x128xf32, #tpu.memory_space<vmem>>) attributes {dimension_semantics = [#tpu.dimension_semantics<parallel>], iteration_bounds = array<i64: 1>, scalar_prefetch = 0 : i64, scratch_operands = 0 : i64, tpu.core_type = #tpu.core_type<tc>, window_params = [{transform_indices = @transform_0, window_bounds = array<i64: 8, 2, 128>}, {transform_indices = @transform_1, window_bounds = array<i64: 8, 2, 128>}, {pipeline_mode = #tpu.pipeline_mode<synchronous>, transform_indices = @transform_2, window_bounds = array<i64: 2, 6, 256>}, {pipeline_mode = #tpu.pipeline_mode<synchronous>, transform_indices = @transform_3, window_bounds = array<i64: 256, 128>}, {pipeline_mode = #tpu.pipeline_mode<synchronous>, transform_indices = @transform_4, window_bounds = array<i64: 1, 128>}, {transform_indices = @transform_5, window_bounds = array<i64: 2, 8, 128>}]} {
    %c0 = arith.constant 0 : index
    %c0_0 = arith.constant 0 : index
    %0 = vector.load %arg4[%c0, %c0_0] : memref<256x128xf32, #tpu.memory_space<vmem>>, vector<256x128xf32>
    %c0_1 = arith.constant 0 : index
    %c0_2 = arith.constant 0 : index
    %1 = vector.load %arg5[%c0_1, %c0_2] : memref<1x128xf32, #tpu.memory_space<vmem>>, vector<1x128xf32>
    %c0_3 = arith.constant 0 : index
    %c0_4 = arith.constant 0 : index
    %c0_5 = arith.constant 0 : index
    %2 = vector.load %arg3[%c0_3, %c0_4, %c0_5] : memref<2x6x256xf32, #tpu.memory_space<vmem>>, vector<1x6x256xf32>
    %3 = vector.shape_cast %2 : vector<1x6x256xf32> to vector<6x256xf32>
    %4 = vector.extract_strided_slice %3 {offsets = [0, 0], sizes = [6, 128], strides = [1, 1]} : vector<6x256xf32> to vector<6x128xf32>
    %5 = vector.extract_strided_slice %3 {offsets = [0, 128], sizes = [6, 128], strides = [1, 1]} : vector<6x256xf32> to vector<6x128xf32>
    %c0_6 = arith.constant 0 : index
    %c0_7 = arith.constant 0 : index
    %c0_8 = arith.constant 0 : index
    %6 = vector.load %arg1[%c0_6, %c0_7, %c0_8] : memref<8x2x128xf32, #tpu.memory_space<vmem>>, vector<8x1x128xf32>
    %7 = vector.shape_cast %6 : vector<8x1x128xf32> to vector<8x128xf32>
    %c0_9 = arith.constant 0 : index
    %c0_10 = arith.constant 0 : index
    %c0_11 = arith.constant 0 : index
    %8 = vector.load %arg2[%c0_9, %c0_10, %c0_11] : memref<8x2x128xf32, #tpu.memory_space<vmem>>, vector<8x1x128xf32>
    %9 = vector.shape_cast %8 : vector<8x1x128xf32> to vector<8x128xf32>
    %cst = arith.constant dense<0.000000e+00> : vector<8x6xf32>
    %10 = tpu.matmul %7, %4, %cst {dimension_numbers = #tpu.dot_dimension_numbers<[1], [1], [0], [0], [0, 0, 1, 0], [], []>} : vector<8x128xf32>, vector<6x128xf32>, vector<8x6xf32> -> vector<8x6xf32>
    %cst_12 = arith.constant dense<0.000000e+00> : vector<8x6xf32>
    %11 = tpu.matmul %9, %5, %cst_12 {dimension_numbers = #tpu.dot_dimension_numbers<[1], [1], [0], [0], [0, 0, 1, 0], [], []>} : vector<8x128xf32>, vector<6x128xf32>, vector<8x6xf32> -> vector<8x6xf32>
    %12 = arith.addf %10, %11 : vector<8x6xf32>
    %cst_13 = arith.constant dense<0xFF800000> : vector<8xf32>
    %13 = vector.multi_reduction <maximumf>, %12, %cst_13 [1] : vector<8x6xf32> to vector<8xf32>
    %14 = vector.shape_cast %13 : vector<8xf32> to vector<8x1xf32>
    %15 = vector.broadcast %14 : vector<8x1xf32> to vector<8x6xf32>
    %16 = arith.subf %12, %15 : vector<8x6xf32>
    %17 = math.exp %16 : vector<8x6xf32>
    %cst_14 = arith.constant dense<0.000000e+00> : vector<8xf32>
    %18 = vector.multi_reduction <add>, %17, %cst_14 [1] : vector<8x6xf32> to vector<8xf32>
    %19 = vector.shape_cast %18 : vector<8xf32> to vector<8x1xf32>
    %20 = tpu.reciprocal %19 {approx = true} : vector<8x1xf32> -> vector<8x1xf32>
    %21 = arith.mulf %19, %20 : vector<8x1xf32>
    %cst_15 = arith.constant 2.000000e+00 : f32
    %22 = vector.broadcast %cst_15 : f32 to vector<8x1xf32>
    %23 = arith.subf %22, %21 : vector<8x1xf32>
    %24 = arith.mulf %20, %23 : vector<8x1xf32>
    %25 = vector.broadcast %24 : vector<8x1xf32> to vector<8x6xf32>
    %26 = arith.mulf %17, %25 : vector<8x6xf32>
    %cst_16 = arith.constant dense<0.000000e+00> : vector<8x256xf32>
    %27 = tpu.matmul %26, %3, %cst_16 {dimension_numbers = #tpu.dot_dimension_numbers<[1], [0], [0], [1], [0, 0, 1, 1], [], []>} : vector<8x6xf32>, vector<6x256xf32>, vector<8x256xf32> -> vector<8x256xf32>
    %cst_17 = arith.constant dense<0.000000e+00> : vector<8x128xf32>
    %28 = tpu.matmul %27, %0, %cst_17 {dimension_numbers = #tpu.dot_dimension_numbers<[1], [0], [0], [1], [0, 0, 1, 1], [], []>} : vector<8x256xf32>, vector<256x128xf32>, vector<8x128xf32> -> vector<8x128xf32>
    %29 = vector.broadcast %1 : vector<1x128xf32> to vector<8x128xf32>
    %30 = arith.addf %28, %29 : vector<8x128xf32>
    %cst_18 = arith.constant dense<0xFF800000> : vector<8xf32>
    %31 = vector.multi_reduction <maximumf>, %30, %cst_18 [1] : vector<8x128xf32> to vector<8xf32>
    %32 = vector.shape_cast %31 : vector<8xf32> to vector<8x1xf32>
    %33 = vector.broadcast %32 : vector<8x1xf32> to vector<8x128xf32>
    %34 = arith.subf %30, %33 : vector<8x128xf32>
    %35 = math.exp %34 : vector<8x128xf32>
    %cst_19 = arith.constant dense<0.000000e+00> : vector<8xf32>
    %36 = vector.multi_reduction <add>, %35, %cst_19 [1] : vector<8x128xf32> to vector<8xf32>
    %37 = vector.shape_cast %36 : vector<8xf32> to vector<8x1xf32>
    %38 = math.log %37 : vector<8x1xf32>
    %39 = vector.broadcast %38 : vector<8x1xf32> to vector<8x128xf32>
    %40 = arith.subf %34, %39 : vector<8x128xf32>
    %c0_20 = arith.constant 0 : index
    %c0_21 = arith.constant 0 : index
    %c0_22 = arith.constant 0 : index
    %41 = vector.load %arg6[%c0_20, %c0_21, %c0_22] : memref<2x8x128xf32, #tpu.memory_space<vmem>>, vector<1x8x128xf32>
    %42 = vector.shape_cast %41 : vector<1x8x128xf32> to vector<8x128xf32>
    %43 = vector.shape_cast %40 : vector<8x128xf32> to vector<1x8x128xf32>
    tpu.vector_store %arg6[%c0_20, %c0_21, %c0_22], %43 {strides = array<i32>} : memref<2x8x128xf32, #tpu.memory_space<vmem>>, vector<1x8x128xf32>,
    %c1 = arith.constant 1 : index
    %c0_23 = arith.constant 0 : index
    %c0_24 = arith.constant 0 : index
    %44 = vector.load %arg3[%c1, %c0_23, %c0_24] : memref<2x6x256xf32, #tpu.memory_space<vmem>>, vector<1x6x256xf32>
    %45 = vector.shape_cast %44 : vector<1x6x256xf32> to vector<6x256xf32>
    %46 = vector.extract_strided_slice %45 {offsets = [0, 0], sizes = [6, 128], strides = [1, 1]} : vector<6x256xf32> to vector<6x128xf32>
    %47 = vector.extract_strided_slice %45 {offsets = [0, 128], sizes = [6, 128], strides = [1, 1]} : vector<6x256xf32> to vector<6x128xf32>
    %c0_25 = arith.constant 0 : index
    %c1_26 = arith.constant 1 : index
    %c0_27 = arith.constant 0 : index
    %48 = vector.load %arg1[%c0_25, %c1_26, %c0_27] : memref<8x2x128xf32, #tpu.memory_space<vmem>>, vector<8x1x128xf32>
    %49 = vector.shape_cast %48 : vector<8x1x128xf32> to vector<8x128xf32>
    %c0_28 = arith.constant 0 : index
    %c1_29 = arith.constant 1 : index
    %c0_30 = arith.constant 0 : index
    %50 = vector.load %arg2[%c0_28, %c1_29, %c0_30] : memref<8x2x128xf32, #tpu.memory_space<vmem>>, vector<8x1x128xf32>
    %51 = vector.shape_cast %50 : vector<8x1x128xf32> to vector<8x128xf32>
    %cst_31 = arith.constant dense<0.000000e+00> : vector<8x6xf32>
    %52 = tpu.matmul %49, %46, %cst_31 {dimension_numbers = #tpu.dot_dimension_numbers<[1], [1], [0], [0], [0, 0, 1, 0], [], []>} : vector<8x128xf32>, vector<6x128xf32>, vector<8x6xf32> -> vector<8x6xf32>
    %cst_32 = arith.constant dense<0.000000e+00> : vector<8x6xf32>
    %53 = tpu.matmul %51, %47, %cst_32 {dimension_numbers = #tpu.dot_dimension_numbers<[1], [1], [0], [0], [0, 0, 1, 0], [], []>} : vector<8x128xf32>, vector<6x128xf32>, vector<8x6xf32> -> vector<8x6xf32>
    %54 = arith.addf %52, %53 : vector<8x6xf32>
    %cst_33 = arith.constant dense<0xFF800000> : vector<8xf32>
    %55 = vector.multi_reduction <maximumf>, %54, %cst_33 [1] : vector<8x6xf32> to vector<8xf32>
    %56 = vector.shape_cast %55 : vector<8xf32> to vector<8x1xf32>
    %57 = vector.broadcast %56 : vector<8x1xf32> to vector<8x6xf32>
    %58 = arith.subf %54, %57 : vector<8x6xf32>
    %59 = math.exp %58 : vector<8x6xf32>
    %cst_34 = arith.constant dense<0.000000e+00> : vector<8xf32>
    %60 = vector.multi_reduction <add>, %59, %cst_34 [1] : vector<8x6xf32> to vector<8xf32>
    %61 = vector.shape_cast %60 : vector<8xf32> to vector<8x1xf32>
    %62 = tpu.reciprocal %61 {approx = true} : vector<8x1xf32> -> vector<8x1xf32>
    %63 = arith.mulf %61, %62 : vector<8x1xf32>
    %cst_35 = arith.constant 2.000000e+00 : f32
    %64 = vector.broadcast %cst_35 : f32 to vector<8x1xf32>
    %65 = arith.subf %64, %63 : vector<8x1xf32>
    %66 = arith.mulf %62, %65 : vector<8x1xf32>
    %67 = vector.broadcast %66 : vector<8x1xf32> to vector<8x6xf32>
    %68 = arith.mulf %59, %67 : vector<8x6xf32>
    %cst_36 = arith.constant dense<0.000000e+00> : vector<8x256xf32>
    %69 = tpu.matmul %68, %45, %cst_36 {dimension_numbers = #tpu.dot_dimension_numbers<[1], [0], [0], [1], [0, 0, 1, 1], [], []>} : vector<8x6xf32>, vector<6x256xf32>, vector<8x256xf32> -> vector<8x256xf32>
    %cst_37 = arith.constant dense<0.000000e+00> : vector<8x128xf32>
    %70 = tpu.matmul %69, %0, %cst_37 {dimension_numbers = #tpu.dot_dimension_numbers<[1], [0], [0], [1], [0, 0, 1, 1], [], []>} : vector<8x256xf32>, vector<256x128xf32>, vector<8x128xf32> -> vector<8x128xf32>
    %71 = vector.broadcast %1 : vector<1x128xf32> to vector<8x128xf32>
    %72 = arith.addf %70, %71 : vector<8x128xf32>
    %cst_38 = arith.constant dense<0xFF800000> : vector<8xf32>
    %73 = vector.multi_reduction <maximumf>, %72, %cst_38 [1] : vector<8x128xf32> to vector<8xf32>
    %74 = vector.shape_cast %73 : vector<8xf32> to vector<8x1xf32>
    %75 = vector.broadcast %74 : vector<8x1xf32> to vector<8x128xf32>
    %76 = arith.subf %72, %75 : vector<8x128xf32>
    %77 = math.exp %76 : vector<8x128xf32>
    %cst_39 = arith.constant dense<0.000000e+00> : vector<8xf32>
    %78 = vector.multi_reduction <add>, %77, %cst_39 [1] : vector<8x128xf32> to vector<8xf32>
    %79 = vector.shape_cast %78 : vector<8xf32> to vector<8x1xf32>
    %80 = math.log %79 : vector<8x1xf32>
    %81 = vector.broadcast %80 : vector<8x1xf32> to vector<8x128xf32>
    %82 = arith.subf %76, %81 : vector<8x128xf32>
    %c1_40 = arith.constant 1 : index
    %c0_41 = arith.constant 0 : index
    %c0_42 = arith.constant 0 : index
    %83 = vector.load %arg6[%c1_40, %c0_41, %c0_42] : memref<2x8x128xf32, #tpu.memory_space<vmem>>, vector<1x8x128xf32>
    %84 = vector.shape_cast %83 : vector<1x8x128xf32> to vector<8x128xf32>
    %85 = vector.shape_cast %82 : vector<8x128xf32> to vector<1x8x128xf32>
    tpu.vector_store %arg6[%c1_40, %c0_41, %c0_42], %85 {strides = array<i32>} : memref<2x8x128xf32, #tpu.memory_space<vmem>>, vector<1x8x128xf32>,
    return
  }
  func.func @transform_0(%arg0: i32) -> (i32, i32, i32) {
    %c0_i32 = arith.constant 0 : i32
    %c0_i32_0 = arith.constant 0 : i32
    %c0_i32_1 = arith.constant 0 : i32
    return %arg0, %c0_i32, %c0_i32_0 : i32, i32, i32
  }
  func.func @transform_1(%arg0: i32) -> (i32, i32, i32) {
    %c0_i32 = arith.constant 0 : i32
    %c0_i32_0 = arith.constant 0 : i32
    %c0_i32_1 = arith.constant 0 : i32
    return %arg0, %c0_i32, %c0_i32_0 : i32, i32, i32
  }
  func.func @transform_2(%arg0: i32) -> (i32, i32, i32) {
    %c0_i32 = arith.constant 0 : i32
    %c0_i32_0 = arith.constant 0 : i32
    %c0_i32_1 = arith.constant 0 : i32
    %c0_i32_2 = arith.constant 0 : i32
    return %c0_i32, %c0_i32_0, %c0_i32_1 : i32, i32, i32
  }
  func.func @transform_3(%arg0: i32) -> (i32, i32) {
    %c0_i32 = arith.constant 0 : i32
    %c0_i32_0 = arith.constant 0 : i32
    %c0_i32_1 = arith.constant 0 : i32
    return %c0_i32, %c0_i32_0 : i32, i32
  }
  func.func @transform_4(%arg0: i32) -> (i32, i32) {
    %c0_i32 = arith.constant 0 : i32
    %c0_i32_0 = arith.constant 0 : i32
    %c0_i32_1 = arith.constant 0 : i32
    return %c0_i32, %c0_i32_0 : i32, i32
  }
  func.func @transform_5(%arg0: i32) -> (i32, i32, i32) {
    %c0_i32 = arith.constant 0 : i32
    %c0_i32_0 = arith.constant 0 : i32
    %c0_i32_1 = arith.constant 0 : i32
    return %c0_i32, %arg0, %c0_i32_0 : i32, i32, i32
  }
}

</mosaic_0001>

<llo_original>
// kernel: document_model_forward.2
$region0: #{document_model_forward.2}
  #allocation0 [shape = 'u32[]', space=smem, size = 0x4, offset = 0x4, fixed_abs, tag = 'smem constant byte address 0x4 - core index']
  #allocation1 [shape = 'u32[144,128]{1,0:T(1,128)}', space=vmem, size = 0x12000, scoped, tag = 'internal scratch']
  #allocation2 [shape = 'f32[2,256]{1,0:T(2,128)}', space=vmem, size = 0x800, scoped, tag = 'scratch operand']
  %s0 = inlined_call_operand.vmem [shape: f32[8,2,128], index: 0, kind: input, shape index: {}]
  %s1 = inlined_call_operand.vmem [shape: f32[8,2,128], index: 1, kind: input, shape index: {}]
  %s2 = inlined_call_operand.vmem [shape: f32[256,256], index: 2, kind: input, shape index: {}]
  %s3 = inlined_call_operand.vmem [shape: f32[8,2,128], index: 3, kind: output, shape index: {0}]
  %s4 = inlined_call_operand.vmem [shape: f32[8,2,128], index: 4, kind: output, shape index: {1}]
  %5 = xla_tuple %s3, %s4
  %s6 = sld [smem:[#allocation0]]
  $region34: #{document_model_forward.2} parent=0
    _
  %s8 = ssub.s32 1, %s6
  %s9 = scalar_select 0, %s8, %s6
  // Predicated region
  $region2: #{document_model_forward.2} parent=0 // pred_check
    _
  $region3: #{document_model_forward.2} parent=0 // pred_check_branch
    %11 = sbr.rel (0) target = $region5
  $region4: #{document_model_forward.2} parent=0 // pred_region
    _
  $region5: #{document_model_forward.2} parent=0 // pred_fallthru
    _
  // Predicated region
  $region6: #{document_model_forward.2} parent=0 // pred_check
    _
  $region7: #{document_model_forward.2} parent=0 // pred_check_branch
    %13 = sbr.rel (0) target = $region9
  $region8: #{document_model_forward.2} parent=0 // pred_region
    %s14 = ssub.s32 0, 0
    %s15 = smul.u32 8, %s14
    %p16 = scmp.lt.s32.totalorder %s15, 7
    %s17 = scalar_select %p16, %s15, 7
    %s18 = smul.addr %s17, 2
    %s19 = scalar_lea.vmem %s1, %s18
    %s20 = ssub.s32 0, 0
    %s21 = smul.u32 8, %s20
  $region9: #{document_model_forward.2} parent=0 // pred_fallthru
    _
  // Predicated region
  $region10: #{document_model_forward.2} parent=0 // pred_check
    _
  $region11: #{document_model_forward.2} parent=0 // pred_check_branch
    %23 = sbr.rel (0) target = $region13
  $region12: #{document_model_forward.2} parent=0 // pred_region
    _
  $region13: #{document_model_forward.2} parent=0 // pred_fallthru
    _
  %s24 = ssub.s32 0, 0
  %s25 = smul.u32 8, %s24
  %p26 = scmp.lt.s32.totalorder %s25, 7
  %s27 = scalar_select %p26, %s25, 7
  %s28 = smul.addr %s27, 2
  %s29 = scalar_lea.vmem %s1, %s28
  %s30 = ssub.s32 0, 0
  %s31 = smul.u32 8, %s30
  %p32 = scmp.lt.s32.totalorder %s31, 7
  %s33 = scalar_select %p32, %s31, 7
  %s34 = smul.addr %s33, 2
  %s35 = scalar_lea.vmem %s4, %s34
  %s36 = ssub.s32 0, 0
  %s37 = smul.u32 8, %s36
  %p38 = scmp.lt.s32.totalorder %s37, 7
  %s39 = scalar_select %p38, %s37, 7
  %s40 = smul.addr %s39, 2
  %s41 = scalar_lea.vmem %s1, %s40
  %s42 = ssub.s32 0, 0
  %s43 = smul.u32 8, %s42
  %s44 = ssub.s32 0, 0
  %s45 = smul.u32 8, %s44
  %p46 = scmp.lt.s32.totalorder %s45, 7
  %s47 = scalar_select %p46, %s45, 7
  %s48 = smul.addr %s47, 2
  %s49 = scalar_lea.vmem %s4, %s48
  %s50 = ssub.s32 0, 0
  %s51 = smul.u32 8, %s50
  %p52 = scmp.eq.s32.totalorder 0, 0
  // Predicated region
  $region14: #{document_model_forward.2} parent=0 // pred_check
    %p53 = pneg %p52
  $region15: #{document_model_forward.2} parent=0 // pred_check_branch
    %55 = sbr.rel (%p53) target = $region17
  $region16: #{document_model_forward.2} parent=0 // pred_region
    %56 = vst [vmem:[#allocation2] sm:$0xf] 0.0
  $region17: #{document_model_forward.2} parent=0 // pred_fallthru
    _
  %v57 = vld [vmem:[#allocation2] sm:$0xf]
  %v58 = vld [vmem:[%s0] sm:$0x3]
  %s59 = scalar_lea.vmem %s41, 14
  %v60 = vld [vmem:[%s59] sm:$0x3]
  %v61 = vld [vmem:[%s2] sm:$0xff]
  %v62 = vld [vmem:[%s2 + $0x8] sm:$0xff]
  %v63 = vld [vmem:[%s2 + $0x10] sm:$0xff]
  %v64 = vld [vmem:[%s2 + $0x18] sm:$0xff]
  %v65 = vld [vmem:[%s2 + $0x20] sm:$0xff]
  %v66 = vld [vmem:[%s2 + $0x28] sm:$0xff]
  %v67 = vld [vmem:[%s2 + $0x30] sm:$0xff]
  %v68 = vld [vmem:[%s2 + $0x38] sm:$0xff]
  %v69 = vld [vmem:[%s2 + $0x40] sm:$0xff]
  %v70 = vld [vmem:[%s2 + $0x48] sm:$0xff]
  %v71 = vld [vmem:[%s2 + $0x50] sm:$0xff]
  %v72 = vld [vmem:[%s2 + $0x58] sm:$0xff]
  %v73 = vld [vmem:[%s2 + $0x60] sm:$0xff]
  %v74 = vld [vmem:[%s2 + $0x68] sm:$0xff]
  %v75 = vld [vmem:[%s2 + $0x70] sm:$0xff]
  %v76 = vld [vmem:[%s2 + $0x78] sm:$0xff]
  %v77 = vld [vmem:[%s2 + $0x80] sm:$0xff]
  %v78 = vld [vmem:[%s2 + $0x88] sm:$0xff]
  %v79 = vld [vmem:[%s2 + $0x90] sm:$0xff]
  %v80 = vld [vmem:[%s2 + $0x98] sm:$0xff]
  %v81 = vld [vmem:[%s2 + $0xa0] sm:$0xff]
  %v82 = vld [vmem:[%s2 + $0xa8] sm:$0xff]
  %v83 = vld [vmem:[%s2 + $0xb0] sm:$0xff]
  %v84 = vld [vmem:[%s2 + $0xb8] sm:$0xff]
  %v85 = vld [vmem:[%s2 + $0xc0] sm:$0xff]
  %v86 = vld [vmem:[%s2 + $0xc8] sm:$0xff]
  %v87 = vld [vmem:[%s2 + $0xd0] sm:$0xff]
  %v88 = vld [vmem:[%s2 + $0xd8] sm:$0xff]
  %v89 = vld [vmem:[%s2 + $0xe0] sm:$0xff]
  %v90 = vld [vmem:[%s2 + $0xe8] sm:$0xff]
  %v91 = vld [vmem:[%s2 + $0xf0] sm:$0xff]
  %v92 = vld [vmem:[%s2 + $0xf8] sm:$0xff]
  %v93 = vld [vmem:[%s2 + $0x100] sm:$0xff]
  %v94 = vld [vmem:[%s2 + $0x108] sm:$0xff]
  %v95 = vld [vmem:[%s2 + $0x110] sm:$0xff]
  %v96 = vld [vmem:[%s2 + $0x118] sm:$0xff]
  %v97 = vld [vmem:[%s2 + $0x120] sm:$0xff]
  %v98 = vld [vmem:[%s2 + $0x128] sm:$0xff]
  %v99 = vld [vmem:[%s2 + $0x130] sm:$0xff]
  %v100 = vld [vmem:[%s2 + $0x138] sm:$0xff]
  %v101 = vld [vmem:[%s2 + $0x140] sm:$0xff]
  %v102 = vld [vmem:[%s2 + $0x148] sm:$0xff]
  %v103 = vld [vmem:[%s2 + $0x150] sm:$0xff]
  %v104 = vld [vmem:[%s2 + $0x158] sm:$0xff]
  %v105 = vld [vmem:[%s2 + $0x160] sm:$0xff]
  %v106 = vld [vmem:[%s2 + $0x168] sm:$0xff]
  %v107 = vld [vmem:[%s2 + $0x170] sm:$0xff]
  %v108 = vld [vmem:[%s2 + $0x178] sm:$0xff]
  %v109 = vld [vmem:[%s2 + $0x180] sm:$0xff]
  %v110 = vld [vmem:[%s2 + $0x188] sm:$0xff]
  %v111 = vld [vmem:[%s2 + $0x190] sm:$0xff]
  %v112 = vld [vmem:[%s2 + $0x198] sm:$0xff]
  %v113 = vld [vmem:[%s2 + $0x1a0] sm:$0xff]
  %v114 = vld [vmem:[%s2 + $0x1a8] sm:$0xff]
  %v115 = vld [vmem:[%s2 + $0x1b0] sm:$0xff]
  %v116 = vld [vmem:[%s2 + $0x1b8] sm:$0xff]
  %v117 = vld [vmem:[%s2 + $0x1c0] sm:$0xff]
  %v118 = vld [vmem:[%s2 + $0x1c8] sm:$0xff]
  %v119 = vld [vmem:[%s2 + $0x1d0] sm:$0xff]
  %v120 = vld [vmem:[%s2 + $0x1d8] sm:$0xff]
  %v121 = vld [vmem:[%s2 + $0x1e0] sm:$0xff]
  %v122 = vld [vmem:[%s2 + $0x1e8] sm:$0xff]
  %v123 = vld [vmem:[%s2 + $0x1f0] sm:$0xff]
  %v124 = vld [vmem:[%s2 + $0x1f8] sm:$0xff]
  %v127 = vunpack.c.l.s4 1983009808
  %v128 = vunpack.c.0.s8 %v127
  %v129 = vlaneseq
  %v130 = vshrl.u32 %v129, 7
  %v131 = vsub.s32 %v128, %v130
  %v132 = vrot.slane %v57, %v131
  %v133 = vcombine.high %v132, %v132
  %136 = vmatprep.subr.mxu0 %v92
  %137 = vmatpush1.msra.mxu0 %v91
  %138 = vmatprep.subr.mxu0 %v90
  %139 = vmatpush1.msra.mxu0 %v89
  %140 = vmatprep.subr.mxu0 %v88
  %141 = vmatpush1.msra.mxu0 %v87
  %142 = vmatprep.subr.mxu0 %v86
  %143 = vmatpush1.msra.mxu0 %v85
  %144 = vmatprep.subr.mxu0 %v84
  %145 = vmatpush1.msra.mxu0 %v83
  %146 = vmatprep.subr.mxu0 %v82
  %147 = vmatpush1.msra.mxu0 %v81
  %148 = vmatprep.subr.mxu0 %v80
  %149 = vmatpush1.msra.mxu0 %v79
  %150 = vmatprep.subr.mxu0 %v78
  %151 = vmatpush1.msra.mxu0 %v77
  %152 = vmatprep.subr.mxu0 %v76
  %153 = vmatpush1.msra.mxu0 %v75
  %154 = vmatprep.subr.mxu0 %v74
  %155 = vmatpush1.msra.mxu0 %v73
  %156 = vmatprep.subr.mxu0 %v72
  %157 = vmatpush1.msra.mxu0 %v71
  %158 = vmatprep.subr.mxu0 %v70
  %159 = vmatpush1.msra.mxu0 %v69
  %160 = vmatprep.subr.mxu0 %v68
  %161 = vmatpush1.msra.mxu0 %v67
  %162 = vmatprep.subr.mxu0 %v66
  %163 = vmatpush1.msra.mxu0 %v65
  %164 = vmatprep.subr.mxu0 %v64
  %165 = vmatpush1.msra.mxu0 %v63
  %166 = vmatprep.subr.mxu0 %v62
  %167 = vmatpush1.msra.mxu0 %v61
  %168 = vmatprep.subr.mxu0 %v124
  %169 = vmatpush2.msra.mxu0 %v123
  %170 = vmatprep.subr.mxu0 %v122
  %171 = vmatpush2.msra.mxu0 %v121
  %172 = vmatprep.subr.mxu0 %v120
  %173 = vmatpush2.msra.mxu0 %v119
  %174 = vmatprep.subr.mxu0 %v118
  %175 = vmatpush2.msra.mxu0 %v117
  %176 = vmatprep.subr.mxu0 %v116
  %177 = vmatpush2.msra.mxu0 %v115
  %178 = vmatprep.subr.mxu0 %v114
  %179 = vmatpush2.msra.mxu0 %v113
  %180 = vmatprep.subr.mxu0 %v112
  %181 = vmatpush2.msra.mxu0 %v111
  %182 = vmatprep.subr.mxu0 %v110
  %183 = vmatpush2.msra.mxu0 %v109
  %184 = vmatprep.subr.mxu0 %v108
  %185 = vmatpush2.msra.mxu0 %v107
  %186 = vmatprep.subr.mxu0 %v106
  %187 = vmatpush2.msra.mxu0 %v105
  %188 = vmatprep.subr.mxu0 %v104
  %189 = vmatpush2.msra.mxu0 %v103
  %190 = vmatprep.subr.mxu0 %v102
  %191 = vmatpush2.msra.mxu0 %v101
  %192 = vmatprep.subr.mxu0 %v100
  %193 = vmatpush2.msra.mxu0 %v99
  %194 = vmatprep.subr.mxu0 %v98
  %195 = vmatpush2.msra.mxu0 %v97
  %196 = vmatprep.subr.mxu0 %v96
  %197 = vmatpush2.msra.mxu0 %v95
  %198 = vmatprep.subr.mxu0 %v94
  %199 = vmatpush2.msra.mxu0 %v93
  %200 = vmatprep.mubr.f32.mxu0 %v133
  %201 = vmatmul.mubr.f32.gmra.mxu0 %v132
  %v202 = vpop.f32.mrf.mxu0
  %v203 = vadd.f32 0.0, %v202
  %v204 = vpop.f32.mrf.mxu0
  %v205 = vadd.f32 0.0, %v204
  %206 = vdwg.mxu0
  %v207 = vadd.f32 %v58, %v203
  %v208 = vadd.f32 %v60, %v205
  %v209 = vtanh.pop %v207
  %v210 = vtanh.pop %v208
  %211 = vst [vmem:[%s3] sm:$0x3] %v209
  %s212 = scalar_lea.vmem %s49, 14
  %213 = vst [vmem:[%s212] sm:$0x3] %v210
  %s214 = scalar_lea.vmem %s0, 2
  %v215 = vld [vmem:[%s214] sm:$0x3]
  %s216 = scalar_lea.vmem %s41, 12
  %v217 = vld [vmem:[%s216] sm:$0x3]
  %v218 = vld [vmem:[%s2] sm:$0xff]
  %v219 = vld [vmem:[%s2 + $0x8] sm:$0xff]
  %v220 = vld [vmem:[%s2 + $0x10] sm:$0xff]
  %v221 = vld [vmem:[%s2 + $0x18] sm:$0xff]
  %v222 = vld [vmem:[%s2 + $0x20] sm:$0xff]
  %v223 = vld [vmem:[%s2 + $0x28] sm:$0xff]
  %v224 = vld [vmem:[%s2 + $0x30] sm:$0xff]
  %v225 = vld [vmem:[%s2 + $0x38] sm:$0xff]
  %v226 = vld [vmem:[%s2 + $0x40] sm:$0xff]
  %v227 = vld [vmem:[%s2 + $0x48] sm:$0xff]
  %v228 = vld [vmem:[%s2 + $0x50] sm:$0xff]
  %v229 = vld [vmem:[%s2 + $0x58] sm:$0xff]
  %v230 = vld [vmem:[%s2 + $0x60] sm:$0xff]
  %v231 = vld [vmem:[%s2 + $0x68] sm:$0xff]
  %v232 = vld [vmem:[%s2 + $0x70] sm:$0xff]
  %v233 = vld [vmem:[%s2 + $0x78] sm:$0xff]
  %v234 = vld [vmem:[%s2 + $0x80] sm:$0xff]
  %v235 = vld [vmem:[%s2 + $0x88] sm:$0xff]
  %v236 = vld [vmem:[%s2 + $0x90] sm:$0xff]
  %v237 = vld [vmem:[%s2 + $0x98] sm:$0xff]
  %v238 = vld [vmem:[%s2 + $0xa0] sm:$0xff]
  %v239 = vld [vmem:[%s2 + $0xa8] sm:$0xff]
  %v240 = vld [vmem:[%s2 + $0xb0] sm:$0xff]
  %v241 = vld [vmem:[%s2 + $0xb8] sm:$0xff]
  %v242 = vld [vmem:[%s2 + $0xc0] sm:$0xff]
  %v243 = vld [vmem:[%s2 + $0xc8] sm:$0xff]
  %v244 = vld [vmem:[%s2 + $0xd0] sm:$0xff]
  %v245 = vld [vmem:[%s2 + $0xd8] sm:$0xff]
  %v246 = vld [vmem:[%s2 + $0xe0] sm:$0xff]
  %v247 = vld [vmem:[%s2 + $0xe8] sm:$0xff]
  %v248 = vld [vmem:[%s2 + $0xf0] sm:$0xff]
  %v249 = vld [vmem:[%s2 + $0xf8] sm:$0xff]
  %v250 = vld [vmem:[%s2 + $0x100] sm:$0xff]
  %v251 = vld [vmem:[%s2 + $0x108] sm:$0xff]
  %v252 = vld [vmem:[%s2 + $0x110] sm:$0xff]
  %v253 = vld [vmem:[%s2 + $0x118] sm:$0xff]
  %v254 = vld [vmem:[%s2 + $0x120] sm:$0xff]
  %v255 = vld [vmem:[%s2 + $0x128] sm:$0xff]
  %v256 = vld [vmem:[%s2 + $0x130] sm:$0xff]
  %v257 = vld [vmem:[%s2 + $0x138] sm:$0xff]
  %v258 = vld [vmem:[%s2 + $0x140] sm:$0xff]
  %v259 = vld [vmem:[%s2 + $0x148] sm:$0xff]
  %v260 = vld [vmem:[%s2 + $0x150] sm:$0xff]
  %v261 = vld [vmem:[%s2 + $0x158] sm:$0xff]
  %v262 = vld [vmem:[%s2 + $0x160] sm:$0xff]
  %v263 = vld [vmem:[%s2 + $0x168] sm:$0xff]
  %v264 = vld [vmem:[%s2 + $0x170] sm:$0xff]
  %v265 = vld [vmem:[%s2 + $0x178] sm:$0xff]
  %v266 = vld [vmem:[%s2 + $0x180] sm:$0xff]
  %v267 = vld [vmem:[%s2 + $0x188] sm:$0xff]
  %v268 = vld [vmem:[%s2 + $0x190] sm:$0xff]
  %v269 = vld [vmem:[%s2 + $0x198] sm:$0xff]
  %v270 = vld [vmem:[%s2 + $0x1a0] sm:$0xff]
  %v271 = vld [vmem:[%s2 + $0x1a8] sm:$0xff]
  %v272 = vld [vmem:[%s2 + $0x1b0] sm:$0xff]
  %v273 = vld [vmem:[%s2 + $0x1b8] sm:$0xff]
  %v274 = vld [vmem:[%s2 + $0x1c0] sm:$0xff]
  %v275 = vld [vmem:[%s2 + $0x1c8] sm:$0xff]
  %v276 = vld [vmem:[%s2 + $0x1d0] sm:$0xff]
  %v277 = vld [vmem:[%s2 + $0x1d8] sm:$0xff]
  %v278 = vld [vmem:[%s2 + $0x1e0] sm:$0xff]
  %v279 = vld [vmem:[%s2 + $0x1e8] sm:$0xff]
  %v280 = vld [vmem:[%s2 + $0x1f0] sm:$0xff]
  %v281 = vld [vmem:[%s2 + $0x1f8] sm:$0xff]
  %282 = vmatprep.subr.mxu0 %v249
  %283 = vmatpush1.msra.mxu0 %v248
  %284 = vmatprep.subr.mxu0 %v247
  %285 = vmatpush1.msra.mxu0 %v246
  %286 = vmatprep.subr.mxu0 %v245
  %287 = vmatpush1.msra.mxu0 %v244
  %288 = vmatprep.subr.mxu0 %v243
  %289 = vmatpush1.msra.mxu0 %v242
  %290 = vmatprep.subr.mxu0 %v241
  %291 = vmatpush1.msra.mxu0 %v240
  %292 = vmatprep.subr.mxu0 %v239
  %293 = vmatpush1.msra.mxu0 %v238
  %294 = vmatprep.subr.mxu0 %v237
  %295 = vmatpush1.msra.mxu0 %v236
  %296 = vmatprep.subr.mxu0 %v235
  %297 = vmatpush1.msra.mxu0 %v234
  %298 = vmatprep.subr.mxu0 %v233
  %299 = vmatpush1.msra.mxu0 %v232
  %300 = vmatprep.subr.mxu0 %v231
  %301 = vmatpush1.msra.mxu0 %v230
  %302 = vmatprep.subr.mxu0 %v229
  %303 = vmatpush1.msra.mxu0 %v228
  %304 = vmatprep.subr.mxu0 %v227
  %305 = vmatpush1.msra.mxu0 %v226
  %306 = vmatprep.subr.mxu0 %v225
  %307 = vmatpush1.msra.mxu0 %v224
  %308 = vmatprep.subr.mxu0 %v223
  %309 = vmatpush1.msra.mxu0 %v222
  %310 = vmatprep.subr.mxu0 %v221
  %311 = vmatpush1.msra.mxu0 %v220
  %312 = vmatprep.subr.mxu0 %v219
  %313 = vmatpush1.msra.mxu0 %v218
  %314 = vmatprep.subr.mxu0 %v281
  %315 = vmatpush2.msra.mxu0 %v280
  %316 = vmatprep.subr.mxu0 %v279
  %317 = vmatpush2.msra.mxu0 %v278
  %318 = vmatprep.subr.mxu0 %v277
  %319 = vmatpush2.msra.mxu0 %v276
  %320 = vmatprep.subr.mxu0 %v275
  %321 = vmatpush2.msra.mxu0 %v274
  %322 = vmatprep.subr.mxu0 %v273
  %323 = vmatpush2.msra.mxu0 %v272
  %324 = vmatprep.subr.mxu0 %v271
  %325 = vmatpush2.msra.mxu0 %v270
  %326 = vmatprep.subr.mxu0 %v269
  %327 = vmatpush2.msra.mxu0 %v268
  %328 = vmatprep.subr.mxu0 %v267
  %329 = vmatpush2.msra.mxu0 %v266
  %330 = vmatprep.subr.mxu0 %v265
  %331 = vmatpush2.msra.mxu0 %v264
  %332 = vmatprep.subr.mxu0 %v263
  %333 = vmatpush2.msra.mxu0 %v262
  %334 = vmatprep.subr.mxu0 %v261
  %335 = vmatpush2.msra.mxu0 %v260
  %336 = vmatprep.subr.mxu0 %v259
  %337 = vmatpush2.msra.mxu0 %v258
  %338 = vmatprep.subr.mxu0 %v257
  %339 = vmatpush2.msra.mxu0 %v256
  %340 = vmatprep.subr.mxu0 %v255
  %341 = vmatpush2.msra.mxu0 %v254
  %342 = vmatprep.subr.mxu0 %v253
  %343 = vmatpush2.msra.mxu0 %v252
  %344 = vmatprep.subr.mxu0 %v251
  %345 = vmatpush2.msra.mxu0 %v250
  %346 = vmatprep.mubr.f32.mxu0 %v210
  %347 = vmatmul.mubr.f32.gmra.mxu0 %v209
  %v348 = vpop.f32.mrf.mxu0
  %v349 = vadd.f32 0.0, %v348
  %v350 = vpop.f32.mrf.mxu0
  %v351 = vadd.f32 0.0, %v350
  %352 = vdwg.mxu0
  %v353 = vadd.f32 %v215, %v349
  %v354 = vadd.f32 %v217, %v351
  %v355 = vtanh.pop %v353
  %v356 = vtanh.pop %v354
  %s357 = scalar_lea.vmem %s3, 2
  %358 = vst [vmem:[%s357] sm:$0x3] %v355
  %s359 = scalar_lea.vmem %s49, 12
  %360 = vst [vmem:[%s359] sm:$0x3] %v356
  %s361 = scalar_lea.vmem %s0, 4
  %v362 = vld [vmem:[%s361] sm:$0x3]
  %s363 = scalar_lea.vmem %s41, 10
  %v364 = vld [vmem:[%s363] sm:$0x3]
  %v365 = vld [vmem:[%s2] sm:$0xff]
  %v366 = vld [vmem:[%s2 + $0x8] sm:$0xff]
  %v367 = vld [vmem:[%s2 + $0x10] sm:$0xff]
  %v368 = vld [vmem:[%s2 + $0x18] sm:$0xff]
  %v369 = vld [vmem:[%s2 + $0x20] sm:$0xff]
  %v370 = vld [vmem:[%s2 + $0x28] sm:$0xff]
  %v371 = vld [vmem:[%s2 + $0x30] sm:$0xff]
  %v372 = vld [vmem:[%s2 + $0x38] sm:$0xff]
  %v373 = vld [vmem:[%s2 + $0x40] sm:$0xff]
  %v374 = vld [vmem:[%s2 + $0x48] sm:$0xff]
  %v375 = vld [vmem:[%s2 + $0x50] sm:$0xff]
  %v376 = vld [vmem:[%s2 + $0x58] sm:$0xff]
  %v377 = vld [vmem:[%s2 + $0x60] sm:$0xff]
  %v378 = vld [vmem:[%s2 + $0x68] sm:$0xff]
  %v379 = vld [vmem:[%s2 + $0x70] sm:$0xff]
  %v380 = vld [vmem:[%s2 + $0x78] sm:$0xff]
  %v381 = vld [vmem:[%s2 + $0x80] sm:$0xff]
  %v382 = vld [vmem:[%s2 + $0x88] sm:$0xff]
  %v383 = vld [vmem:[%s2 + $0x90] sm:$0xff]
  %v384 = vld [vmem:[%s2 + $0x98] sm:$0xff]
  %v385 = vld [vmem:[%s2 + $0xa0] sm:$0xff]
  %v386 = vld [vmem:[%s2 + $0xa8] sm:$0xff]
  %v387 = vld [vmem:[%s2 + $0xb0] sm:$0xff]
  %v388 = vld [vmem:[%s2 + $0xb8] sm:$0xff]
  %v389 = vld [vmem:[%s2 + $0xc0] sm:$0xff]
  %v390 = vld [vmem:[%s2 + $0xc8] sm:$0xff]
  %v391 = vld [vmem:[%s2 + $0xd0] sm:$0xff]
  %v392 = vld [vmem:[%s2 + $0xd8] sm:$0xff]
  %v393 = vld [vmem:[%s2 + $0xe0] sm:$0xff]
  %v394 = vld [vmem:[%s2 + $0xe8] sm:$0xff]
  %v395 = vld [vmem:[%s2 + $0xf0] sm:$0xff]
  %v396 = vld [vmem:[%s2 + $0xf8] sm:$0xff]
  %v397 = vld [vmem:[%s2 + $0x100] sm:$0xff]
  %v398 = vld [vmem:[%s2 + $0x108] sm:$0xff]
  %v399 = vld [vmem:[%s2 + $0x110] sm:$0xff]
  %v400 = vld [vmem:[%s2 + $0x118] sm:$0xff]
  %v401 = vld [vmem:[%s2 + $0x120] sm:$0xff]
  %v402 = vld [vmem:[%s2 + $0x128] sm:$0xff]
  %v403 = vld [vmem:[%s2 + $0x130] sm:$0xff]
  %v404 = vld [vmem:[%s2 + $0x138] sm:$0xff]
  %v405 = vld [vmem:[%s2 + $0x140] sm:$0xff]
  %v406 = vld [vmem:[%s2 + $0x148] sm:$0xff]
  %v407 = vld [vmem:[%s2 + $0x150] sm:$0xff]
  %v408 = vld [vmem:[%s2 + $0x158] sm:$0xff]
  %v409 = vld [vmem:[%s2 + $0x160] sm:$0xff]
  %v410 = vld [vmem:[%s2 + $0x168] sm:$0xff]
  %v411 = vld [vmem:[%s2 + $0x170] sm:$0xff]
  %v412 = vld [vmem:[%s2 + $0x178] sm:$0xff]
  %v413 = vld [vmem:[%s2 + $0x180] sm:$0xff]
  %v414 = vld [vmem:[%s2 + $0x188] sm:$0xff]
  %v415 = vld [vmem:[%s2 + $0x190] sm:$0xff]
  %v416 = vld [vmem:[%s2 + $0x198] sm:$0xff]
  %v417 = vld [vmem:[%s2 + $0x1a0] sm:$0xff]
  %v418 = vld [vmem:[%s2 + $0x1a8] sm:$0xff]
  %v419 = vld [vmem:[%s2 + $0x1b0] sm:$0xff]
  %v420 = vld [vmem:[%s2 + $0x1b8] sm:$0xff]
  %v421 = vld [vmem:[%s2 + $0x1c0] sm:$0xff]
  %v422 = vld [vmem:[%s2 + $0x1c8] sm:$0xff]
  %v423 = vld [vmem:[%s2 + $0x1d0] sm:$0xff]
  %v424 = vld [vmem:[%s2 + $0x1d8] sm:$0xff]
  %v425 = vld [vmem:[%s2 + $0x1e0] sm:$0xff]
  %v426 = vld [vmem:[%s2 + $0x1e8] sm:$0xff]
  %v427 = vld [vmem:[%s2 + $0x1f0] sm:$0xff]
  %v428 = vld [vmem:[%s2 + $0x1f8] sm:$0xff]
  %429 = vmatprep.subr.mxu0 %v396
  %430 = vmatpush1.msra.mxu0 %v395
  %431 = vmatprep.subr.mxu0 %v394
  %432 = vmatpush1.msra.mxu0 %v393
  %433 = vmatprep.subr.mxu0 %v392
  %434 = vmatpush1.msra.mxu0 %v391
  %435 = vmatprep.subr.mxu0 %v390
  %436 = vmatpush1.msra.mxu0 %v389
  %437 = vmatprep.subr.mxu0 %v388
  %438 = vmatpush1.msra.mxu0 %v387
  %439 = vmatprep.subr.mxu0 %v386
  %440 = vmatpush1.msra.mxu0 %v385
  %441 = vmatprep.subr.mxu0 %v384
  %442 = vmatpush1.msra.mxu0 %v383
  %443 = vmatprep.subr.mxu0 %v382
  %444 = vmatpush1.msra.mxu0 %v381
  %445 = vmatprep.subr.mxu0 %v380
  %446 = vmatpush1.msra.mxu0 %v379
  %447 = vmatprep.subr.mxu0 %v378
  %448 = vmatpush1.msra.mxu0 %v377
  %449 = vmatprep.subr.mxu0 %v376
  %450 = vmatpush1.msra.mxu0 %v375
  %451 = vmatprep.subr.mxu0 %v374
  %452 = vmatpush1.msra.mxu0 %v373
  %453 = vmatprep.subr.mxu0 %v372
  %454 = vmatpush1.msra.mxu0 %v371
  %455 = vmatprep.subr.mxu0 %v370
  %456 = vmatpush1.msra.mxu0 %v369
  %457 = vmatprep.subr.mxu0 %v368
  %458 = vmatpush1.msra.mxu0 %v367
  %459 = vmatprep.subr.mxu0 %v366
  %460 = vmatpush1.msra.mxu0 %v365
  %461 = vmatprep.subr.mxu0 %v428
  %462 = vmatpush2.msra.mxu0 %v427
  %463 = vmatprep.subr.mxu0 %v426
  %464 = vmatpush2.msra.mxu0 %v425
  %465 = vmatprep.subr.mxu0 %v424
  %466 = vmatpush2.msra.mxu0 %v423
  %467 = vmatprep.subr.mxu0 %v422
  %468 = vmatpush2.msra.mxu0 %v421
  %469 = vmatprep.subr.mxu0 %v420
  %470 = vmatpush2.msra.mxu0 %v419
  %471 = vmatprep.subr.mxu0 %v418
  %472 = vmatpush2.msra.mxu0 %v417
  %473 = vmatprep.subr.mxu0 %v416
  %474 = vmatpush2.msra.mxu0 %v415
  %475 = vmatprep.subr.mxu0 %v414
  %476 = vmatpush2.msra.mxu0 %v413
  %477 = vmatprep.subr.mxu0 %v412
  %478 = vmatpush2.msra.mxu0 %v411
  %479 = vmatprep.subr.mxu0 %v410
  %480 = vmatpush2.msra.mxu0 %v409
  %481 = vmatprep.subr.mxu0 %v408
  %482 = vmatpush2.msra.mxu0 %v407
  %483 = vmatprep.subr.mxu0 %v406
  %484 = vmatpush2.msra.mxu0 %v405
  %485 = vmatprep.subr.mxu0 %v404
  %486 = vmatpush2.msra.mxu0 %v403
  %487 = vmatprep.subr.mxu0 %v402
  %488 = vmatpush2.msra.mxu0 %v401
  %489 = vmatprep.subr.mxu0 %v400
  %490 = vmatpush2.msra.mxu0 %v399
  %491 = vmatprep.subr.mxu0 %v398
  %492 = vmatpush2.msra.mxu0 %v397
  %493 = vmatprep.mubr.f32.mxu0 %v356
  %494 = vmatmul.mubr.f32.gmra.mxu0 %v355
  %v495 = vpop.f32.mrf.mxu0
  %v496 = vadd.f32 0.0, %v495
  %v497 = vpop.f32.mrf.mxu0
  %v498 = vadd.f32 0.0, %v497
  %499 = vdwg.mxu0
  %v500 = vadd.f32 %v362, %v496
  %v501 = vadd.f32 %v364, %v498
  %v502 = vtanh.pop %v500
  %v503 = vtanh.pop %v501
  %s504 = scalar_lea.vmem %s3, 4
  %505 = vst [vmem:[%s504] sm:$0x3] %v502
  %s506 = scalar_lea.vmem %s49, 10
  %507 = vst [vmem:[%s506] sm:$0x3] %v503
  %s508 = scalar_lea.vmem %s0, 6
  %v509 = vld [vmem:[%s508] sm:$0x3]
  %s510 = scalar_lea.vmem %s41, 8
  %v511 = vld [vmem:[%s510] sm:$0x3]
  %v512 = vld [vmem:[%s2] sm:$0xff]
  %v513 = vld [vmem:[%s2 + $0x8] sm:$0xff]
  %v514 = vld [vmem:[%s2 + $0x10] sm:$0xff]
  %v515 = vld [vmem:[%s2 + $0x18] sm:$0xff]
  %v516 = vld [vmem:[%s2 + $0x20] sm:$0xff]
  %v517 = vld [vmem:[%s2 + $0x28] sm:$0xff]
  %v518 = vld [vmem:[%s2 + $0x30] sm:$0xff]
  %v519 = vld [vmem:[%s2 + $0x38] sm:$0xff]
  %v520 = vld [vmem:[%s2 + $0x40] sm:$0xff]
  %v521 = vld [vmem:[%s2 + $0x48] sm:$0xff]
  %v522 = vld [vmem:[%s2 + $0x50] sm:$0xff]
  %v523 = vld [vmem:[%s2 + $0x58] sm:$0xff]
  %v524 = vld [vmem:[%s2 + $0x60] sm:$0xff]
  %v525 = vld [vmem:[%s2 + $0x68] sm:$0xff]
  %v526 = vld [vmem:[%s2 + $0x70] sm:$0xff]
  %v527 = vld [vmem:[%s2 + $0x78] sm:$0xff]
  %v528 = vld [vmem:[%s2 + $0x80] sm:$0xff]
  %v529 = vld [vmem:[%s2 + $0x88] sm:$0xff]
  %v530 = vld [vmem:[%s2 + $0x90] sm:$0xff]
  %v531 = vld [vmem:[%s2 + $0x98] sm:$0xff]
  %v532 = vld [vmem:[%s2 + $0xa0] sm:$0xff]
  %v533 = vld [vmem:[%s2 + $0xa8] sm:$0xff]
  %v534 = vld [vmem:[%s2 + $0xb0] sm:$0xff]
  %v535 = vld [vmem:[%s2 + $0xb8] sm:$0xff]
  %v536 = vld [vmem:[%s2 + $0xc0] sm:$0xff]
  %v537 = vld [vmem:[%s2 + $0xc8] sm:$0xff]
  %v538 = vld [vmem:[%s2 + $0xd0] sm:$0xff]
  %v539 = vld [vmem:[%s2 + $0xd8] sm:$0xff]
  %v540 = vld [vmem:[%s2 + $0xe0] sm:$0xff]
  %v541 = vld [vmem:[%s2 + $0xe8] sm:$0xff]
  %v542 = vld [vmem:[%s2 + $0xf0] sm:$0xff]
  %v543 = vld [vmem:[%s2 + $0xf8] sm:$0xff]
  %v544 = vld [vmem:[%s2 + $0x100] sm:$0xff]
  %v545 = vld [vmem:[%s2 + $0x108] sm:$0xff]
  %v546 = vld [vmem:[%s2 + $0x110] sm:$0xff]
  %v547 = vld [vmem:[%s2 + $0x118] sm:$0xff]
  %v548 = vld [vmem:[%s2 + $0x120] sm:$0xff]
  %v549 = vld [vmem:[%s2 + $0x128] sm:$0xff]
  %v550 = vld [vmem:[%s2 + $0x130] sm:$0xff]
  %v551 = vld [vmem:[%s2 + $0x138] sm:$0xff]
  %v552 = vld [vmem:[%s2 + $0x140] sm:$0xff]
  %v553 = vld [vmem:[%s2 + $0x148] sm:$0xff]
  %v554 = vld [vmem:[%s2 + $0x150] sm:$0xff]
  %v555 = vld [vmem:[%s2 + $0x158] sm:$0xff]
  %v556 = vld [vmem:[%s2 + $0x160] sm:$0xff]
  %v557 = vld [vmem:[%s2 + $0x168] sm:$0xff]
  %v558 = vld [vmem:[%s2 + $0x170] sm:$0xff]
  %v559 = vld [vmem:[%s2 + $0x178] sm:$0xff]
  %v560 = vld [vmem:[%s2 + $0x180] sm:$0xff]
  %v561 = vld [vmem:[%s2 + $0x188] sm:$0xff]
  %v562 = vld [vmem:[%s2 + $0x190] sm:$0xff]
  %v563 = vld [vmem:[%s2 + $0x198] sm:$0xff]
  %v564 = vld [vmem:[%s2 + $0x1a0] sm:$0xff]
  %v565 = vld [vmem:[%s2 + $0x1a8] sm:$0xff]
  %v566 = vld [vmem:[%s2 + $0x1b0] sm:$0xff]
  %v567 = vld [vmem:[%s2 + $0x1b8] sm:$0xff]
  %v568 = vld [vmem:[%s2 + $0x1c0] sm:$0xff]
  %v569 = vld [vmem:[%s2 + $0x1c8] sm:$0xff]
  %v570 = vld [vmem:[%s2 + $0x1d0] sm:$0xff]
  %v571 = vld [vmem:[%s2 + $0x1d8] sm:$0xff]
  %v572 = vld [vmem:[%s2 + $0x1e0] sm:$0xff]
  %v573 = vld [vmem:[%s2 + $0x1e8] sm:$0xff]
  %v574 = vld [vmem:[%s2 + $0x1f0] sm:$0xff]
  %v575 = vld [vmem:[%s2 + $0x1f8] sm:$0xff]
  %576 = vmatprep.subr.mxu0 %v543
  %577 = vmatpush1.msra.mxu0 %v542
  %578 = vmatprep.subr.mxu0 %v541
  %579 = vmatpush1.msra.mxu0 %v540
  %580 = vmatprep.subr.mxu0 %v539
  %581 = vmatpush1.msra.mxu0 %v538
  %582 = vmatprep.subr.mxu0 %v537
  %583 = vmatpush1.msra.mxu0 %v536
  %584 = vmatprep.subr.mxu0 %v535
  %585 = vmatpush1.msra.mxu0 %v534
  %586 = vmatprep.subr.mxu0 %v533
  %587 = vmatpush1.msra.mxu0 %v532
  %588 = vmatprep.subr.mxu0 %v531
  %589 = vmatpush1.msra.mxu0 %v530
  %590 = vmatprep.subr.mxu0 %v529
  %591 = vmatpush1.msra.mxu0 %v528
  %592 = vmatprep.subr.mxu0 %v527
  %593 = vmatpush1.msra.mxu0 %v526
  %594 = vmatprep.subr.mxu0 %v525
  %595 = vmatpush1.msra.mxu0 %v524
  %596 = vmatprep.subr.mxu0 %v523
  %597 = vmatpush1.msra.mxu0 %v522
  %598 = vmatprep.subr.mxu0 %v521
  %599 = vmatpush1.msra.mxu0 %v520
  %600 = vmatprep.subr.mxu0 %v519
  %601 = vmatpush1.msra.mxu0 %v518
  %602 = vmatprep.subr.mxu0 %v517
  %603 = vmatpush1.msra.mxu0 %v516
  %604 = vmatprep.subr.mxu0 %v515
  %605 = vmatpush1.msra.mxu0 %v514
  %606 = vmatprep.subr.mxu0 %v513
  %607 = vmatpush1.msra.mxu0 %v512
  %608 = vmatprep.subr.mxu0 %v575
  %609 = vmatpush2.msra.mxu0 %v574
  %610 = vmatprep.subr.mxu0 %v573
  %611 = vmatpush2.msra.mxu0 %v572
  %612 = vmatprep.subr.mxu0 %v571
  %613 = vmatpush2.msra.mxu0 %v570
  %614 = vmatprep.subr.mxu0 %v569
  %615 = vmatpush2.msra.mxu0 %v568
  %616 = vmatprep.subr.mxu0 %v567
  %617 = vmatpush2.msra.mxu0 %v566
  %618 = vmatprep.subr.mxu0 %v565
  %619 = vmatpush2.msra.mxu0 %v564
  %620 = vmatprep.subr.mxu0 %v563
  %621 = vmatpush2.msra.mxu0 %v562
  %622 = vmatprep.subr.mxu0 %v561
  %623 = vmatpush2.msra.mxu0 %v560
  %624 = vmatprep.subr.mxu0 %v559
  %625 = vmatpush2.msra.mxu0 %v558
  %626 = vmatprep.subr.mxu0 %v557
  %627 = vmatpush2.msra.mxu0 %v556
  %628 = vmatprep.subr.mxu0 %v555
  %629 = vmatpush2.msra.mxu0 %v554
  %630 = vmatprep.subr.mxu0 %v553
  %631 = vmatpush2.msra.mxu0 %v552
  %632 = vmatprep.subr.mxu0 %v551
  %633 = vmatpush2.msra.mxu0 %v550
  %634 = vmatprep.subr.mxu0 %v549
  %635 = vmatpush2.msra.mxu0 %v548
  %636 = vmatprep.subr.mxu0 %v547
  %637 = vmatpush2.msra.mxu0 %v546
  %638 = vmatprep.subr.mxu0 %v545
  %639 = vmatpush2.msra.mxu0 %v544
  %640 = vmatprep.mubr.f32.mxu0 %v503
  %641 = vmatmul.mubr.f32.gmra.mxu0 %v502
  %v642 = vpop.f32.mrf.mxu0
  %v643 = vadd.f32 0.0, %v642
  %v644 = vpop.f32.mrf.mxu0
  %v645 = vadd.f32 0.0, %v644
  %646 = vdwg.mxu0
  %v647 = vadd.f32 %v509, %v643
  %v648 = vadd.f32 %v511, %v645
  %v649 = vtanh.pop %v647
  %v650 = vtanh.pop %v648
  %s651 = scalar_lea.vmem %s3, 6
  %652 = vst [vmem:[%s651] sm:$0x3] %v649
  %s653 = scalar_lea.vmem %s49, 8
  %654 = vst [vmem:[%s653] sm:$0x3] %v650
  %s655 = scalar_lea.vmem %s0, 8
  %v656 = vld [vmem:[%s655] sm:$0x3]
  %s657 = scalar_lea.vmem %s41, 6
  %v658 = vld [vmem:[%s657] sm:$0x3]
  %v659 = vld [vmem:[%s2] sm:$0xff]
  %v660 = vld [vmem:[%s2 + $0x8] sm:$0xff]
  %v661 = vld [vmem:[%s2 + $0x10] sm:$0xff]
  %v662 = vld [vmem:[%s2 + $0x18] sm:$0xff]
  %v663 = vld [vmem:[%s2 + $0x20] sm:$0xff]
  %v664 = vld [vmem:[%s2 + $0x28] sm:$0xff]
  %v665 = vld [vmem:[%s2 + $0x30] sm:$0xff]
  %v666 = vld [vmem:[%s2 + $0x38] sm:$0xff]
  %v667 = vld [vmem:[%s2 + $0x40] sm:$0xff]
  %v668 = vld [vmem:[%s2 + $0x48] sm:$0xff]
  %v669 = vld [vmem:[%s2 + $0x50] sm:$0xff]
  %v670 = vld [vmem:[%s2 + $0x58] sm:$0xff]
  %v671 = vld [vmem:[%s2 + $0x60] sm:$0xff]
  %v672 = vld [vmem:[%s2 + $0x68] sm:$0xff]
  %v673 = vld [vmem:[%s2 + $0x70] sm:$0xff]
  %v674 = vld [vmem:[%s2 + $0x78] sm:$0xff]
  %v675 = vld [vmem:[%s2 + $0x80] sm:$0xff]
  %v676 = vld [vmem:[%s2 + $0x88] sm:$0xff]
  %v677 = vld [vmem:[%s2 + $0x90] sm:$0xff]
  %v678 = vld [vmem:[%s2 + $0x98] sm:$0xff]
  %v679 = vld [vmem:[%s2 + $0xa0] sm:$0xff]
  %v680 = vld [vmem:[%s2 + $0xa8] sm:$0xff]
  %v681 = vld [vmem:[%s2 + $0xb0] sm:$0xff]
  %v682 = vld [vmem:[%s2 + $0xb8] sm:$0xff]
  %v683 = vld [vmem:[%s2 + $0xc0] sm:$0xff]
  %v684 = vld [vmem:[%s2 + $0xc8] sm:$0xff]
  %v685 = vld [vmem:[%s2 + $0xd0] sm:$0xff]
  %v686 = vld [vmem:[%s2 + $0xd8] sm:$0xff]
  %v687 = vld [vmem:[%s2 + $0xe0] sm:$0xff]
  %v688 = vld [vmem:[%s2 + $0xe8] sm:$0xff]
  %v689 = vld [vmem:[%s2 + $0xf0] sm:$0xff]
  %v690 = vld [vmem:[%s2 + $0xf8] sm:$0xff]
  %v691 = vld [vmem:[%s2 + $0x100] sm:$0xff]
  %v692 = vld [vmem:[%s2 + $0x108] sm:$0xff]
  %v693 = vld [vmem:[%s2 + $0x110] sm:$0xff]
  %v694 = vld [vmem:[%s2 + $0x118] sm:$0xff]
  %v695 = vld [vmem:[%s2 + $0x120] sm:$0xff]
  %v696 = vld [vmem:[%s2 + $0x128] sm:$0xff]
  %v697 = vld [vmem:[%s2 + $0x130] sm:$0xff]
  %v698 = vld [vmem:[%s2 + $0x138] sm:$0xff]
  %v699 = vld [vmem:[%s2 + $0x140] sm:$0xff]
  %v700 = vld [vmem:[%s2 + $0x148] sm:$0xff]
  %v701 = vld [vmem:[%s2 + $0x150] sm:$0xff]
  %v702 = vld [vmem:[%s2 + $0x158] sm:$0xff]
  %v703 = vld [vmem:[%s2 + $0x160] sm:$0xff]
  %v704 = vld [vmem:[%s2 + $0x168] sm:$0xff]
  %v705 = vld [vmem:[%s2 + $0x170] sm:$0xff]
  %v706 = vld [vmem:[%s2 + $0x178] sm:$0xff]
  %v707 = vld [vmem:[%s2 + $0x180] sm:$0xff]
  %v708 = vld [vmem:[%s2 + $0x188] sm:$0xff]
  %v709 = vld [vmem:[%s2 + $0x190] sm:$0xff]
  %v710 = vld [vmem:[%s2 + $0x198] sm:$0xff]
  %v711 = vld [vmem:[%s2 + $0x1a0] sm:$0xff]
  %v712 = vld [vmem:[%s2 + $0x1a8] sm:$0xff]
  %v713 = vld [vmem:[%s2 + $0x1b0] sm:$0xff]
  %v714 = vld [vmem:[%s2 + $0x1b8] sm:$0xff]
  %v715 = vld [vmem:[%s2 + $0x1c0] sm:$0xff]
  %v716 = vld [vmem:[%s2 + $0x1c8] sm:$0xff]
  %v717 = vld [vmem:[%s2 + $0x1d0] sm:$0xff]
  %v718 = vld [vmem:[%s2 + $0x1d8] sm:$0xff]
  %v719 = vld [vmem:[%s2 + $0x1e0] sm:$0xff]
  %v720 = vld [vmem:[%s2 + $0x1e8] sm:$0xff]
  %v721 = vld [vmem:[%s2 + $0x1f0] sm:$0xff]
  %v722 = vld [vmem:[%s2 + $0x1f8] sm:$0xff]
  %723 = vmatprep.subr.mxu0 %v690
  %724 = vmatpush1.msra.mxu0 %v689
  %725 = vmatprep.subr.mxu0 %v688
  %726 = vmatpush1.msra.mxu0 %v687
  %727 = vmatprep.subr.mxu0 %v686
  %728 = vmatpush1.msra.mxu0 %v685
  %729 = vmatprep.subr.mxu0 %v684
  %730 = vmatpush1.msra.mxu0 %v683
  %731 = vmatprep.subr.mxu0 %v682
  %732 = vmatpush1.msra.mxu0 %v681
  %733 = vmatprep.subr.mxu0 %v680
  %734 = vmatpush1.msra.mxu0 %v679
  %735 = vmatprep.subr.mxu0 %v678
  %736 = vmatpush1.msra.mxu0 %v677
  %737 = vmatprep.subr.mxu0 %v676
  %738 = vmatpush1.msra.mxu0 %v675
  %739 = vmatprep.subr.mxu0 %v674
  %740 = vmatpush1.msra.mxu0 %v673
  %741 = vmatprep.subr.mxu0 %v672
  %742 = vmatpush1.msra.mxu0 %v671
  %743 = vmatprep.subr.mxu0 %v670
  %744 = vmatpush1.msra.mxu0 %v669
  %745 = vmatprep.subr.mxu0 %v668
  %746 = vmatpush1.msra.mxu0 %v667
  %747 = vmatprep.subr.mxu0 %v666
  %748 = vmatpush1.msra.mxu0 %v665
  %749 = vmatprep.subr.mxu0 %v664
  %750 = vmatpush1.msra.mxu0 %v663
  %751 = vmatprep.subr.mxu0 %v662
  %752 = vmatpush1.msra.mxu0 %v661
  %753 = vmatprep.subr.mxu0 %v660
  %754 = vmatpush1.msra.mxu0 %v659
  %755 = vmatprep.subr.mxu0 %v722
  %756 = vmatpush2.msra.mxu0 %v721
  %757 = vmatprep.subr.mxu0 %v720
  %758 = vmatpush2.msra.mxu0 %v719
  %759 = vmatprep.subr.mxu0 %v718
  %760 = vmatpush2.msra.mxu0 %v717
  %761 = vmatprep.subr.mxu0 %v716
  %762 = vmatpush2.msra.mxu0 %v715
  %763 = vmatprep.subr.mxu0 %v714
  %764 = vmatpush2.msra.mxu0 %v713
  %765 = vmatprep.subr.mxu0 %v712
  %766 = vmatpush2.msra.mxu0 %v711
  %767 = vmatprep.subr.mxu0 %v710
  %768 = vmatpush2.msra.mxu0 %v709
  %769 = vmatprep.subr.mxu0 %v708
  %770 = vmatpush2.msra.mxu0 %v707
  %771 = vmatprep.subr.mxu0 %v706
  %772 = vmatpush2.msra.mxu0 %v705
  %773 = vmatprep.subr.mxu0 %v704
  %774 = vmatpush2.msra.mxu0 %v703
  %775 = vmatprep.subr.mxu0 %v702
  %776 = vmatpush2.msra.mxu0 %v701
  %777 = vmatprep.subr.mxu0 %v700
  %778 = vmatpush2.msra.mxu0 %v699
  %779 = vmatprep.subr.mxu0 %v698
  %780 = vmatpush2.msra.mxu0 %v697
  %781 = vmatprep.subr.mxu0 %v696
  %782 = vmatpush2.msra.mxu0 %v695
  %783 = vmatprep.subr.mxu0 %v694
  %784 = vmatpush2.msra.mxu0 %v693
  %785 = vmatprep.subr.mxu0 %v692
  %786 = vmatpush2.msra.mxu0 %v691
  %787 = vmatprep.mubr.f32.mxu0 %v650
  %788 = vmatmul.mubr.f32.gmra.mxu0 %v649
  %v789 = vpop.f32.mrf.mxu0
  %v790 = vadd.f32 0.0, %v789
  %v791 = vpop.f32.mrf.mxu0
  %v792 = vadd.f32 0.0, %v791
  %793 = vdwg.mxu0
  %v794 = vadd.f32 %v656, %v790
  %v795 = vadd.f32 %v658, %v792
  %v796 = vtanh.pop %v794
  %v797 = vtanh.pop %v795
  %s798 = scalar_lea.vmem %s3, 8
  %799 = vst [vmem:[%s798] sm:$0x3] %v796
  %s800 = scalar_lea.vmem %s49, 6
  %801 = vst [vmem:[%s800] sm:$0x3] %v797
  %s802 = scalar_lea.vmem %s0, 10
  %v803 = vld [vmem:[%s802] sm:$0x3]
  %s804 = scalar_lea.vmem %s41, 4
  %v805 = vld [vmem:[%s804] sm:$0x3]
  %v806 = vld [vmem:[%s2] sm:$0xff]
  %v807 = vld [vmem:[%s2 + $0x8] sm:$0xff]
  %v808 = vld [vmem:[%s2 + $0x10] sm:$0xff]
  %v809 = vld [vmem:[%s2 + $0x18] sm:$0xff]
  %v810 = vld [vmem:[%s2 + $0x20] sm:$0xff]
  %v811 = vld [vmem:[%s2 + $0x28] sm:$0xff]
  %v812 = vld [vmem:[%s2 + $0x30] sm:$0xff]
  %v813 = vld [vmem:[%s2 + $0x38] sm:$0xff]
  %v814 = vld [vmem:[%s2 + $0x40] sm:$0xff]
  %v815 = vld [vmem:[%s2 + $0x48] sm:$0xff]
  %v816 = vld [vmem:[%s2 + $0x50] sm:$0xff]
  %v817 = vld [vmem:[%s2 + $0x58] sm:$0xff]
  %v818 = vld [vmem:[%s2 + $0x60] sm:$0xff]
  %v819 = vld [vmem:[%s2 + $0x68] sm:$0xff]
  %v820 = vld [vmem:[%s2 + $0x70] sm:$0xff]
  %v821 = vld [vmem:[%s2 + $0x78] sm:$0xff]
  %v822 = vld [vmem:[%s2 + $0x80] sm:$0xff]
  %v823 = vld [vmem:[%s2 + $0x88] sm:$0xff]
  %v824 = vld [vmem:[%s2 + $0x90] sm:$0xff]
  %v825 = vld [vmem:[%s2 + $0x98] sm:$0xff]
  %v826 = vld [vmem:[%s2 + $0xa0] sm:$0xff]
  %v827 = vld [vmem:[%s2 + $0xa8] sm:$0xff]
  %v828 = vld [vmem:[%s2 + $0xb0] sm:$0xff]
  %v829 = vld [vmem:[%s2 + $0xb8] sm:$0xff]
  %v830 = vld [vmem:[%s2 + $0xc0] sm:$0xff]
  %v831 = vld [vmem:[%s2 + $0xc8] sm:$0xff]
  %v832 = vld [vmem:[%s2 + $0xd0] sm:$0xff]
  %v833 = vld [vmem:[%s2 + $0xd8] sm:$0xff]
  %v834 = vld [vmem:[%s2 + $0xe0] sm:$0xff]
  %v835 = vld [vmem:[%s2 + $0xe8] sm:$0xff]
  %v836 = vld [vmem:[%s2 + $0xf0] sm:$0xff]
  %v837 = vld [vmem:[%s2 + $0xf8] sm:$0xff]
  %v838 = vld [vmem:[%s2 + $0x100] sm:$0xff]
  %v839 = vld [vmem:[%s2 + $0x108] sm:$0xff]
  %v840 = vld [vmem:[%s2 + $0x110] sm:$0xff]
  %v841 = vld [vmem:[%s2 + $0x118] sm:$0xff]
  %v842 = vld [vmem:[%s2 + $0x120] sm:$0xff]
  %v843 = vld [vmem:[%s2 + $0x128] sm:$0xff]
  %v844 = vld [vmem:[%s2 + $0x130] sm:$0xff]
  %v845 = vld [vmem:[%s2 + $0x138] sm:$0xff]
  %v846 = vld [vmem:[%s2 + $0x140] sm:$0xff]
  %v847 = vld [vmem:[%s2 + $0x148] sm:$0xff]
  %v848 = vld [vmem:[%s2 + $0x150] sm:$0xff]
  %v849 = vld [vmem:[%s2 + $0x158] sm:$0xff]
  %v850 = vld [vmem:[%s2 + $0x160] sm:$0xff]
  %v851 = vld [vmem:[%s2 + $0x168] sm:$0xff]
  %v852 = vld [vmem:[%s2 + $0x170] sm:$0xff]
  %v853 = vld [vmem:[%s2 + $0x178] sm:$0xff]
  %v854 = vld [vmem:[%s2 + $0x180] sm:$0xff]
  %v855 = vld [vmem:[%s2 + $0x188] sm:$0xff]
  %v856 = vld [vmem:[%s2 + $0x190] sm:$0xff]
  %v857 = vld [vmem:[%s2 + $0x198] sm:$0xff]
  %v858 = vld [vmem:[%s2 + $0x1a0] sm:$0xff]
  %v859 = vld [vmem:[%s2 + $0x1a8] sm:$0xff]
  %v860 = vld [vmem:[%s2 + $0x1b0] sm:$0xff]
  %v861 = vld [vmem:[%s2 + $0x1b8] sm:$0xff]
  %v862 = vld [vmem:[%s2 + $0x1c0] sm:$0xff]
  %v863 = vld [vmem:[%s2 + $0x1c8] sm:$0xff]
  %v864 = vld [vmem:[%s2 + $0x1d0] sm:$0xff]
  %v865 = vld [vmem:[%s2 + $0x1d8] sm:$0xff]
  %v866 = vld [vmem:[%s2 + $0x1e0] sm:$0xff]
  %v867 = vld [vmem:[%s2 + $0x1e8] sm:$0xff]
  %v868 = vld [vmem:[%s2 + $0x1f0] sm:$0xff]
  %v869 = vld [vmem:[%s2 + $0x1f8] sm:$0xff]
  %870 = vmatprep.subr.mxu0 %v837
  %871 = vmatpush1.msra.mxu0 %v836
  %872 = vmatprep.subr.mxu0 %v835
  %873 = vmatpush1.msra.mxu0 %v834
  %874 = vmatprep.subr.mxu0 %v833
  %875 = vmatpush1.msra.mxu0 %v832
  %876 = vmatprep.subr.mxu0 %v831
  %877 = vmatpush1.msra.mxu0 %v830
  %878 = vmatprep.subr.mxu0 %v829
  %879 = vmatpush1.msra.mxu0 %v828
  %880 = vmatprep.subr.mxu0 %v827
  %881 = vmatpush1.msra.mxu0 %v826
  %882 = vmatprep.subr.mxu0 %v825
  %883 = vmatpush1.msra.mxu0 %v824
  %884 = vmatprep.subr.mxu0 %v823
  %885 = vmatpush1.msra.mxu0 %v822
  %886 = vmatprep.subr.mxu0 %v821
  %887 = vmatpush1.msra.mxu0 %v820
  %888 = vmatprep.subr.mxu0 %v819
  %889 = vmatpush1.msra.mxu0 %v818
  %890 = vmatprep.subr.mxu0 %v817
  %891 = vmatpush1.msra.mxu0 %v816
  %892 = vmatprep.subr.mxu0 %v815
  %893 = vmatpush1.msra.mxu0 %v814
  %894 = vmatprep.subr.mxu0 %v813
  %895 = vmatpush1.msra.mxu0 %v812
  %896 = vmatprep.subr.mxu0 %v811
  %897 = vmatpush1.msra.mxu0 %v810
  %898 = vmatprep.subr.mxu0 %v809
  %899 = vmatpush1.msra.mxu0 %v808
  %900 = vmatprep.subr.mxu0 %v807
  %901 = vmatpush1.msra.mxu0 %v806
  %902 = vmatprep.subr.mxu0 %v869
  %903 = vmatpush2.msra.mxu0 %v868
  %904 = vmatprep.subr.mxu0 %v867
  %905 = vmatpush2.msra.mxu0 %v866
  %906 = vmatprep.subr.mxu0 %v865
  %907 = vmatpush2.msra.mxu0 %v864
  %908 = vmatprep.subr.mxu0 %v863
  %909 = vmatpush2.msra.mxu0 %v862
  %910 = vmatprep.subr.mxu0 %v861
  %911 = vmatpush2.msra.mxu0 %v860
  %912 = vmatprep.subr.mxu0 %v859
  %913 = vmatpush2.msra.mxu0 %v858
  %914 = vmatprep.subr.mxu0 %v857
  %915 = vmatpush2.msra.mxu0 %v856
  %916 = vmatprep.subr.mxu0 %v855
  %917 = vmatpush2.msra.mxu0 %v854
  %918 = vmatprep.subr.mxu0 %v853
  %919 = vmatpush2.msra.mxu0 %v852
  %920 = vmatprep.subr.mxu0 %v851
  %921 = vmatpush2.msra.mxu0 %v850
  %922 = vmatprep.subr.mxu0 %v849
  %923 = vmatpush2.msra.mxu0 %v848
  %924 = vmatprep.subr.mxu0 %v847
  %925 = vmatpush2.msra.mxu0 %v846
  %926 = vmatprep.subr.mxu0 %v845
  %927 = vmatpush2.msra.mxu0 %v844
  %928 = vmatprep.subr.mxu0 %v843
  %929 = vmatpush2.msra.mxu0 %v842
  %930 = vmatprep.subr.mxu0 %v841
  %931 = vmatpush2.msra.mxu0 %v840
  %932 = vmatprep.subr.mxu0 %v839
  %933 = vmatpush2.msra.mxu0 %v838
  %934 = vmatprep.mubr.f32.mxu0 %v797
  %935 = vmatmul.mubr.f32.gmra.mxu0 %v796
  %v936 = vpop.f32.mrf.mxu0
  %v937 = vadd.f32 0.0, %v936
  %v938 = vpop.f32.mrf.mxu0
  %v939 = vadd.f32 0.0, %v938
  %940 = vdwg.mxu0
  %v941 = vadd.f32 %v803, %v937
  %v942 = vadd.f32 %v805, %v939
  %v943 = vtanh.pop %v941
  %v944 = vtanh.pop %v942
  %s945 = scalar_lea.vmem %s3, 10
  %946 = vst [vmem:[%s945] sm:$0x3] %v943
  %s947 = scalar_lea.vmem %s49, 4
  %948 = vst [vmem:[%s947] sm:$0x3] %v944
  %s949 = scalar_lea.vmem %s0, 12
  %v950 = vld [vmem:[%s949] sm:$0x3]
  %s951 = scalar_lea.vmem %s41, 2
  %v952 = vld [vmem:[%s951] sm:$0x3]
  %v953 = vld [vmem:[%s2] sm:$0xff]
  %v954 = vld [vmem:[%s2 + $0x8] sm:$0xff]
  %v955 = vld [vmem:[%s2 + $0x10] sm:$0xff]
  %v956 = vld [vmem:[%s2 + $0x18] sm:$0xff]
  %v957 = vld [vmem:[%s2 + $0x20] sm:$0xff]
  %v958 = vld [vmem:[%s2 + $0x28] sm:$0xff]
  %v959 = vld [vmem:[%s2 + $0x30] sm:$0xff]
  %v960 = vld [vmem:[%s2 + $0x38] sm:$0xff]
  %v961 = vld [vmem:[%s2 + $0x40] sm:$0xff]
  %v962 = vld [vmem:[%s2 + $0x48] sm:$0xff]
  %v963 = vld [vmem:[%s2 + $0x50] sm:$0xff]
  %v964 = vld [vmem:[%s2 + $0x58] sm:$0xff]
  %v965 = vld [vmem:[%s2 + $0x60] sm:$0xff]
  %v966 = vld [vmem:[%s2 + $0x68] sm:$0xff]
  %v967 = vld [vmem:[%s2 + $0x70] sm:$0xff]
  %v968 = vld [vmem:[%s2 + $0x78] sm:$0xff]
  %v969 = vld [vmem:[%s2 + $0x80] sm:$0xff]
  %v970 = vld [vmem:[%s2 + $0x88] sm:$0xff]
  %v971 = vld [vmem:[%s2 + $0x90] sm:$0xff]
  %v972 = vld [vmem:[%s2 + $0x98] sm:$0xff]
  %v973 = vld [vmem:[%s2 + $0xa0] sm:$0xff]
  %v974 = vld [vmem:[%s2 + $0xa8] sm:$0xff]
  %v975 = vld [vmem:[%s2 + $0xb0] sm:$0xff]
  %v976 = vld [vmem:[%s2 + $0xb8] sm:$0xff]
  %v977 = vld [vmem:[%s2 + $0xc0] sm:$0xff]
  %v978 = vld [vmem:[%s2 + $0xc8] sm:$0xff]
  %v979 = vld [vmem:[%s2 + $0xd0] sm:$0xff]
  %v980 = vld [vmem:[%s2 + $0xd8] sm:$0xff]
  %v981 = vld [vmem:[%s2 + $0xe0] sm:$0xff]
  %v982 = vld [vmem:[%s2 + $0xe8] sm:$0xff]
  %v983 = vld [vmem:[%s2 + $0xf0] sm:$0xff]
  %v984 = vld [vmem:[%s2 + $0xf8] sm:$0xff]
  %v985 = vld [vmem:[%s2 + $0x100] sm:$0xff]
  %v986 = vld [vmem:[%s2 + $0x108] sm:$0xff]
  %v987 = vld [vmem:[%s2 + $0x110] sm:$0xff]
  %v988 = vld [vmem:[%s2 + $0x118] sm:$0xff]
  %v989 = vld [vmem:[%s2 + $0x120] sm:$0xff]
  %v990 = vld [vmem:[%s2 + $0x128] sm:$0xff]
  %v991 = vld [vmem:[%s2 + $0x130] sm:$0xff]
  %v992 = vld [vmem:[%s2 + $0x138] sm:$0xff]
  %v993 = vld [vmem:[%s2 + $0x140] sm:$0xff]
  %v994 = vld [vmem:[%s2 + $0x148] sm:$0xff]
  %v995 = vld [vmem:[%s2 + $0x150] sm:$0xff]
  %v996 = vld [vmem:[%s2 + $0x158] sm:$0xff]
  %v997 = vld [vmem:[%s2 + $0x160] sm:$0xff]
  %v998 = vld [vmem:[%s2 + $0x168] sm:$0xff]
  %v999 = vld [vmem:[%s2 + $0x170] sm:$0xff]
  %v1000 = vld [vmem:[%s2 + $0x178] sm:$0xff]
  %v1001 = vld [vmem:[%s2 + $0x180] sm:$0xff]
  %v1002 = vld [vmem:[%s2 + $0x188] sm:$0xff]
  %v1003 = vld [vmem:[%s2 + $0x190] sm:$0xff]
  %v1004 = vld [vmem:[%s2 + $0x198] sm:$0xff]
  %v1005 = vld [vmem:[%s2 + $0x1a0] sm:$0xff]
  %v1006 = vld [vmem:[%s2 + $0x1a8] sm:$0xff]
  %v1007 = vld [vmem:[%s2 + $0x1b0] sm:$0xff]
  %v1008 = vld [vmem:[%s2 + $0x1b8] sm:$0xff]
  %v1009 = vld [vmem:[%s2 + $0x1c0] sm:$0xff]
  %v1010 = vld [vmem:[%s2 + $0x1c8] sm:$0xff]
  %v1011 = vld [vmem:[%s2 + $0x1d0] sm:$0xff]
  %v1012 = vld [vmem:[%s2 + $0x1d8] sm:$0xff]
  %v1013 = vld [vmem:[%s2 + $0x1e0] sm:$0xff]
  %v1014 = vld [vmem:[%s2 + $0x1e8] sm:$0xff]
  %v1015 = vld [vmem:[%s2 + $0x1f0] sm:$0xff]
  %v1016 = vld [vmem:[%s2 + $0x1f8] sm:$0xff]
  %1017 = vmatprep.subr.mxu0 %v984
  %1018 = vmatpush1.msra.mxu0 %v983
  %1019 = vmatprep.subr.mxu0 %v982
  %1020 = vmatpush1.msra.mxu0 %v981
  %1021 = vmatprep.subr.mxu0 %v980
  %1022 = vmatpush1.msra.mxu0 %v979
  %1023 = vmatprep.subr.mxu0 %v978
  %1024 = vmatpush1.msra.mxu0 %v977
  %1025 = vmatprep.subr.mxu0 %v976
  %1026 = vmatpush1.msra.mxu0 %v975
  %1027 = vmatprep.subr.mxu0 %v974
  %1028 = vmatpush1.msra.mxu0 %v973
  %1029 = vmatprep.subr.mxu0 %v972
  %1030 = vmatpush1.msra.mxu0 %v971
  %1031 = vmatprep.subr.mxu0 %v970
  %1032 = vmatpush1.msra.mxu0 %v969
  %1033 = vmatprep.subr.mxu0 %v968
  %1034 = vmatpush1.msra.mxu0 %v967
  %1035 = vmatprep.subr.mxu0 %v966
  %1036 = vmatpush1.msra.mxu0 %v965
  %1037 = vmatprep.subr.mxu0 %v964
  %1038 = vmatpush1.msra.mxu0 %v963
  %1039 = vmatprep.subr.mxu0 %v962
  %1040 = vmatpush1.msra.mxu0 %v961
  %1041 = vmatprep.subr.mxu0 %v960
  %1042 = vmatpush1.msra.mxu0 %v959
  %1043 = vmatprep.subr.mxu0 %v958
  %1044 = vmatpush1.msra.mxu0 %v957
  %1045 = vmatprep.subr.mxu0 %v956
  %1046 = vmatpush1.msra.mxu0 %v955
  %1047 = vmatprep.subr.mxu0 %v954
  %1048 = vmatpush1.msra.mxu0 %v953
  %1049 = vmatprep.subr.mxu0 %v1016
  %1050 = vmatpush2.msra.mxu0 %v1015
  %1051 = vmatprep.subr.mxu0 %v1014
  %1052 = vmatpush2.msra.mxu0 %v1013
  %1053 = vmatprep.subr.mxu0 %v1012
  %1054 = vmatpush2.msra.mxu0 %v1011
  %1055 = vmatprep.subr.mxu0 %v1010
  %1056 = vmatpush2.msra.mxu0 %v1009
  %1057 = vmatprep.subr.mxu0 %v1008
  %1058 = vmatpush2.msra.mxu0 %v1007
  %1059 = vmatprep.subr.mxu0 %v1006
  %1060 = vmatpush2.msra.mxu0 %v1005
  %1061 = vmatprep.subr.mxu0 %v1004
  %1062 = vmatpush2.msra.mxu0 %v1003
  %1063 = vmatprep.subr.mxu0 %v1002
  %1064 = vmatpush2.msra.mxu0 %v1001
  %1065 = vmatprep.subr.mxu0 %v1000
  %1066 = vmatpush2.msra.mxu0 %v999
  %1067 = vmatprep.subr.mxu0 %v998
  %1068 = vmatpush2.msra.mxu0 %v997
  %1069 = vmatprep.subr.mxu0 %v996
  %1070 = vmatpush2.msra.mxu0 %v995
  %1071 = vmatprep.subr.mxu0 %v994
  %1072 = vmatpush2.msra.mxu0 %v993
  %1073 = vmatprep.subr.mxu0 %v992
  %1074 = vmatpush2.msra.mxu0 %v991
  %1075 = vmatprep.subr.mxu0 %v990
  %1076 = vmatpush2.msra.mxu0 %v989
  %1077 = vmatprep.subr.mxu0 %v988
  %1078 = vmatpush2.msra.mxu0 %v987
  %1079 = vmatprep.subr.mxu0 %v986
  %1080 = vmatpush2.msra.mxu0 %v985
  %1081 = vmatprep.mubr.f32.mxu0 %v944
  %1082 = vmatmul.mubr.f32.gmra.mxu0 %v943
  %v1083 = vpop.f32.mrf.mxu0
  %v1084 = vadd.f32 0.0, %v1083
  %v1085 = vpop.f32.mrf.mxu0
  %v1086 = vadd.f32 0.0, %v1085
  %1087 = vdwg.mxu0
  %v1088 = vadd.f32 %v950, %v1084
  %v1089 = vadd.f32 %v952, %v1086
  %v1090 = vtanh.pop %v1088
  %v1091 = vtanh.pop %v1089
  %s1092 = scalar_lea.vmem %s3, 12
  %1093 = vst [vmem:[%s1092] sm:$0x3] %v1090
  %s1094 = scalar_lea.vmem %s49, 2
  %1095 = vst [vmem:[%s1094] sm:$0x3] %v1091
  %s1096 = scalar_lea.vmem %s0, 14
  %v1097 = vld [vmem:[%s1096] sm:$0x3]
  %v1098 = vld [vmem:[%s41] sm:$0x3]
  %v1099 = vld [vmem:[%s2] sm:$0xff]
  %v1100 = vld [vmem:[%s2 + $0x8] sm:$0xff]
  %v1101 = vld [vmem:[%s2 + $0x10] sm:$0xff]
  %v1102 = vld [vmem:[%s2 + $0x18] sm:$0xff]
  %v1103 = vld [vmem:[%s2 + $0x20] sm:$0xff]
  %v1104 = vld [vmem:[%s2 + $0x28] sm:$0xff]
  %v1105 = vld [vmem:[%s2 + $0x30] sm:$0xff]
  %v1106 = vld [vmem:[%s2 + $0x38] sm:$0xff]
  %v1107 = vld [vmem:[%s2 + $0x40] sm:$0xff]
  %v1108 = vld [vmem:[%s2 + $0x48] sm:$0xff]
  %v1109 = vld [vmem:[%s2 + $0x50] sm:$0xff]
  %v1110 = vld [vmem:[%s2 + $0x58] sm:$0xff]
  %v1111 = vld [vmem:[%s2 + $0x60] sm:$0xff]
  %v1112 = vld [vmem:[%s2 + $0x68] sm:$0xff]
  %v1113 = vld [vmem:[%s2 + $0x70] sm:$0xff]
  %v1114 = vld [vmem:[%s2 + $0x78] sm:$0xff]
  %v1115 = vld [vmem:[%s2 + $0x80] sm:$0xff]
  %v1116 = vld [vmem:[%s2 + $0x88] sm:$0xff]
  %v1117 = vld [vmem:[%s2 + $0x90] sm:$0xff]
  %v1118 = vld [vmem:[%s2 + $0x98] sm:$0xff]
  %v1119 = vld [vmem:[%s2 + $0xa0] sm:$0xff]
  %v1120 = vld [vmem:[%s2 + $0xa8] sm:$0xff]
  %v1121 = vld [vmem:[%s2 + $0xb0] sm:$0xff]
  %v1122 = vld [vmem:[%s2 + $0xb8] sm:$0xff]
  %v1123 = vld [vmem:[%s2 + $0xc0] sm:$0xff]
  %v1124 = vld [vmem:[%s2 + $0xc8] sm:$0xff]
  %v1125 = vld [vmem:[%s2 + $0xd0] sm:$0xff]
  %v1126 = vld [vmem:[%s2 + $0xd8] sm:$0xff]
  %v1127 = vld [vmem:[%s2 + $0xe0] sm:$0xff]
  %v1128 = vld [vmem:[%s2 + $0xe8] sm:$0xff]
  %v1129 = vld [vmem:[%s2 + $0xf0] sm:$0xff]
  %v1130 = vld [vmem:[%s2 + $0xf8] sm:$0xff]
  %v1131 = vld [vmem:[%s2 + $0x100] sm:$0xff]
  %v1132 = vld [vmem:[%s2 + $0x108] sm:$0xff]
  %v1133 = vld [vmem:[%s2 + $0x110] sm:$0xff]
  %v1134 = vld [vmem:[%s2 + $0x118] sm:$0xff]
  %v1135 = vld [vmem:[%s2 + $0x120] sm:$0xff]
  %v1136 = vld [vmem:[%s2 + $0x128] sm:$0xff]
  %v1137 = vld [vmem:[%s2 + $0x130] sm:$0xff]
  %v1138 = vld [vmem:[%s2 + $0x138] sm:$0xff]
  %v1139 = vld [vmem:[%s2 + $0x140] sm:$0xff]
  %v1140 = vld [vmem:[%s2 + $0x148] sm:$0xff]
  %v1141 = vld [vmem:[%s2 + $0x150] sm:$0xff]
  %v1142 = vld [vmem:[%s2 + $0x158] sm:$0xff]
  %v1143 = vld [vmem:[%s2 + $0x160] sm:$0xff]
  %v1144 = vld [vmem:[%s2 + $0x168] sm:$0xff]
  %v1145 = vld [vmem:[%s2 + $0x170] sm:$0xff]
  %v1146 = vld [vmem:[%s2 + $0x178] sm:$0xff]
  %v1147 = vld [vmem:[%s2 + $0x180] sm:$0xff]
  %v1148 = vld [vmem:[%s2 + $0x188] sm:$0xff]
  %v1149 = vld [vmem:[%s2 + $0x190] sm:$0xff]
  %v1150 = vld [vmem:[%s2 + $0x198] sm:$0xff]
  %v1151 = vld [vmem:[%s2 + $0x1a0] sm:$0xff]
  %v1152 = vld [vmem:[%s2 + $0x1a8] sm:$0xff]
  %v1153 = vld [vmem:[%s2 + $0x1b0] sm:$0xff]
  %v1154 = vld [vmem:[%s2 + $0x1b8] sm:$0xff]
  %v1155 = vld [vmem:[%s2 + $0x1c0] sm:$0xff]
  %v1156 = vld [vmem:[%s2 + $0x1c8] sm:$0xff]
  %v1157 = vld [vmem:[%s2 + $0x1d0] sm:$0xff]
  %v1158 = vld [vmem:[%s2 + $0x1d8] sm:$0xff]
  %v1159 = vld [vmem:[%s2 + $0x1e0] sm:$0xff]
  %v1160 = vld [vmem:[%s2 + $0x1e8] sm:$0xff]
  %v1161 = vld [vmem:[%s2 + $0x1f0] sm:$0xff]
  %v1162 = vld [vmem:[%s2 + $0x1f8] sm:$0xff]
  %1163 = vmatprep.subr.mxu0 %v1130
  %1164 = vmatpush1.msra.mxu0 %v1129
  %1165 = vmatprep.subr.mxu0 %v1128
  %1166 = vmatpush1.msra.mxu0 %v1127
  %1167 = vmatprep.subr.mxu0 %v1126
  %1168 = vmatpush1.msra.mxu0 %v1125
  %1169 = vmatprep.subr.mxu0 %v1124
  %1170 = vmatpush1.msra.mxu0 %v1123
  %1171 = vmatprep.subr.mxu0 %v1122
  %1172 = vmatpush1.msra.mxu0 %v1121
  %1173 = vmatprep.subr.mxu0 %v1120
  %1174 = vmatpush1.msra.mxu0 %v1119
  %1175 = vmatprep.subr.mxu0 %v1118
  %1176 = vmatpush1.msra.mxu0 %v1117
  %1177 = vmatprep.subr.mxu0 %v1116
  %1178 = vmatpush1.msra.mxu0 %v1115
  %1179 = vmatprep.subr.mxu0 %v1114
  %1180 = vmatpush1.msra.mxu0 %v1113
  %1181 = vmatprep.subr.mxu0 %v1112
  %1182 = vmatpush1.msra.mxu0 %v1111
  %1183 = vmatprep.subr.mxu0 %v1110
  %1184 = vmatpush1.msra.mxu0 %v1109
  %1185 = vmatprep.subr.mxu0 %v1108
  %1186 = vmatpush1.msra.mxu0 %v1107
  %1187 = vmatprep.subr.mxu0 %v1106
  %1188 = vmatpush1.msra.mxu0 %v1105
  %1189 = vmatprep.subr.mxu0 %v1104
  %1190 = vmatpush1.msra.mxu0 %v1103
  %1191 = vmatprep.subr.mxu0 %v1102
  %1192 = vmatpush1.msra.mxu0 %v1101
  %1193 = vmatprep.subr.mxu0 %v1100
  %1194 = vmatpush1.msra.mxu0 %v1099
  %1195 = vmatprep.subr.mxu0 %v1162
  %1196 = vmatpush2.msra.mxu0 %v1161
  %1197 = vmatprep.subr.mxu0 %v1160
  %1198 = vmatpush2.msra.mxu0 %v1159
  %1199 = vmatprep.subr.mxu0 %v1158
  %1200 = vmatpush2.msra.mxu0 %v1157
  %1201 = vmatprep.subr.mxu0 %v1156
  %1202 = vmatpush2.msra.mxu0 %v1155
  %1203 = vmatprep.subr.mxu0 %v1154
  %1204 = vmatpush2.msra.mxu0 %v1153
  %1205 = vmatprep.subr.mxu0 %v1152
  %1206 = vmatpush2.msra.mxu0 %v1151
  %1207 = vmatprep.subr.mxu0 %v1150
  %1208 = vmatpush2.msra.mxu0 %v1149
  %1209 = vmatprep.subr.mxu0 %v1148
  %1210 = vmatpush2.msra.mxu0 %v1147
  %1211 = vmatprep.subr.mxu0 %v1146
  %1212 = vmatpush2.msra.mxu0 %v1145
  %1213 = vmatprep.subr.mxu0 %v1144
  %1214 = vmatpush2.msra.mxu0 %v1143
  %1215 = vmatprep.subr.mxu0 %v1142
  %1216 = vmatpush2.msra.mxu0 %v1141
  %1217 = vmatprep.subr.mxu0 %v1140
  %1218 = vmatpush2.msra.mxu0 %v1139
  %1219 = vmatprep.subr.mxu0 %v1138
  %1220 = vmatpush2.msra.mxu0 %v1137
  %1221 = vmatprep.subr.mxu0 %v1136
  %1222 = vmatpush2.msra.mxu0 %v1135
  %1223 = vmatprep.subr.mxu0 %v1134
  %1224 = vmatpush2.msra.mxu0 %v1133
  %1225 = vmatprep.subr.mxu0 %v1132
  %1226 = vmatpush2.msra.mxu0 %v1131
  %1227 = vmatprep.mubr.f32.mxu0 %v1091
  %1228 = vmatmul.mubr.f32.gmra.mxu0 %v1090
  %v1229 = vpop.f32.mrf.mxu0
  %v1230 = vadd.f32 0.0, %v1229
  %v1231 = vpop.f32.mrf.mxu0
  %v1232 = vadd.f32 0.0, %v1231
  %1233 = vdwg.mxu0
  %v1234 = vadd.f32 %v1097, %v1230
  %v1235 = vadd.f32 %v1098, %v1232
  %v1236 = vtanh.pop %v1234
  %v1237 = vtanh.pop %v1235
  %s1238 = scalar_lea.vmem %s3, 14
  %1239 = vst [vmem:[%s1238] sm:$0x3] %v1236
  %1240 = vst [vmem:[%s49] sm:$0x3] %v1237
  %v1243 = vcombine.low %v1236, %v1237
  %v1245 = vunpack.c.l.s4 1983009808
  %v1246 = vunpack.c.0.s8 %v1245
  %v1247 = vlaneseq
  %v1248 = vshrl.u32 %v1247, 7
  %v1249 = vsub.s32 %v1246, %v1248
  %v1250 = vrot.slane %v1243, %v1249
  %1252 = vst [vmem:[#allocation2] sm:$0xf] %v1250
  %s1253 = ssub.s32 0, 0
  %s1254 = smul.u32 8, %s1253
  %p1255 = scmp.lt.s32.totalorder %s1254, 7
  %s1256 = scalar_select %p1255, %s1254, 7
  %s1257 = smul.addr %s1256, 2
  %s1258 = scalar_lea.vmem %s4, %s1257
  // Predicated region
  $region18: #{document_model_forward.2} parent=0 // pred_check
    _
  $region19: #{document_model_forward.2} parent=0 // pred_check_branch
    %1260 = sbr.rel (0) target = $region21
  $region20: #{document_model_forward.2} parent=0 // pred_region
    _
  $region21: #{document_model_forward.2} parent=0 // pred_fallthru
    _
  // Predicated region
  $region22: #{document_model_forward.2} parent=0 // pred_check
    _
  $region23: #{document_model_forward.2} parent=0 // pred_check_branch
    %1262 = sbr.rel (0) target = $region25
  $region24: #{document_model_forward.2} parent=0 // pred_region
    %s1263 = ssub.s32 0, 0
    %s1264 = smul.u32 8, %s1263
  $region25: #{document_model_forward.2} parent=0 // pred_fallthru
    _
  // Predicated region
  $region26: #{document_model_forward.2} parent=0 // pred_check
    _
  $region27: #{document_model_forward.2} parent=0 // pred_check_branch
    %1266 = sbr.rel (0) target = $region29
  $region28: #{document_model_forward.2} parent=0 // pred_region
    _
  $region29: #{document_model_forward.2} parent=0 // pred_fallthru
    _
  // Predicated region
  $region30: #{document_model_forward.2} parent=0 // pred_check
    _
  $region31: #{document_model_forward.2} parent=0 // pred_check_branch
    %1268 = sbr.rel (0) target = $region33
  $region32: #{document_model_forward.2} parent=0 // pred_region
    %s1269 = ssub.s32 0, 0
    %s1270 = smul.u32 8, %s1269
    %p1271 = scmp.lt.s32.totalorder %s1270, 7
    %s1272 = scalar_select %p1271, %s1270, 7
    %s1273 = smul.addr %s1272, 2
    %s1274 = scalar_lea.vmem %s4, %s1273
  $region33: #{document_model_forward.2} parent=0 // pred_fallthru
    _

// kernel: document_model_forward.3
$region0: #{document_model_forward.3}
  #allocation0 [shape = 'u32[]', space=smem, size = 0x4, offset = 0x4, fixed_abs, tag = 'smem constant byte address 0x4 - core index']
  #allocation1 [shape = 'u32[144,128]{1,0:T(1,128)}', space=vmem, size = 0x12000, scoped, tag = 'internal scratch']
  %s0 = inlined_call_operand.vmem [shape: f32[8,2,128], index: 0, kind: input, shape index: {}]
  %s1 = inlined_call_operand.vmem [shape: f32[8,2,128], index: 1, kind: input, shape index: {}]
  %s2 = inlined_call_operand.vmem [shape: f32[2,6,256], index: 2, kind: input, shape index: {}]
  %s3 = inlined_call_operand.vmem [shape: f32[256,128], index: 3, kind: input, shape index: {}]
  %s4 = inlined_call_operand.vmem [shape: f32[1,128], index: 4, kind: input, shape index: {}]
  %s5 = inlined_call_operand.vmem [shape: f32[2,8,128], index: 5, kind: output, shape index: {}]
  %s6 = sld [smem:[#allocation0]]
  $region30: #{document_model_forward.3} parent=0
    _
  %s8 = ssub.s32 1, %s6
  %s9 = scalar_select 0, %s8, %s6
  // Predicated region
  $region2: #{document_model_forward.3} parent=0 // pred_check
    _
  $region3: #{document_model_forward.3} parent=0 // pred_check_branch
    %11 = sbr.rel (0) target = $region5
  $region4: #{document_model_forward.3} parent=0 // pred_region
    _
  $region5: #{document_model_forward.3} parent=0 // pred_fallthru
    _
  // Predicated region
  $region6: #{document_model_forward.3} parent=0 // pred_check
    _
  $region7: #{document_model_forward.3} parent=0 // pred_check_branch
    %13 = sbr.rel (0) target = $region9
  $region8: #{document_model_forward.3} parent=0 // pred_region
    _
  $region9: #{document_model_forward.3} parent=0 // pred_fallthru
    _
  // Predicated region
  $region10: #{document_model_forward.3} parent=0 // pred_check
    _
  $region11: #{document_model_forward.3} parent=0 // pred_check_branch
    %15 = sbr.rel (0) target = $region13
  $region12: #{document_model_forward.3} parent=0 // pred_region
    _
  $region13: #{document_model_forward.3} parent=0 // pred_fallthru
    _
  // Predicated region
  $region14: #{document_model_forward.3} parent=0 // pred_check
    _
  $region15: #{document_model_forward.3} parent=0 // pred_check_branch
    %17 = sbr.rel (0) target = $region17
  $region16: #{document_model_forward.3} parent=0 // pred_region
    _
  $region17: #{document_model_forward.3} parent=0 // pred_fallthru
    _
  // Predicated region
  $region18: #{document_model_forward.3} parent=0 // pred_check
    _
  $region19: #{document_model_forward.3} parent=0 // pred_check_branch
    %19 = sbr.rel (0) target = $region21
  $region20: #{document_model_forward.3} parent=0 // pred_region
    _
  $region21: #{document_model_forward.3} parent=0 // pred_fallthru
    _
  %v20 = vld [vmem:[%s3] sm:$0xff]
  %v21 = vld [vmem:[%s3 + $0x8] sm:$0xff]
  %v22 = vld [vmem:[%s3 + $0x10] sm:$0xff]
  %v23 = vld [vmem:[%s3 + $0x18] sm:$0xff]
  %v24 = vld [vmem:[%s3 + $0x20] sm:$0xff]
  %v25 = vld [vmem:[%s3 + $0x28] sm:$0xff]
  %v26 = vld [vmem:[%s3 + $0x30] sm:$0xff]
  %v27 = vld [vmem:[%s3 + $0x38] sm:$0xff]
  %v28 = vld [vmem:[%s3 + $0x40] sm:$0xff]
  %v29 = vld [vmem:[%s3 + $0x48] sm:$0xff]
  %v30 = vld [vmem:[%s3 + $0x50] sm:$0xff]
  %v31 = vld [vmem:[%s3 + $0x58] sm:$0xff]
  %v32 = vld [vmem:[%s3 + $0x60] sm:$0xff]
  %v33 = vld [vmem:[%s3 + $0x68] sm:$0xff]
  %v34 = vld [vmem:[%s3 + $0x70] sm:$0xff]
  %v35 = vld [vmem:[%s3 + $0x78] sm:$0xff]
  %v36 = vld [vmem:[%s3 + $0x80] sm:$0xff]
  %v37 = vld [vmem:[%s3 + $0x88] sm:$0xff]
  %v38 = vld [vmem:[%s3 + $0x90] sm:$0xff]
  %v39 = vld [vmem:[%s3 + $0x98] sm:$0xff]
  %v40 = vld [vmem:[%s3 + $0xa0] sm:$0xff]
  %v41 = vld [vmem:[%s3 + $0xa8] sm:$0xff]
  %v42 = vld [vmem:[%s3 + $0xb0] sm:$0xff]
  %v43 = vld [vmem:[%s3 + $0xb8] sm:$0xff]
  %v44 = vld [vmem:[%s3 + $0xc0] sm:$0xff]
  %v45 = vld [vmem:[%s3 + $0xc8] sm:$0xff]
  %v46 = vld [vmem:[%s3 + $0xd0] sm:$0xff]
  %v47 = vld [vmem:[%s3 + $0xd8] sm:$0xff]
  %v48 = vld [vmem:[%s3 + $0xe0] sm:$0xff]
  %v49 = vld [vmem:[%s3 + $0xe8] sm:$0xff]
  %v50 = vld [vmem:[%s3 + $0xf0] sm:$0xff]
  %v51 = vld [vmem:[%s3 + $0xf8] sm:$0xff]
  %v52 = vld [vmem:[%s4] sm:$0x1]
  %v53 = vld [vmem:[%s2] sm:$0x3f]
  %v54 = vld [vmem:[%s2 + $0x8] sm:$0x3f]
  %v55 = vld [vmem:[%s0] sm:$0x1]
  %v56 = vld [vmem:[%s0 + $0x2] sm:$0x1]
  %v57 = vld [vmem:[%s0 + $0x4] sm:$0x1]
  %v58 = vld [vmem:[%s0 + $0x6] sm:$0x1]
  %v59 = vld [vmem:[%s0 + $0x8] sm:$0x1]
  %v60 = vld [vmem:[%s0 + $0xa] sm:$0x1]
  %v61 = vld [vmem:[%s0 + $0xc] sm:$0x1]
  %v62 = vld [vmem:[%s0 + $0xe] sm:$0x1]
  %v63 = vld [vmem:[%s1] sm:$0x1]
  %v64 = vld [vmem:[%s1 + $0x2] sm:$0x1]
  %v65 = vld [vmem:[%s1 + $0x4] sm:$0x1]
  %v66 = vld [vmem:[%s1 + $0x6] sm:$0x1]
  %v67 = vld [vmem:[%s1 + $0x8] sm:$0x1]
  %v68 = vld [vmem:[%s1 + $0xa] sm:$0x1]
  %v69 = vld [vmem:[%s1 + $0xc] sm:$0x1]
  %v70 = vld [vmem:[%s1 + $0xe] sm:$0x1]
  %v79 = vrot.slane %v64, 7
  %vm80 = vcmask 1041409
  %v81 = vsel %vm80, %v79, %v63
  %v82 = vrot.slane %v65, 6
  %vm83 = vcmask 1042434
  %v84 = vsel %vm83, %v82, %v81
  %v85 = vrot.slane %v66, 5
  %vm86 = vcmask 1043459
  %v87 = vsel %vm86, %v85, %v84
  %v88 = vrot.slane %v67, 4
  %vm89 = vcmask 1044484
  %v90 = vsel %vm89, %v88, %v87
  %v91 = vrot.slane %v68, 3
  %vm92 = vcmask 1045509
  %v93 = vsel %vm92, %v91, %v90
  %v94 = vrot.slane %v69, 2
  %vm95 = vcmask 1046534
  %v96 = vsel %vm95, %v94, %v93
  %v97 = vrot.slane %v70, 1
  %vm98 = vcmask 1047559
  %v99 = vsel %vm98, %v97, %v96
  %101 = vmatprep.subr.mxu0 0.0
  %102 = vmatpush1.xpose.msra.mxu0 0.0
  %103 = vmatprep.subr.mxu0 0.0
  %104 = vmatpush1.xpose.msra.mxu0 0.0
  %105 = vmatprep.subr.mxu0 0.0
  %106 = vmatpush1.xpose.msra.mxu0 0.0
  %107 = vmatprep.subr.mxu0 0.0
  %108 = vmatpush1.xpose.msra.mxu0 0.0
  %109 = vmatprep.subr.mxu0 0.0
  %110 = vmatpush1.xpose.msra.mxu0 0.0
  %111 = vmatprep.subr.mxu0 0.0
  %112 = vmatpush1.xpose.msra.mxu0 0.0
  %113 = vmatprep.subr.mxu0 0.0
  %114 = vmatpush1.xpose.msra.mxu0 0.0
  %115 = vmatprep.subr.mxu0 0.0
  %116 = vmatpush1.xpose.msra.mxu0 0.0
  %117 = vmatprep.subr.mxu0 0.0
  %118 = vmatpush1.xpose.msra.mxu0 0.0
  %119 = vmatprep.subr.mxu0 0.0
  %120 = vmatpush1.xpose.msra.mxu0 0.0
  %121 = vmatprep.subr.mxu0 0.0
  %122 = vmatpush1.xpose.msra.mxu0 0.0
  %123 = vmatprep.subr.mxu0 0.0
  %124 = vmatpush1.xpose.msra.mxu0 0.0
  %125 = vmatprep.subr.mxu0 0.0
  %126 = vmatpush1.xpose.msra.mxu0 0.0
  %127 = vmatprep.subr.mxu0 0.0
  %128 = vmatpush1.xpose.msra.mxu0 0.0
  %129 = vmatprep.subr.mxu0 0.0
  %130 = vmatpush1.xpose.msra.mxu0 0.0
  %131 = vmatprep.subr.mxu0 0.0
  %132 = vmatpush1.xpose.msra.mxu0 %v54
  %133 = vmatprep.subr.mxu0 0.0
  %134 = vmatpush2.xpose.msra.mxu0 0.0
  %135 = vmatprep.subr.mxu0 0.0
  %136 = vmatpush2.xpose.msra.mxu0 0.0
  %137 = vmatprep.subr.mxu0 0.0
  %138 = vmatpush2.xpose.msra.mxu0 0.0
  %139 = vmatprep.subr.mxu0 0.0
  %140 = vmatpush2.xpose.msra.mxu0 0.0
  %141 = vmatprep.subr.mxu0 0.0
  %142 = vmatpush2.xpose.msra.mxu0 0.0
  %143 = vmatprep.subr.mxu0 0.0
  %144 = vmatpush2.xpose.msra.mxu0 0.0
  %145 = vmatprep.subr.mxu0 0.0
  %146 = vmatpush2.xpose.msra.mxu0 0.0
  %147 = vmatprep.subr.mxu0 0.0
  %148 = vmatpush2.xpose.msra.mxu0 0.0
  %149 = vmatprep.subr.mxu0 0.0
  %150 = vmatpush2.xpose.msra.mxu0 0.0
  %151 = vmatprep.subr.mxu0 0.0
  %152 = vmatpush2.xpose.msra.mxu0 0.0
  %153 = vmatprep.subr.mxu0 0.0
  %154 = vmatpush2.xpose.msra.mxu0 0.0
  %155 = vmatprep.subr.mxu0 0.0
  %156 = vmatpush2.xpose.msra.mxu0 0.0
  %157 = vmatprep.subr.mxu0 0.0
  %158 = vmatpush2.xpose.msra.mxu0 0.0
  %159 = vmatprep.subr.mxu0 0.0
  %160 = vmatpush2.xpose.msra.mxu0 0.0
  %161 = vmatprep.subr.mxu0 0.0
  %162 = vmatpush2.xpose.msra.mxu0 0.0
  %163 = vmatprep.subr.mxu0 0.0
  %164 = vmatpush2.xpose.msra.mxu0 0.0
  %165 = vmatprep.mubr.f32.mxu0 0.0
  %166 = vmatmul.mubr.f32.gmra.mxu0 %v99
  %v167 = vpop.f32.mrf.mxu0
  %v168 = vadd.f32 0.0, %v167
  %v169 = vpop.f32.mrf.mxu0
  %170 = vdwg.mxu0
  %v179 = vrot.slane %v56, 7
  %v180 = vsel %vm80, %v179, %v55
  %v181 = vrot.slane %v57, 6
  %v182 = vsel %vm83, %v181, %v180
  %v183 = vrot.slane %v58, 5
  %v184 = vsel %vm86, %v183, %v182
  %v185 = vrot.slane %v59, 4
  %v186 = vsel %vm89, %v185, %v184
  %v187 = vrot.slane %v60, 3
  %v188 = vsel %vm92, %v187, %v186
  %v189 = vrot.slane %v61, 2
  %v190 = vsel %vm95, %v189, %v188
  %v191 = vrot.slane %v62, 1
  %v192 = vsel %vm98, %v191, %v190
  %194 = vmatprep.subr.mxu0 0.0
  %195 = vmatpush1.xpose.msra.mxu0 0.0
  %196 = vmatprep.subr.mxu0 0.0
  %197 = vmatpush1.xpose.msra.mxu0 0.0
  %198 = vmatprep.subr.mxu0 0.0
  %199 = vmatpush1.xpose.msra.mxu0 0.0
  %200 = vmatprep.subr.mxu0 0.0
  %201 = vmatpush1.xpose.msra.mxu0 0.0
  %202 = vmatprep.subr.mxu0 0.0
  %203 = vmatpush1.xpose.msra.mxu0 0.0
  %204 = vmatprep.subr.mxu0 0.0
  %205 = vmatpush1.xpose.msra.mxu0 0.0
  %206 = vmatprep.subr.mxu0 0.0
  %207 = vmatpush1.xpose.msra.mxu0 0.0
  %208 = vmatprep.subr.mxu0 0.0
  %209 = vmatpush1.xpose.msra.mxu0 0.0
  %210 = vmatprep.subr.mxu0 0.0
  %211 = vmatpush1.xpose.msra.mxu0 0.0
  %212 = vmatprep.subr.mxu0 0.0
  %213 = vmatpush1.xpose.msra.mxu0 0.0
  %214 = vmatprep.subr.mxu0 0.0
  %215 = vmatpush1.xpose.msra.mxu0 0.0
  %216 = vmatprep.subr.mxu0 0.0
  %217 = vmatpush1.xpose.msra.mxu0 0.0
  %218 = vmatprep.subr.mxu0 0.0
  %219 = vmatpush1.xpose.msra.mxu0 0.0
  %220 = vmatprep.subr.mxu0 0.0
  %221 = vmatpush1.xpose.msra.mxu0 0.0
  %222 = vmatprep.subr.mxu0 0.0
  %223 = vmatpush1.xpose.msra.mxu0 0.0
  %224 = vmatprep.subr.mxu0 0.0
  %225 = vmatpush1.xpose.msra.mxu0 %v53
  %226 = vmatprep.subr.mxu0 0.0
  %227 = vmatpush2.xpose.msra.mxu0 0.0
  %228 = vmatprep.subr.mxu0 0.0
  %229 = vmatpush2.xpose.msra.mxu0 0.0
  %230 = vmatprep.subr.mxu0 0.0
  %231 = vmatpush2.xpose.msra.mxu0 0.0
  %232 = vmatprep.subr.mxu0 0.0
  %233 = vmatpush2.xpose.msra.mxu0 0.0
  %234 = vmatprep.subr.mxu0 0.0
  %235 = vmatpush2.xpose.msra.mxu0 0.0
  %236 = vmatprep.subr.mxu0 0.0
  %237 = vmatpush2.xpose.msra.mxu0 0.0
  %238 = vmatprep.subr.mxu0 0.0
  %239 = vmatpush2.xpose.msra.mxu0 0.0
  %240 = vmatprep.subr.mxu0 0.0
  %241 = vmatpush2.xpose.msra.mxu0 0.0
  %242 = vmatprep.subr.mxu0 0.0
  %243 = vmatpush2.xpose.msra.mxu0 0.0
  %244 = vmatprep.subr.mxu0 0.0
  %245 = vmatpush2.xpose.msra.mxu0 0.0
  %246 = vmatprep.subr.mxu0 0.0
  %247 = vmatpush2.xpose.msra.mxu0 0.0
  %248 = vmatprep.subr.mxu0 0.0
  %249 = vmatpush2.xpose.msra.mxu0 0.0
  %250 = vmatprep.subr.mxu0 0.0
  %251 = vmatpush2.xpose.msra.mxu0 0.0
  %252 = vmatprep.subr.mxu0 0.0
  %253 = vmatpush2.xpose.msra.mxu0 0.0
  %254 = vmatprep.subr.mxu0 0.0
  %255 = vmatpush2.xpose.msra.mxu0 0.0
  %256 = vmatprep.subr.mxu0 0.0
  %257 = vmatpush2.xpose.msra.mxu0 0.0
  %258 = vmatprep.mubr.f32.mxu0 0.0
  %259 = vmatmul.mubr.f32.gmra.mxu0 %v192
  %v260 = vpop.f32.mrf.mxu0
  %v261 = vadd.f32 %v168, %v260
  %v262 = vpop.f32.mrf.mxu0
  %263 = vdwg.mxu0
  %vm264 = vcmask 48128
  %v265 = vsel %vm264, %v261, -inf
  %266 = vmax.xlane.f32.xlu0 %v265
  %v267 = vpop.xlane.xlu0 %266
  %v268 = vsub.f32 %v261, %v267
  %v269 = vmul.f32 %v268, 1.442695
  %v270 = vpow.pop %v269
  %v271 = vsel %vm264, %v270, 0.0
  %272 = vadd.xlane.f32.xlu0 %v271
  %v273 = vpop.xlane.xlu0 %272
  %v274 = vrcp.pop %v273
  %v275 = vmul.f32 %v273, %v274
  %v276 = vsub.f32 2.0, %v275
  %v277 = vmul.f32 %v274, %v276
  %v278 = vmul.f32 %v270, %v277
  %v280 = vsel %vm264, %v278, 0
  %vm282 = vcmask 1045504
  %v284 = vsel %vm282, %v53, 0
  %v287 = vsel %vm282, %v54, 0
  %289 = vmatprep.subr.mxu0 0.0
  %290 = vmatpush1.msra.mxu0 0.0
  %291 = vmatprep.subr.mxu0 0.0
  %292 = vmatpush1.msra.mxu0 0.0
  %293 = vmatprep.subr.mxu0 0.0
  %294 = vmatpush1.msra.mxu0 0.0
  %295 = vmatprep.subr.mxu0 0.0
  %296 = vmatpush1.msra.mxu0 0.0
  %297 = vmatprep.subr.mxu0 0.0
  %298 = vmatpush1.msra.mxu0 0.0
  %299 = vmatprep.subr.mxu0 0.0
  %300 = vmatpush1.msra.mxu0 0.0
  %301 = vmatprep.subr.mxu0 0.0
  %302 = vmatpush1.msra.mxu0 0.0
  %303 = vmatprep.subr.mxu0 0.0
  %304 = vmatpush1.msra.mxu0 0.0
  %305 = vmatprep.subr.mxu0 0.0
  %306 = vmatpush1.msra.mxu0 0.0
  %307 = vmatprep.subr.mxu0 0.0
  %308 = vmatpush1.msra.mxu0 0.0
  %309 = vmatprep.subr.mxu0 0.0
  %310 = vmatpush1.msra.mxu0 0.0
  %311 = vmatprep.subr.mxu0 0.0
  %312 = vmatpush1.msra.mxu0 0.0
  %313 = vmatprep.subr.mxu0 0.0
  %314 = vmatpush1.msra.mxu0 0.0
  %315 = vmatprep.subr.mxu0 0.0
  %316 = vmatpush1.msra.mxu0 0.0
  %317 = vmatprep.subr.mxu0 0.0
  %318 = vmatpush1.msra.mxu0 0.0
  %319 = vmatprep.subr.mxu0 %v287
  %320 = vmatpush1.msra.mxu0 %v284
  %321 = vmatprep.subr.mxu0 0.0
  %322 = vmatpush2.msra.mxu0 0.0
  %323 = vmatprep.subr.mxu0 0.0
  %324 = vmatpush2.msra.mxu0 0.0
  %325 = vmatprep.subr.mxu0 0.0
  %326 = vmatpush2.msra.mxu0 0.0
  %327 = vmatprep.subr.mxu0 0.0
  %328 = vmatpush2.msra.mxu0 0.0
  %329 = vmatprep.subr.mxu0 0.0
  %330 = vmatpush2.msra.mxu0 0.0
  %331 = vmatprep.subr.mxu0 0.0
  %332 = vmatpush2.msra.mxu0 0.0
  %333 = vmatprep.subr.mxu0 0.0
  %334 = vmatpush2.msra.mxu0 0.0
  %335 = vmatprep.subr.mxu0 0.0
  %336 = vmatpush2.msra.mxu0 0.0
  %337 = vmatprep.subr.mxu0 0.0
  %338 = vmatpush2.msra.mxu0 0.0
  %339 = vmatprep.subr.mxu0 0.0
  %340 = vmatpush2.msra.mxu0 0.0
  %341 = vmatprep.subr.mxu0 0.0
  %342 = vmatpush2.msra.mxu0 0.0
  %343 = vmatprep.subr.mxu0 0.0
  %344 = vmatpush2.msra.mxu0 0.0
  %345 = vmatprep.subr.mxu0 0.0
  %346 = vmatpush2.msra.mxu0 0.0
  %347 = vmatprep.subr.mxu0 0.0
  %348 = vmatpush2.msra.mxu0 0.0
  %349 = vmatprep.subr.mxu0 0.0
  %350 = vmatpush2.msra.mxu0 0.0
  %351 = vmatprep.subr.mxu0 0.0
  %352 = vmatpush2.msra.mxu0 0.0
  %353 = vmatprep.mubr.f32.mxu0 0.0
  %354 = vmatmul.mubr.f32.gmra.mxu0 %v280
  %v355 = vpop.f32.mrf.mxu0
  %v356 = vadd.f32 0.0, %v355
  %v357 = vpop.f32.mrf.mxu0
  %v358 = vadd.f32 0.0, %v357
  %359 = vdwg.mxu0
  %v361 = vlaneseq
  %v362 = vshrl.u32 %v361, 7
  %v363 = vsub.s32 0, %v362
  %v364 = vrot.slane %v52, %v363
  %366 = vmatprep.subr.mxu0 0.0
  %367 = vmatpush1.msra.mxu0 %v35
  %368 = vmatprep.subr.mxu0 0.0
  %369 = vmatpush1.msra.mxu0 %v34
  %370 = vmatprep.subr.mxu0 0.0
  %371 = vmatpush1.msra.mxu0 %v33
  %372 = vmatprep.subr.mxu0 0.0
  %373 = vmatpush1.msra.mxu0 %v32
  %374 = vmatprep.subr.mxu0 0.0
  %375 = vmatpush1.msra.mxu0 %v31
  %376 = vmatprep.subr.mxu0 0.0
  %377 = vmatpush1.msra.mxu0 %v30
  %378 = vmatprep.subr.mxu0 0.0
  %379 = vmatpush1.msra.mxu0 %v29
  %380 = vmatprep.subr.mxu0 0.0
  %381 = vmatpush1.msra.mxu0 %v28
  %382 = vmatprep.subr.mxu0 0.0
  %383 = vmatpush1.msra.mxu0 %v27
  %384 = vmatprep.subr.mxu0 0.0
  %385 = vmatpush1.msra.mxu0 %v26
  %386 = vmatprep.subr.mxu0 0.0
  %387 = vmatpush1.msra.mxu0 %v25
  %388 = vmatprep.subr.mxu0 0.0
  %389 = vmatpush1.msra.mxu0 %v24
  %390 = vmatprep.subr.mxu0 0.0
  %391 = vmatpush1.msra.mxu0 %v23
  %392 = vmatprep.subr.mxu0 0.0
  %393 = vmatpush1.msra.mxu0 %v22
  %394 = vmatprep.subr.mxu0 0.0
  %395 = vmatpush1.msra.mxu0 %v21
  %396 = vmatprep.subr.mxu0 0.0
  %397 = vmatpush1.msra.mxu0 %v20
  %398 = vmatprep.subr.mxu0 0.0
  %399 = vmatpush2.msra.mxu0 %v51
  %400 = vmatprep.subr.mxu0 0.0
  %401 = vmatpush2.msra.mxu0 %v50
  %402 = vmatprep.subr.mxu0 0.0
  %403 = vmatpush2.msra.mxu0 %v49
  %404 = vmatprep.subr.mxu0 0.0
  %405 = vmatpush2.msra.mxu0 %v48
  %406 = vmatprep.subr.mxu0 0.0
  %407 = vmatpush2.msra.mxu0 %v47
  %408 = vmatprep.subr.mxu0 0.0
  %409 = vmatpush2.msra.mxu0 %v46
  %410 = vmatprep.subr.mxu0 0.0
  %411 = vmatpush2.msra.mxu0 %v45
  %412 = vmatprep.subr.mxu0 0.0
  %413 = vmatpush2.msra.mxu0 %v44
  %414 = vmatprep.subr.mxu0 0.0
  %415 = vmatpush2.msra.mxu0 %v43
  %416 = vmatprep.subr.mxu0 0.0
  %417 = vmatpush2.msra.mxu0 %v42
  %418 = vmatprep.subr.mxu0 0.0
  %419 = vmatpush2.msra.mxu0 %v41
  %420 = vmatprep.subr.mxu0 0.0
  %421 = vmatpush2.msra.mxu0 %v40
  %422 = vmatprep.subr.mxu0 0.0
  %423 = vmatpush2.msra.mxu0 %v39
  %424 = vmatprep.subr.mxu0 0.0
  %425 = vmatpush2.msra.mxu0 %v38
  %426 = vmatprep.subr.mxu0 0.0
  %427 = vmatpush2.msra.mxu0 %v37
  %428 = vmatprep.subr.mxu0 0.0
  %429 = vmatpush2.msra.mxu0 %v36
  %430 = vmatprep.mubr.f32.mxu0 %v358
  %431 = vmatmul.mubr.f32.gmra.mxu0 %v356
  %v432 = vpop.f32.mrf.mxu0
  %v433 = vadd.f32 %v364, %v432
  %v434 = vpop.f32.mrf.mxu0
  %435 = vdwg.mxu0
  %436 = vmax.xlane.f32.xlu0 %v433
  %v437 = vpop.xlane.xlu0 %436
  %v438 = vsub.f32 %v433, %v437
  %v439 = vmul.f32 %v438, 1.442695
  %v440 = vpow.pop %v439
  %441 = vadd.xlane.f32.xlu0 %v440
  %v442 = vpop.xlane.xlu0 %441
  %v443 = vlog2.pop %v442
  %v444 = vmul.f32 %v443, 0.6931472
  %v445 = vsub.f32 %v438, %v444
  %446 = vst [vmem:[%s5] sm:$0xff] %v445
  %s447 = scalar_lea.vmem %s2, 16
  %v448 = vld [vmem:[%s447] sm:$0x3f]
  %v449 = vld [vmem:[%s447 + $0x8] sm:$0x3f]
  %v450 = vld [vmem:[%s0 + $0x1] sm:$0x1]
  %v451 = vld [vmem:[%s0 + $0x3] sm:$0x1]
  %v452 = vld [vmem:[%s0 + $0x5] sm:$0x1]
  %v453 = vld [vmem:[%s0 + $0x7] sm:$0x1]
  %v454 = vld [vmem:[%s0 + $0x9] sm:$0x1]
  %v455 = vld [vmem:[%s0 + $0xb] sm:$0x1]
  %v456 = vld [vmem:[%s0 + $0xd] sm:$0x1]
  %v457 = vld [vmem:[%s0 + $0xf] sm:$0x1]
  %v458 = vld [vmem:[%s1 + $0x1] sm:$0x1]
  %v459 = vld [vmem:[%s1 + $0x3] sm:$0x1]
  %v460 = vld [vmem:[%s1 + $0x5] sm:$0x1]
  %v461 = vld [vmem:[%s1 + $0x7] sm:$0x1]
  %v462 = vld [vmem:[%s1 + $0x9] sm:$0x1]
  %v463 = vld [vmem:[%s1 + $0xb] sm:$0x1]
  %v464 = vld [vmem:[%s1 + $0xd] sm:$0x1]
  %v465 = vld [vmem:[%s1 + $0xf] sm:$0x1]
  %v474 = vrot.slane %v459, 7
  %v475 = vsel %vm80, %v474, %v458
  %v476 = vrot.slane %v460, 6
  %v477 = vsel %vm83, %v476, %v475
  %v478 = vrot.slane %v461, 5
  %v479 = vsel %vm86, %v478, %v477
  %v480 = vrot.slane %v462, 4
  %v481 = vsel %vm89, %v480, %v479
  %v482 = vrot.slane %v463, 3
  %v483 = vsel %vm92, %v482, %v481
  %v484 = vrot.slane %v464, 2
  %v485 = vsel %vm95, %v484, %v483
  %v486 = vrot.slane %v465, 1
  %v487 = vsel %vm98, %v486, %v485
  %489 = vmatprep.subr.mxu0 0.0
  %490 = vmatpush1.xpose.msra.mxu0 0.0
  %491 = vmatprep.subr.mxu0 0.0
  %492 = vmatpush1.xpose.msra.mxu0 0.0
  %493 = vmatprep.subr.mxu0 0.0
  %494 = vmatpush1.xpose.msra.mxu0 0.0
  %495 = vmatprep.subr.mxu0 0.0
  %496 = vmatpush1.xpose.msra.mxu0 0.0
  %497 = vmatprep.subr.mxu0 0.0
  %498 = vmatpush1.xpose.msra.mxu0 0.0
  %499 = vmatprep.subr.mxu0 0.0
  %500 = vmatpush1.xpose.msra.mxu0 0.0
  %501 = vmatprep.subr.mxu0 0.0
  %502 = vmatpush1.xpose.msra.mxu0 0.0
  %503 = vmatprep.subr.mxu0 0.0
  %504 = vmatpush1.xpose.msra.mxu0 0.0
  %505 = vmatprep.subr.mxu0 0.0
  %506 = vmatpush1.xpose.msra.mxu0 0.0
  %507 = vmatprep.subr.mxu0 0.0
  %508 = vmatpush1.xpose.msra.mxu0 0.0
  %509 = vmatprep.subr.mxu0 0.0
  %510 = vmatpush1.xpose.msra.mxu0 0.0
  %511 = vmatprep.subr.mxu0 0.0
  %512 = vmatpush1.xpose.msra.mxu0 0.0
  %513 = vmatprep.subr.mxu0 0.0
  %514 = vmatpush1.xpose.msra.mxu0 0.0
  %515 = vmatprep.subr.mxu0 0.0
  %516 = vmatpush1.xpose.msra.mxu0 0.0
  %517 = vmatprep.subr.mxu0 0.0
  %518 = vmatpush1.xpose.msra.mxu0 0.0
  %519 = vmatprep.subr.mxu0 0.0
  %520 = vmatpush1.xpose.msra.mxu0 %v449
  %521 = vmatprep.subr.mxu0 0.0
  %522 = vmatpush2.xpose.msra.mxu0 0.0
  %523 = vmatprep.subr.mxu0 0.0
  %524 = vmatpush2.xpose.msra.mxu0 0.0
  %525 = vmatprep.subr.mxu0 0.0
  %526 = vmatpush2.xpose.msra.mxu0 0.0
  %527 = vmatprep.subr.mxu0 0.0
  %528 = vmatpush2.xpose.msra.mxu0 0.0
  %529 = vmatprep.subr.mxu0 0.0
  %530 = vmatpush2.xpose.msra.mxu0 0.0
  %531 = vmatprep.subr.mxu0 0.0
  %532 = vmatpush2.xpose.msra.mxu0 0.0
  %533 = vmatprep.subr.mxu0 0.0
  %534 = vmatpush2.xpose.msra.mxu0 0.0
  %535 = vmatprep.subr.mxu0 0.0
  %536 = vmatpush2.xpose.msra.mxu0 0.0
  %537 = vmatprep.subr.mxu0 0.0
  %538 = vmatpush2.xpose.msra.mxu0 0.0
  %539 = vmatprep.subr.mxu0 0.0
  %540 = vmatpush2.xpose.msra.mxu0 0.0
  %541 = vmatprep.subr.mxu0 0.0
  %542 = vmatpush2.xpose.msra.mxu0 0.0
  %543 = vmatprep.subr.mxu0 0.0
  %544 = vmatpush2.xpose.msra.mxu0 0.0
  %545 = vmatprep.subr.mxu0 0.0
  %546 = vmatpush2.xpose.msra.mxu0 0.0
  %547 = vmatprep.subr.mxu0 0.0
  %548 = vmatpush2.xpose.msra.mxu0 0.0
  %549 = vmatprep.subr.mxu0 0.0
  %550 = vmatpush2.xpose.msra.mxu0 0.0
  %551 = vmatprep.subr.mxu0 0.0
  %552 = vmatpush2.xpose.msra.mxu0 0.0
  %553 = vmatprep.mubr.f32.mxu0 0.0
  %554 = vmatmul.mubr.f32.gmra.mxu0 %v487
  %v555 = vpop.f32.mrf.mxu0
  %v556 = vadd.f32 0.0, %v555
  %v557 = vpop.f32.mrf.mxu0
  %558 = vdwg.mxu0
  %v567 = vrot.slane %v451, 7
  %v568 = vsel %vm80, %v567, %v450
  %v569 = vrot.slane %v452, 6
  %v570 = vsel %vm83, %v569, %v568
  %v571 = vrot.slane %v453, 5
  %v572 = vsel %vm86, %v571, %v570
  %v573 = vrot.slane %v454, 4
  %v574 = vsel %vm89, %v573, %v572
  %v575 = vrot.slane %v455, 3
  %v576 = vsel %vm92, %v575, %v574
  %v577 = vrot.slane %v456, 2
  %v578 = vsel %vm95, %v577, %v576
  %v579 = vrot.slane %v457, 1
  %v580 = vsel %vm98, %v579, %v578
  %582 = vmatprep.subr.mxu0 0.0
  %583 = vmatpush1.xpose.msra.mxu0 0.0
  %584 = vmatprep.subr.mxu0 0.0
  %585 = vmatpush1.xpose.msra.mxu0 0.0
  %586 = vmatprep.subr.mxu0 0.0
  %587 = vmatpush1.xpose.msra.mxu0 0.0
  %588 = vmatprep.subr.mxu0 0.0
  %589 = vmatpush1.xpose.msra.mxu0 0.0
  %590 = vmatprep.subr.mxu0 0.0
  %591 = vmatpush1.xpose.msra.mxu0 0.0
  %592 = vmatprep.subr.mxu0 0.0
  %593 = vmatpush1.xpose.msra.mxu0 0.0
  %594 = vmatprep.subr.mxu0 0.0
  %595 = vmatpush1.xpose.msra.mxu0 0.0
  %596 = vmatprep.subr.mxu0 0.0
  %597 = vmatpush1.xpose.msra.mxu0 0.0
  %598 = vmatprep.subr.mxu0 0.0
  %599 = vmatpush1.xpose.msra.mxu0 0.0
  %600 = vmatprep.subr.mxu0 0.0
  %601 = vmatpush1.xpose.msra.mxu0 0.0
  %602 = vmatprep.subr.mxu0 0.0
  %603 = vmatpush1.xpose.msra.mxu0 0.0
  %604 = vmatprep.subr.mxu0 0.0
  %605 = vmatpush1.xpose.msra.mxu0 0.0
  %606 = vmatprep.subr.mxu0 0.0
  %607 = vmatpush1.xpose.msra.mxu0 0.0
  %608 = vmatprep.subr.mxu0 0.0
  %609 = vmatpush1.xpose.msra.mxu0 0.0
  %610 = vmatprep.subr.mxu0 0.0
  %611 = vmatpush1.xpose.msra.mxu0 0.0
  %612 = vmatprep.subr.mxu0 0.0
  %613 = vmatpush1.xpose.msra.mxu0 %v448
  %614 = vmatprep.subr.mxu0 0.0
  %615 = vmatpush2.xpose.msra.mxu0 0.0
  %616 = vmatprep.subr.mxu0 0.0
  %617 = vmatpush2.xpose.msra.mxu0 0.0
  %618 = vmatprep.subr.mxu0 0.0
  %619 = vmatpush2.xpose.msra.mxu0 0.0
  %620 = vmatprep.subr.mxu0 0.0
  %621 = vmatpush2.xpose.msra.mxu0 0.0
  %622 = vmatprep.subr.mxu0 0.0
  %623 = vmatpush2.xpose.msra.mxu0 0.0
  %624 = vmatprep.subr.mxu0 0.0
  %625 = vmatpush2.xpose.msra.mxu0 0.0
  %626 = vmatprep.subr.mxu0 0.0
  %627 = vmatpush2.xpose.msra.mxu0 0.0
  %628 = vmatprep.subr.mxu0 0.0
  %629 = vmatpush2.xpose.msra.mxu0 0.0
  %630 = vmatprep.subr.mxu0 0.0
  %631 = vmatpush2.xpose.msra.mxu0 0.0
  %632 = vmatprep.subr.mxu0 0.0
  %633 = vmatpush2.xpose.msra.mxu0 0.0
  %634 = vmatprep.subr.mxu0 0.0
  %635 = vmatpush2.xpose.msra.mxu0 0.0
  %636 = vmatprep.subr.mxu0 0.0
  %637 = vmatpush2.xpose.msra.mxu0 0.0
  %638 = vmatprep.subr.mxu0 0.0
  %639 = vmatpush2.xpose.msra.mxu0 0.0
  %640 = vmatprep.subr.mxu0 0.0
  %641 = vmatpush2.xpose.msra.mxu0 0.0
  %642 = vmatprep.subr.mxu0 0.0
  %643 = vmatpush2.xpose.msra.mxu0 0.0
  %644 = vmatprep.subr.mxu0 0.0
  %645 = vmatpush2.xpose.msra.mxu0 0.0
  %646 = vmatprep.mubr.f32.mxu0 0.0
  %647 = vmatmul.mubr.f32.gmra.mxu0 %v580
  %v648 = vpop.f32.mrf.mxu0
  %v649 = vadd.f32 %v556, %v648
  %v650 = vpop.f32.mrf.mxu0
  %651 = vdwg.mxu0
  %v652 = vsel %vm264, %v649, -inf
  %653 = vmax.xlane.f32.xlu0 %v652
  %v654 = vpop.xlane.xlu0 %653
  %v655 = vsub.f32 %v649, %v654
  %v656 = vmul.f32 %v655, 1.442695
  %v657 = vpow.pop %v656
  %v658 = vsel %vm264, %v657, 0.0
  %659 = vadd.xlane.f32.xlu0 %v658
  %v660 = vpop.xlane.xlu0 %659
  %v661 = vrcp.pop %v660
  %v662 = vmul.f32 %v660, %v661
  %v663 = vsub.f32 2.0, %v662
  %v664 = vmul.f32 %v661, %v663
  %v665 = vmul.f32 %v657, %v664
  %v667 = vsel %vm264, %v665, 0
  %v670 = vsel %vm282, %v448, 0
  %v673 = vsel %vm282, %v449, 0
  %675 = vmatprep.subr.mxu0 0.0
  %676 = vmatpush1.msra.mxu0 0.0
  %677 = vmatprep.subr.mxu0 0.0
  %678 = vmatpush1.msra.mxu0 0.0
  %679 = vmatprep.subr.mxu0 0.0
  %680 = vmatpush1.msra.mxu0 0.0
  %681 = vmatprep.subr.mxu0 0.0
  %682 = vmatpush1.msra.mxu0 0.0
  %683 = vmatprep.subr.mxu0 0.0
  %684 = vmatpush1.msra.mxu0 0.0
  %685 = vmatprep.subr.mxu0 0.0
  %686 = vmatpush1.msra.mxu0 0.0
  %687 = vmatprep.subr.mxu0 0.0
  %688 = vmatpush1.msra.mxu0 0.0
  %689 = vmatprep.subr.mxu0 0.0
  %690 = vmatpush1.msra.mxu0 0.0
  %691 = vmatprep.subr.mxu0 0.0
  %692 = vmatpush1.msra.mxu0 0.0
  %693 = vmatprep.subr.mxu0 0.0
  %694 = vmatpush1.msra.mxu0 0.0
  %695 = vmatprep.subr.mxu0 0.0
  %696 = vmatpush1.msra.mxu0 0.0
  %697 = vmatprep.subr.mxu0 0.0
  %698 = vmatpush1.msra.mxu0 0.0
  %699 = vmatprep.subr.mxu0 0.0
  %700 = vmatpush1.msra.mxu0 0.0
  %701 = vmatprep.subr.mxu0 0.0
  %702 = vmatpush1.msra.mxu0 0.0
  %703 = vmatprep.subr.mxu0 0.0
  %704 = vmatpush1.msra.mxu0 0.0
  %705 = vmatprep.subr.mxu0 %v673
  %706 = vmatpush1.msra.mxu0 %v670
  %707 = vmatprep.subr.mxu0 0.0
  %708 = vmatpush2.msra.mxu0 0.0
  %709 = vmatprep.subr.mxu0 0.0
  %710 = vmatpush2.msra.mxu0 0.0
  %711 = vmatprep.subr.mxu0 0.0
  %712 = vmatpush2.msra.mxu0 0.0
  %713 = vmatprep.subr.mxu0 0.0
  %714 = vmatpush2.msra.mxu0 0.0
  %715 = vmatprep.subr.mxu0 0.0
  %716 = vmatpush2.msra.mxu0 0.0
  %717 = vmatprep.subr.mxu0 0.0
  %718 = vmatpush2.msra.mxu0 0.0
  %719 = vmatprep.subr.mxu0 0.0
  %720 = vmatpush2.msra.mxu0 0.0
  %721 = vmatprep.subr.mxu0 0.0
  %722 = vmatpush2.msra.mxu0 0.0
  %723 = vmatprep.subr.mxu0 0.0
  %724 = vmatpush2.msra.mxu0 0.0
  %725 = vmatprep.subr.mxu0 0.0
  %726 = vmatpush2.msra.mxu0 0.0
  %727 = vmatprep.subr.mxu0 0.0
  %728 = vmatpush2.msra.mxu0 0.0
  %729 = vmatprep.subr.mxu0 0.0
  %730 = vmatpush2.msra.mxu0 0.0
  %731 = vmatprep.subr.mxu0 0.0
  %732 = vmatpush2.msra.mxu0 0.0
  %733 = vmatprep.subr.mxu0 0.0
  %734 = vmatpush2.msra.mxu0 0.0
  %735 = vmatprep.subr.mxu0 0.0
  %736 = vmatpush2.msra.mxu0 0.0
  %737 = vmatprep.subr.mxu0 0.0
  %738 = vmatpush2.msra.mxu0 0.0
  %739 = vmatprep.mubr.f32.mxu0 0.0
  %740 = vmatmul.mubr.f32.gmra.mxu0 %v667
  %v741 = vpop.f32.mrf.mxu0
  %v742 = vadd.f32 0.0, %v741
  %v743 = vpop.f32.mrf.mxu0
  %v744 = vadd.f32 0.0, %v743
  %745 = vdwg.mxu0
  %746 = vmatprep.subr.mxu0 0.0
  %747 = vmatpush1.msra.mxu0 %v35
  %748 = vmatprep.subr.mxu0 0.0
  %749 = vmatpush1.msra.mxu0 %v34
  %750 = vmatprep.subr.mxu0 0.0
  %751 = vmatpush1.msra.mxu0 %v33
  %752 = vmatprep.subr.mxu0 0.0
  %753 = vmatpush1.msra.mxu0 %v32
  %754 = vmatprep.subr.mxu0 0.0
  %755 = vmatpush1.msra.mxu0 %v31
  %756 = vmatprep.subr.mxu0 0.0
  %757 = vmatpush1.msra.mxu0 %v30
  %758 = vmatprep.subr.mxu0 0.0
  %759 = vmatpush1.msra.mxu0 %v29
  %760 = vmatprep.subr.mxu0 0.0
  %761 = vmatpush1.msra.mxu0 %v28
  %762 = vmatprep.subr.mxu0 0.0
  %763 = vmatpush1.msra.mxu0 %v27
  %764 = vmatprep.subr.mxu0 0.0
  %765 = vmatpush1.msra.mxu0 %v26
  %766 = vmatprep.subr.mxu0 0.0
  %767 = vmatpush1.msra.mxu0 %v25
  %768 = vmatprep.subr.mxu0 0.0
  %769 = vmatpush1.msra.mxu0 %v24
  %770 = vmatprep.subr.mxu0 0.0
  %771 = vmatpush1.msra.mxu0 %v23
  %772 = vmatprep.subr.mxu0 0.0
  %773 = vmatpush1.msra.mxu0 %v22
  %774 = vmatprep.subr.mxu0 0.0
  %775 = vmatpush1.msra.mxu0 %v21
  %776 = vmatprep.subr.mxu0 0.0
  %777 = vmatpush1.msra.mxu0 %v20
  %778 = vmatprep.subr.mxu0 0.0
  %779 = vmatpush2.msra.mxu0 %v51
  %780 = vmatprep.subr.mxu0 0.0
  %781 = vmatpush2.msra.mxu0 %v50
  %782 = vmatprep.subr.mxu0 0.0
  %783 = vmatpush2.msra.mxu0 %v49
  %784 = vmatprep.subr.mxu0 0.0
  %785 = vmatpush2.msra.mxu0 %v48
  %786 = vmatprep.subr.mxu0 0.0
  %787 = vmatpush2.msra.mxu0 %v47
  %788 = vmatprep.subr.mxu0 0.0
  %789 = vmatpush2.msra.mxu0 %v46
  %790 = vmatprep.subr.mxu0 0.0
  %791 = vmatpush2.msra.mxu0 %v45
  %792 = vmatprep.subr.mxu0 0.0
  %793 = vmatpush2.msra.mxu0 %v44
  %794 = vmatprep.subr.mxu0 0.0
  %795 = vmatpush2.msra.mxu0 %v43
  %796 = vmatprep.subr.mxu0 0.0
  %797 = vmatpush2.msra.mxu0 %v42
  %798 = vmatprep.subr.mxu0 0.0
  %799 = vmatpush2.msra.mxu0 %v41
  %800 = vmatprep.subr.mxu0 0.0
  %801 = vmatpush2.msra.mxu0 %v40
  %802 = vmatprep.subr.mxu0 0.0
  %803 = vmatpush2.msra.mxu0 %v39
  %804 = vmatprep.subr.mxu0 0.0
  %805 = vmatpush2.msra.mxu0 %v38
  %806 = vmatprep.subr.mxu0 0.0
  %807 = vmatpush2.msra.mxu0 %v37
  %808 = vmatprep.subr.mxu0 0.0
  %809 = vmatpush2.msra.mxu0 %v36
  %810 = vmatprep.mubr.f32.mxu0 %v744
  %811 = vmatmul.mubr.f32.gmra.mxu0 %v742
  %v812 = vpop.f32.mrf.mxu0
  %v813 = vadd.f32 %v364, %v812
  %v814 = vpop.f32.mrf.mxu0
  %815 = vdwg.mxu0
  %816 = vmax.xlane.f32.xlu0 %v813
  %v817 = vpop.xlane.xlu0 %816
  %v818 = vsub.f32 %v813, %v817
  %v819 = vmul.f32 %v818, 1.442695
  %v820 = vpow.pop %v819
  %821 = vadd.xlane.f32.xlu0 %v820
  %v822 = vpop.xlane.xlu0 %821
  %v823 = vlog2.pop %v822
  %v824 = vmul.f32 %v823, 0.6931472
  %v825 = vsub.f32 %v818, %v824
  %s826 = scalar_lea.vmem %s5, 8
  %827 = vst [vmem:[%s826] sm:$0xff] %v825
  // Predicated region
  $region22: #{document_model_forward.3} parent=0 // pred_check
    _
  $region23: #{document_model_forward.3} parent=0 // pred_check_branch
    %829 = sbr.rel (0) target = $region25
  $region24: #{document_model_forward.3} parent=0 // pred_region
    _
  $region25: #{document_model_forward.3} parent=0 // pred_fallthru
    _
  // Predicated region
  $region26: #{document_model_forward.3} parent=0 // pred_check
    _
  $region27: #{document_model_forward.3} parent=0 // pred_check_branch
    %831 = sbr.rel (0) target = $region29
  $region28: #{document_model_forward.3} parent=0 // pred_region
    _
  $region29: #{document_model_forward.3} parent=0 // pred_fallthru
    _

</llo_original>
